<compile_context>
chip_gen: v5e
topology: v5e:2x2
jax: 0.10.0
libtpu: 0.0.40
codegen_flags: <defaults>
</compile_context>

<pallas_src>
import functools
import math

import jax
import jax.numpy as jnp
from jax import lax
from jax.experimental import pallas as pl
from jax.experimental.pallas import tpu as pltpu


# --------------------------- in-kernel helpers --------------------------------
def _shift_rows_down(x, s, fill, row_in_seq, seq_len):
    """Per-sequence shift: out[i] = x[i - s] if (i mod seq_len) >= s else fill."""
    if s >= seq_len:
        return jnp.full_like(x, fill)
    y = pltpu.roll(x, shift=s, axis=0)                 # out[i] = x[(i - s) % rows]
    return jnp.where(row_in_seq < s, fill, y)


def _shift_rows_up(x, s, fill, row_in_seq, seq_len):
    """Per-sequence shift: out[i] = x[i + s] if (i mod seq_len) < seq_len - s else fill."""
    if s >= seq_len:
        return jnp.full_like(x, fill)
    rows = x.shape[0]
    y = pltpu.roll(x, shift=rows - s, axis=0)          # out[i] = x[(i + s) % rows]
    return jnp.where(row_in_seq >= seq_len - s, fill, y)


# --------------------------------- kernel -------------------------------------
def _cross_attn_pool_kernel(q_ref, k_ref,
                            q1w_ref, q1b_ref, q2w_ref, q2b_ref,
                            k1w_key_ref, k1w_before_ref, k1w_after_ref, k1b_ref,
                            k2w_ref, k2b_ref,
                            o_ref, *, pool_mode, hidden_dim):
    f32 = jnp.float32
    bf16 = jnp.bfloat16

    kb, m, d = q_ref.shape
    _, n, _ = k_ref.shape

    # Flatten the kB fused pairs into one row-stacked slab (free reshapes:
    # collapsing leading dims, sublane-aligned at M=8 / N=128).
    query = q_ref[...].reshape(kb * m, d)              # [kB*M, D] f32
    key = k_ref[...].reshape(kb * n, d)                # [kB*N, D] f32 (scan stays f32)

    # Row index *within its own sequence*, full lane width.  Built once, reused
    # by every shift mask and by the mean-mode count vectors.
    row_one = lax.broadcasted_iota(jnp.int32, (n, d), 0)          # [N, D]
    row = jnp.concatenate([row_one] * kb, axis=0) if kb > 1 else row_one

    # --- exclusive prefix / suffix pooling over each key sequence -------------
    if pool_mode == 'max':
        neg_inf = f32(-jnp.inf)
        # Segmented Hillis-Steele doubling cummax: O(N*D*logN) roll (XLU) + max (VPU),
        # no N^2 intermediates, no cross-pair leakage (shift masks use row-in-seq).
        pref = key
        suff = key
        s = 1
        while s < n:
            pref = jnp.maximum(pref, _shift_rows_down(pref, s, neg_inf, row, n))
            suff = jnp.maximum(suff, _shift_rows_up(suff, s, neg_inf, row, n))
            s *= 2
        # Exclusive (strictly before / strictly after); endpoints -> 0 as in torch.
        x_before = _shift_rows_down(pref, 1, f32(0.0), row, n)
        x_after = _shift_rows_up(suff, 1, f32(0.0), row, n)
    elif pool_mode == 'mean':
        # Same segmented doubling scan with add (identity 0), then exact counts.
        # Keeps the working set O(N*D) (v7x 64 MiB VMEM safe) and fuses across pairs.
        pref = key
        suff = key
        s = 1
        while s < n:
            pref = pref + _shift_rows_down(pref, s, f32(0.0), row, n)
            suff = suff + _shift_rows_up(suff, s, f32(0.0), row, n)
            s *= 2
        sum_before = _shift_rows_down(pref, 1, f32(0.0), row, n)
        sum_after = _shift_rows_up(suff, 1, f32(0.0), row, n)
        row_f = row.astype(f32)
        x_before = sum_before / jnp.maximum(row_f, 1.0)               # count = i
        x_after = sum_after / jnp.maximum(f32(n - 1) - row_f, 1.0)    # count = n-1-i
    else:
        raise ValueError(f'Invalid pool mode: {pool_mode}')

    # --- key branch: key2(relu(key1(cat([key, x_before, x_after])))) ----------
    # cat([key, xb, xa], 1) @ k1w == key @ k1w[:D] + xb @ k1w[D:2D] + xa @ k1w[2D:]
    # bf16 MXU operands, f32 accumulation; bias + relu stay f32 on the VPU.
    h_k = (jnp.dot(key.astype(bf16), k1w_key_ref[...], preferred_element_type=f32)
           + jnp.dot(x_before.astype(bf16), k1w_before_ref[...], preferred_element_type=f32)
           + jnp.dot(x_after.astype(bf16), k1w_after_ref[...], preferred_element_type=f32)
           + k1b_ref[...])
    h_k = jnp.maximum(h_k, 0.0)
    x_key = jnp.dot(h_k.astype(bf16), k2w_ref[...], preferred_element_type=f32) + k2b_ref[...]

    # --- query branch: all kB pairs stacked -> [kB*M, D] rows per MXU push ----
    h_q = jnp.dot(query.astype(bf16), q1w_ref[...], preferred_element_type=f32) + q1b_ref[...]
    h_q = jnp.maximum(h_q, 0.0)
    x_query = jnp.dot(h_q.astype(bf16), q2w_ref[...], preferred_element_type=f32) + q2b_ref[...]

    # --- per-pair scaled similarity (only the diagonal pair blocks exist) -----
    h = x_query.shape[1]
    xq = x_query.reshape(kb, m, h).astype(bf16)
    xk = x_key.reshape(kb, n, h).astype(bf16)
    sim = jnp.einsum('bmh,bnh->bmn', xq, xk, preferred_element_type=f32)
    o_ref[...] = sim * f32(1.0 / math.sqrt(hidden_dim))


# -------------------------------- wrapper --------------------------------------
def cross_attention_sequence_pool(query, key, params, pool_mode='max',
                                  pairs_per_step=2):
    """query: [B, M, D] (or [M, D]), key: [B, N, D] (or [N, D]) -> [B, M, N]."""
    squeeze = query.ndim == 2
    if squeeze:
        query = query[None]
        key = key[None]
    b, m, d = query.shape
    b2, n, d2 = key.shape
    assert b == b2 and d == d2
    h = params['q2w'].shape[1]

    # Pairs fused per grid step: largest divisor of B that is <= pairs_per_step.
    # Keeping >=2 grid steps (B=4, kB=2) lets v7x shard the batch across its 2 TCs.
    kb = 1
    for cand in range(min(pairs_per_step, b), 0, -1):
        if b % cand == 0:
            kb = cand
            break
    grid = (b // kb,)

    bf16 = jnp.bfloat16
    f32 = jnp.float32

    # Split key1's [3D, H] weight into its three [D, H] sub-blocks (host-side).
    k1w = params['k1w']
    k1w_key, k1w_before, k1w_after = k1w[0:d], k1w[d:2 * d], k1w[2 * d:3 * d]

    # Weight matrices -> bf16 (MXU operands); biases stay f32 (added post-accum).
    weights = (params['q1w'].astype(bf16), params['q1b'].astype(f32),
               params['q2w'].astype(bf16), params['q2b'].astype(f32),
               k1w_key.astype(bf16), k1w_before.astype(bf16), k1w_after.astype(bf16),
               params['k1b'].astype(f32),
               params['k2w'].astype(bf16), params['k2b'].astype(f32))

    def _batched(shape_suffix):
        # kB pairs per grid step along the batch axis.
        return pl.BlockSpec((kb,) + shape_suffix, lambda g: (g, 0, 0))

    def _whole(w):
        nd = w.ndim
        # full array, constant block index -> resident in VMEM, no refetch
        return pl.BlockSpec(w.shape, lambda g: (0,) * nd)

    in_specs = [_batched((m, d)), _batched((n, d))] + [_whole(w) for w in weights]
    out_specs = _batched((m, n))

    flops_per_pair = 2 * (m * d * h + m * h * h + 3 * n * d * h + n * h * h + m * n * h)
    weight_bytes = (2 * sum(int(w.size) for w in
                            (params['q1w'], params['q2w'], k1w, params['k2w']))
                    + 4 * sum(int(params[x].size) for x in ('q1b', 'q2b', 'k1b', 'k2b')))
    bytes_accessed = (4 * int(query.size) + 4 * int(key.size)
                      + weight_bytes + 4 * b * m * n)

    kernel = functools.partial(_cross_attn_pool_kernel,
                               pool_mode=pool_mode, hidden_dim=h)
    out = pl.pallas_call(
        kernel,
        grid=grid,
        in_specs=in_specs,
        out_specs=out_specs,
        out_shape=jax.ShapeDtypeStruct((b, m, n), jnp.float32),
        compiler_params=pltpu.CompilerParams(
            dimension_semantics=("parallel",)),   # batch axis -> both TCs on v7x
        cost_estimate=pl.CostEstimate(flops=b * flops_per_pair,
                                      transcendentals=0,
                                      bytes_accessed=bytes_accessed),
    )(query.astype(f32), key.astype(f32), *weights)
    return out[0] if squeeze else out


# ------------------------- pure-JAX reference (for checking) -------------------
def _reference_single(query, key, params, pool_mode='max'):
    n = key.shape[0]
    if pool_mode == 'max':
        xb = [jnp.zeros_like(key[0])] + [jnp.max(key[:i], axis=0) for i in range(1, n)]
        xa = [jnp.max(key[i + 1:], axis=0) for i in range(n - 1)] + [jnp.zeros_like(key[0])]
    else:
        xb = [jnp.zeros_like(key[0])] + [jnp.mean(key[:i], axis=0) for i in range(1, n)]
        xa = [jnp.mean(key[i + 1:], axis=0) for i in range(n - 1)] + [jnp.zeros_like(key[0])]
    x = jnp.concatenate([key, jnp.stack(xb, 0), jnp.stack(xa, 0)], axis=1)
    x_key = jnp.maximum(x @ params['k1w'] + params['k1b'], 0.0) @ params['k2w'] + params['k2b']
    x_query = (jnp.maximum(query @ params['q1w'] + params['q1b'], 0.0)
               @ params['q2w'] + params['q2b'])
    h = params['q2w'].shape[1]
    return (x_query @ x_key.T) / math.sqrt(h)


def _init_params(rng, input_dim, hidden_dim):
    ks = jax.random.split(rng, 8)

    def uniform(k, shape, limit):
        return jax.random.uniform(k, shape, jnp.float32, -limit, limit)

    def xavier(k, shape):  # matches nn.init.xavier_uniform_ scale
        fan_in, fan_out = shape
        return uniform(k, shape, math.sqrt(6.0 / (fan_in + fan_out)))

    def default_linear(k, shape):  # deterministic stand-in for torch default init
        fan_in = shape[0]
        return uniform(k, shape, 1.0 / math.sqrt(fan_in))

    return {
        'q1w': default_linear(ks[0], (input_dim, hidden_dim)),
        'q1b': uniform(ks[1], (1, hidden_dim), 1.0 / math.sqrt(input_dim)),
        'q2w': xavier(ks[2], (hidden_dim, hidden_dim)),
        'q2b': uniform(ks[3], (1, hidden_dim), 1.0 / math.sqrt(hidden_dim)),
        'k1w': default_linear(ks[4], (3 * input_dim, hidden_dim)),
        'k1b': uniform(ks[5], (1, hidden_dim), 1.0 / math.sqrt(3 * input_dim)),
        'k2w': xavier(ks[6], (hidden_dim, hidden_dim)),
        'k2b': uniform(ks[7], (1, hidden_dim), 1.0 / math.sqrt(hidden_dim)),
    }


if __name__ == "__main__":
    INPUT_DIM = 128    # lane-dense feature dim
    HIDDEN_DIM = 128   # lane-dense hidden dim
    B = 4              # 4 pairs -> 2 grid steps of 2 fused pairs each
    M = 8              # query rows per pair (sublane multiple of 8)
    N = 128            # key sequence length per pair (lane-dense output last dim)

    root = jax.random.PRNGKey(0)
    k_q, k_k, k_p = jax.random.split(root, 3)
    query = jax.random.normal(k_q, (B, M, INPUT_DIM), jnp.float32)
    key = jax.random.normal(k_k, (B, N, INPUT_DIM), jnp.float32)
    params = _init_params(k_p, INPUT_DIM, HIDDEN_DIM)

    for mode in ('max', 'mean'):
        out = cross_attention_sequence_pool(query, key, params, pool_mode=mode)
        out = jax.block_until_ready(out)
        ref = jax.vmap(lambda q, k, _m=mode: _reference_single(q, k, params, _m))(query, key)
        assert out.shape == (B, M, N)
        max_err = float(jnp.max(jnp.abs(out - ref)))
        # bf16 MXU operands (f32 accumulation) -> loosened tolerance vs f32 reference.
        assert jnp.allclose(out, ref, atol=5e-2, rtol=5e-2), (
            f"mismatch vs reference ({mode}), max abs err = {max_err}")

    print("KERNEL_OK")
</pallas_src>

<mosaic_0001>
module attributes {stable_mosaic.version = 11 : i64} {
  func.func @_cross_attn_pool_kernel(%arg0: i32, %arg1: memref<2x8x128xf32, #tpu.memory_space<vmem>>, %arg2: memref<2x128x128xf32, #tpu.memory_space<vmem>>, %arg3: memref<128x128xbf16, #tpu.memory_space<vmem>>, %arg4: memref<1x128xf32, #tpu.memory_space<vmem>>, %arg5: memref<128x128xbf16, #tpu.memory_space<vmem>>, %arg6: memref<1x128xf32, #tpu.memory_space<vmem>>, %arg7: memref<128x128xbf16, #tpu.memory_space<vmem>>, %arg8: memref<128x128xbf16, #tpu.memory_space<vmem>>, %arg9: memref<128x128xbf16, #tpu.memory_space<vmem>>, %arg10: memref<1x128xf32, #tpu.memory_space<vmem>>, %arg11: memref<128x128xbf16, #tpu.memory_space<vmem>>, %arg12: memref<1x128xf32, #tpu.memory_space<vmem>>, %arg13: memref<2x8x128xf32, #tpu.memory_space<vmem>>) attributes {dimension_semantics = [#tpu.dimension_semantics<parallel>], iteration_bounds = array<i64: 2>, scalar_prefetch = 0 : i64, scratch_operands = 0 : i64, tpu.core_type = #tpu.core_type<tc>, window_params = [{transform_indices = @transform_0, window_bounds = array<i64: 2, 8, 128>}, {transform_indices = @transform_1, window_bounds = array<i64: 2, 128, 128>}, {pipeline_mode = #tpu.pipeline_mode<synchronous>, transform_indices = @transform_2, window_bounds = array<i64: 128, 128>}, {pipeline_mode = #tpu.pipeline_mode<synchronous>, transform_indices = @transform_3, window_bounds = array<i64: 1, 128>}, {pipeline_mode = #tpu.pipeline_mode<synchronous>, transform_indices = @transform_4, window_bounds = array<i64: 128, 128>}, {pipeline_mode = #tpu.pipeline_mode<synchronous>, transform_indices = @transform_5, window_bounds = array<i64: 1, 128>}, {pipeline_mode = #tpu.pipeline_mode<synchronous>, transform_indices = @transform_6, window_bounds = array<i64: 128, 128>}, {pipeline_mode = #tpu.pipeline_mode<synchronous>, transform_indices = @transform_7, window_bounds = array<i64: 128, 128>}, {pipeline_mode = #tpu.pipeline_mode<synchronous>, transform_indices = @transform_8, window_bounds = array<i64: 128, 128>}, {pipeline_mode = #tpu.pipeline_mode<synchronous>, transform_indices = @transform_9, window_bounds = array<i64: 1, 128>}, {pipeline_mode = #tpu.pipeline_mode<synchronous>, transform_indices = @transform_10, window_bounds = array<i64: 128, 128>}, {pipeline_mode = #tpu.pipeline_mode<synchronous>, transform_indices = @transform_11, window_bounds = array<i64: 1, 128>}, {transform_indices = @transform_12, window_bounds = array<i64: 2, 8, 128>}]} {
    %c0 = arith.constant 0 : index
    %c0_0 = arith.constant 0 : index
    %c0_1 = arith.constant 0 : index
    %0 = vector.load %arg1[%c0, %c0_0, %c0_1] : memref<2x8x128xf32, #tpu.memory_space<vmem>>, vector<2x8x128xf32>
    %1 = vector.shape_cast %0 : vector<2x8x128xf32> to vector<16x128xf32>
    %c0_2 = arith.constant 0 : index
    %c0_3 = arith.constant 0 : index
    %c0_4 = arith.constant 0 : index
    %2 = vector.load %arg2[%c0_2, %c0_3, %c0_4] : memref<2x128x128xf32, #tpu.memory_space<vmem>>, vector<2x128x128xf32>
    %3 = vector.shape_cast %2 : vector<2x128x128xf32> to vector<256x128xf32>
    %4 = tpu.iota {dimensions = array<i32: 0>} : vector<128x128xi32>
    %5 = tpu.concatenate %4, %4 in 0 : vector<128x128xi32>, vector<128x128xi32> -> vector<256x128xi32>
    %c1_i32 = arith.constant 1 : i32
    %6 = tpu.dynamic_rotate %3 by %c1_i32 dim 0 : vector<256x128xf32>, i32 -> vector<256x128xf32>
    %c1_i32_5 = arith.constant 1 : i32
    %7 = vector.broadcast %c1_i32_5 : i32 to vector<256x128xi32>
    %8 = arith.cmpi slt, %5, %7 : vector<256x128xi32>
    %cst = arith.constant 0xFF800000 : f32
    %9 = vector.broadcast %cst : f32 to vector<256x128xf32>
    %10 = arith.select %8, %9, %6 : vector<256x128xi1>, vector<256x128xf32>
    %11 = arith.maximumf %3, %10 : vector<256x128xf32>
    %c255_i32 = arith.constant 255 : i32
    %12 = tpu.dynamic_rotate %3 by %c255_i32 dim 0 : vector<256x128xf32>, i32 -> vector<256x128xf32>
    %c127_i32 = arith.constant 127 : i32
    %13 = vector.broadcast %c127_i32 : i32 to vector<256x128xi32>
    %14 = arith.cmpi sge, %5, %13 : vector<256x128xi32>
    %cst_6 = arith.constant 0xFF800000 : f32
    %15 = vector.broadcast %cst_6 : f32 to vector<256x128xf32>
    %16 = arith.select %14, %15, %12 : vector<256x128xi1>, vector<256x128xf32>
    %17 = arith.maximumf %3, %16 : vector<256x128xf32>
    %c2_i32 = arith.constant 2 : i32
    %18 = tpu.dynamic_rotate %11 by %c2_i32 dim 0 : vector<256x128xf32>, i32 -> vector<256x128xf32>
    %c2_i32_7 = arith.constant 2 : i32
    %19 = vector.broadcast %c2_i32_7 : i32 to vector<256x128xi32>
    %20 = arith.cmpi slt, %5, %19 : vector<256x128xi32>
    %cst_8 = arith.constant 0xFF800000 : f32
    %21 = vector.broadcast %cst_8 : f32 to vector<256x128xf32>
    %22 = arith.select %20, %21, %18 : vector<256x128xi1>, vector<256x128xf32>
    %23 = arith.maximumf %11, %22 : vector<256x128xf32>
    %c254_i32 = arith.constant 254 : i32
    %24 = tpu.dynamic_rotate %17 by %c254_i32 dim 0 : vector<256x128xf32>, i32 -> vector<256x128xf32>
    %c126_i32 = arith.constant 126 : i32
    %25 = vector.broadcast %c126_i32 : i32 to vector<256x128xi32>
    %26 = arith.cmpi sge, %5, %25 : vector<256x128xi32>
    %cst_9 = arith.constant 0xFF800000 : f32
    %27 = vector.broadcast %cst_9 : f32 to vector<256x128xf32>
    %28 = arith.select %26, %27, %24 : vector<256x128xi1>, vector<256x128xf32>
    %29 = arith.maximumf %17, %28 : vector<256x128xf32>
    %c4_i32 = arith.constant 4 : i32
    %30 = tpu.dynamic_rotate %23 by %c4_i32 dim 0 : vector<256x128xf32>, i32 -> vector<256x128xf32>
    %c4_i32_10 = arith.constant 4 : i32
    %31 = vector.broadcast %c4_i32_10 : i32 to vector<256x128xi32>
    %32 = arith.cmpi slt, %5, %31 : vector<256x128xi32>
    %cst_11 = arith.constant 0xFF800000 : f32
    %33 = vector.broadcast %cst_11 : f32 to vector<256x128xf32>
    %34 = arith.select %32, %33, %30 : vector<256x128xi1>, vector<256x128xf32>
    %35 = arith.maximumf %23, %34 : vector<256x128xf32>
    %c252_i32 = arith.constant 252 : i32
    %36 = tpu.dynamic_rotate %29 by %c252_i32 dim 0 : vector<256x128xf32>, i32 -> vector<256x128xf32>
    %c124_i32 = arith.constant 124 : i32
    %37 = vector.broadcast %c124_i32 : i32 to vector<256x128xi32>
    %38 = arith.cmpi sge, %5, %37 : vector<256x128xi32>
    %cst_12 = arith.constant 0xFF800000 : f32
    %39 = vector.broadcast %cst_12 : f32 to vector<256x128xf32>
    %40 = arith.select %38, %39, %36 : vector<256x128xi1>, vector<256x128xf32>
    %41 = arith.maximumf %29, %40 : vector<256x128xf32>
    %c8_i32 = arith.constant 8 : i32
    %42 = tpu.dynamic_rotate %35 by %c8_i32 dim 0 : vector<256x128xf32>, i32 -> vector<256x128xf32>
    %c8_i32_13 = arith.constant 8 : i32
    %43 = vector.broadcast %c8_i32_13 : i32 to vector<256x128xi32>
    %44 = arith.cmpi slt, %5, %43 : vector<256x128xi32>
    %cst_14 = arith.constant 0xFF800000 : f32
    %45 = vector.broadcast %cst_14 : f32 to vector<256x128xf32>
    %46 = arith.select %44, %45, %42 : vector<256x128xi1>, vector<256x128xf32>
    %47 = arith.maximumf %35, %46 : vector<256x128xf32>
    %c248_i32 = arith.constant 248 : i32
    %48 = tpu.dynamic_rotate %41 by %c248_i32 dim 0 : vector<256x128xf32>, i32 -> vector<256x128xf32>
    %c120_i32 = arith.constant 120 : i32
    %49 = vector.broadcast %c120_i32 : i32 to vector<256x128xi32>
    %50 = arith.cmpi sge, %5, %49 : vector<256x128xi32>
    %cst_15 = arith.constant 0xFF800000 : f32
    %51 = vector.broadcast %cst_15 : f32 to vector<256x128xf32>
    %52 = arith.select %50, %51, %48 : vector<256x128xi1>, vector<256x128xf32>
    %53 = arith.maximumf %41, %52 : vector<256x128xf32>
    %c16_i32 = arith.constant 16 : i32
    %54 = tpu.dynamic_rotate %47 by %c16_i32 dim 0 : vector<256x128xf32>, i32 -> vector<256x128xf32>
    %c16_i32_16 = arith.constant 16 : i32
    %55 = vector.broadcast %c16_i32_16 : i32 to vector<256x128xi32>
    %56 = arith.cmpi slt, %5, %55 : vector<256x128xi32>
    %cst_17 = arith.constant 0xFF800000 : f32
    %57 = vector.broadcast %cst_17 : f32 to vector<256x128xf32>
    %58 = arith.select %56, %57, %54 : vector<256x128xi1>, vector<256x128xf32>
    %59 = arith.maximumf %47, %58 : vector<256x128xf32>
    %c240_i32 = arith.constant 240 : i32
    %60 = tpu.dynamic_rotate %53 by %c240_i32 dim 0 : vector<256x128xf32>, i32 -> vector<256x128xf32>
    %c112_i32 = arith.constant 112 : i32
    %61 = vector.broadcast %c112_i32 : i32 to vector<256x128xi32>
    %62 = arith.cmpi sge, %5, %61 : vector<256x128xi32>
    %cst_18 = arith.constant 0xFF800000 : f32
    %63 = vector.broadcast %cst_18 : f32 to vector<256x128xf32>
    %64 = arith.select %62, %63, %60 : vector<256x128xi1>, vector<256x128xf32>
    %65 = arith.maximumf %53, %64 : vector<256x128xf32>
    %c32_i32 = arith.constant 32 : i32
    %66 = tpu.dynamic_rotate %59 by %c32_i32 dim 0 : vector<256x128xf32>, i32 -> vector<256x128xf32>
    %c32_i32_19 = arith.constant 32 : i32
    %67 = vector.broadcast %c32_i32_19 : i32 to vector<256x128xi32>
    %68 = arith.cmpi slt, %5, %67 : vector<256x128xi32>
    %cst_20 = arith.constant 0xFF800000 : f32
    %69 = vector.broadcast %cst_20 : f32 to vector<256x128xf32>
    %70 = arith.select %68, %69, %66 : vector<256x128xi1>, vector<256x128xf32>
    %71 = arith.maximumf %59, %70 : vector<256x128xf32>
    %c224_i32 = arith.constant 224 : i32
    %72 = tpu.dynamic_rotate %65 by %c224_i32 dim 0 : vector<256x128xf32>, i32 -> vector<256x128xf32>
    %c96_i32 = arith.constant 96 : i32
    %73 = vector.broadcast %c96_i32 : i32 to vector<256x128xi32>
    %74 = arith.cmpi sge, %5, %73 : vector<256x128xi32>
    %cst_21 = arith.constant 0xFF800000 : f32
    %75 = vector.broadcast %cst_21 : f32 to vector<256x128xf32>
    %76 = arith.select %74, %75, %72 : vector<256x128xi1>, vector<256x128xf32>
    %77 = arith.maximumf %65, %76 : vector<256x128xf32>
    %c64_i32 = arith.constant 64 : i32
    %78 = tpu.dynamic_rotate %71 by %c64_i32 dim 0 : vector<256x128xf32>, i32 -> vector<256x128xf32>
    %c64_i32_22 = arith.constant 64 : i32
    %79 = vector.broadcast %c64_i32_22 : i32 to vector<256x128xi32>
    %80 = arith.cmpi slt, %5, %79 : vector<256x128xi32>
    %cst_23 = arith.constant 0xFF800000 : f32
    %81 = vector.broadcast %cst_23 : f32 to vector<256x128xf32>
    %82 = arith.select %80, %81, %78 : vector<256x128xi1>, vector<256x128xf32>
    %83 = arith.maximumf %71, %82 : vector<256x128xf32>
    %c192_i32 = arith.constant 192 : i32
    %84 = tpu.dynamic_rotate %77 by %c192_i32 dim 0 : vector<256x128xf32>, i32 -> vector<256x128xf32>
    %c64_i32_24 = arith.constant 64 : i32
    %85 = vector.broadcast %c64_i32_24 : i32 to vector<256x128xi32>
    %86 = arith.cmpi sge, %5, %85 : vector<256x128xi32>
    %cst_25 = arith.constant 0xFF800000 : f32
    %87 = vector.broadcast %cst_25 : f32 to vector<256x128xf32>
    %88 = arith.select %86, %87, %84 : vector<256x128xi1>, vector<256x128xf32>
    %89 = arith.maximumf %77, %88 : vector<256x128xf32>
    %c1_i32_26 = arith.constant 1 : i32
    %90 = tpu.dynamic_rotate %83 by %c1_i32_26 dim 0 : vector<256x128xf32>, i32 -> vector<256x128xf32>
    %c1_i32_27 = arith.constant 1 : i32
    %91 = vector.broadcast %c1_i32_27 : i32 to vector<256x128xi32>
    %92 = arith.cmpi slt, %5, %91 : vector<256x128xi32>
    %cst_28 = arith.constant 0.000000e+00 : f32
    %93 = vector.broadcast %cst_28 : f32 to vector<256x128xf32>
    %94 = arith.select %92, %93, %90 : vector<256x128xi1>, vector<256x128xf32>
    %c255_i32_29 = arith.constant 255 : i32
    %95 = tpu.dynamic_rotate %89 by %c255_i32_29 dim 0 : vector<256x128xf32>, i32 -> vector<256x128xf32>
    %c127_i32_30 = arith.constant 127 : i32
    %96 = vector.broadcast %c127_i32_30 : i32 to vector<256x128xi32>
    %97 = arith.cmpi sge, %5, %96 : vector<256x128xi32>
    %cst_31 = arith.constant 0.000000e+00 : f32
    %98 = vector.broadcast %cst_31 : f32 to vector<256x128xf32>
    %99 = arith.select %97, %98, %95 : vector<256x128xi1>, vector<256x128xf32>
    %100 = arith.truncf %3 : vector<256x128xf32> to vector<256x128xbf16>
    %c0_32 = arith.constant 0 : index
    %c0_33 = arith.constant 0 : index
    %101 = vector.load %arg7[%c0_32, %c0_33] : memref<128x128xbf16, #tpu.memory_space<vmem>>, vector<128x128xbf16>
    %cst_34 = arith.constant dense<0.000000e+00> : vector<256x128xf32>
    %102 = tpu.matmul %100, %101, %cst_34 {dimension_numbers = #tpu.dot_dimension_numbers<[1], [0], [0], [1], [0, 0, 1, 1], [], []>} : vector<256x128xbf16>, vector<128x128xbf16>, vector<256x128xf32> -> vector<256x128xf32>
    %103 = arith.truncf %94 : vector<256x128xf32> to vector<256x128xbf16>
    %c0_35 = arith.constant 0 : index
    %c0_36 = arith.constant 0 : index
    %104 = vector.load %arg8[%c0_35, %c0_36] : memref<128x128xbf16, #tpu.memory_space<vmem>>, vector<128x128xbf16>
    %cst_37 = arith.constant dense<0.000000e+00> : vector<256x128xf32>
    %105 = tpu.matmul %103, %104, %cst_37 {dimension_numbers = #tpu.dot_dimension_numbers<[1], [0], [0], [1], [0, 0, 1, 1], [], []>} : vector<256x128xbf16>, vector<128x128xbf16>, vector<256x128xf32> -> vector<256x128xf32>
    %106 = arith.addf %102, %105 : vector<256x128xf32>
    %107 = arith.truncf %99 : vector<256x128xf32> to vector<256x128xbf16>
    %c0_38 = arith.constant 0 : index
    %c0_39 = arith.constant 0 : index
    %108 = vector.load %arg9[%c0_38, %c0_39] : memref<128x128xbf16, #tpu.memory_space<vmem>>, vector<128x128xbf16>
    %cst_40 = arith.constant dense<0.000000e+00> : vector<256x128xf32>
    %109 = tpu.matmul %107, %108, %cst_40 {dimension_numbers = #tpu.dot_dimension_numbers<[1], [0], [0], [1], [0, 0, 1, 1], [], []>} : vector<256x128xbf16>, vector<128x128xbf16>, vector<256x128xf32> -> vector<256x128xf32>
    %110 = arith.addf %106, %109 : vector<256x128xf32>
    %c0_41 = arith.constant 0 : index
    %c0_42 = arith.constant 0 : index
    %111 = vector.load %arg10[%c0_41, %c0_42] : memref<1x128xf32, #tpu.memory_space<vmem>>, vector<1x128xf32>
    %112 = vector.broadcast %111 : vector<1x128xf32> to vector<256x128xf32>
    %113 = arith.addf %110, %112 : vector<256x128xf32>
    %cst_43 = arith.constant 0.000000e+00 : f32
    %114 = vector.broadcast %cst_43 : f32 to vector<256x128xf32>
    %115 = arith.maximumf %113, %114 : vector<256x128xf32>
    %116 = arith.truncf %115 : vector<256x128xf32> to vector<256x128xbf16>
    %c0_44 = arith.constant 0 : index
    %c0_45 = arith.constant 0 : index
    %117 = vector.load %arg11[%c0_44, %c0_45] : memref<128x128xbf16, #tpu.memory_space<vmem>>, vector<128x128xbf16>
    %cst_46 = arith.constant dense<0.000000e+00> : vector<256x128xf32>
    %118 = tpu.matmul %116, %117, %cst_46 {dimension_numbers = #tpu.dot_dimension_numbers<[1], [0], [0], [1], [0, 0, 1, 1], [], []>} : vector<256x128xbf16>, vector<128x128xbf16>, vector<256x128xf32> -> vector<256x128xf32>
    %c0_47 = arith.constant 0 : index
    %c0_48 = arith.constant 0 : index
    %119 = vector.load %arg12[%c0_47, %c0_48] : memref<1x128xf32, #tpu.memory_space<vmem>>, vector<1x128xf32>
    %120 = vector.broadcast %119 : vector<1x128xf32> to vector<256x128xf32>
    %121 = arith.addf %118, %120 : vector<256x128xf32>
    %122 = arith.truncf %1 : vector<16x128xf32> to vector<16x128xbf16>
    %c0_49 = arith.constant 0 : index
    %c0_50 = arith.constant 0 : index
    %123 = vector.load %arg3[%c0_49, %c0_50] : memref<128x128xbf16, #tpu.memory_space<vmem>>, vector<128x128xbf16>
    %cst_51 = arith.constant dense<0.000000e+00> : vector<16x128xf32>
    %124 = tpu.matmul %122, %123, %cst_51 {dimension_numbers = #tpu.dot_dimension_numbers<[1], [0], [0], [1], [0, 0, 1, 1], [], []>} : vector<16x128xbf16>, vector<128x128xbf16>, vector<16x128xf32> -> vector<16x128xf32>
    %c0_52 = arith.constant 0 : index
    %c0_53 = arith.constant 0 : index
    %125 = vector.load %arg4[%c0_52, %c0_53] : memref<1x128xf32, #tpu.memory_space<vmem>>, vector<1x128xf32>
    %126 = vector.broadcast %125 : vector<1x128xf32> to vector<16x128xf32>
    %127 = arith.addf %124, %126 : vector<16x128xf32>
    %cst_54 = arith.constant 0.000000e+00 : f32
    %128 = vector.broadcast %cst_54 : f32 to vector<16x128xf32>
    %129 = arith.maximumf %127, %128 : vector<16x128xf32>
    %130 = arith.truncf %129 : vector<16x128xf32> to vector<16x128xbf16>
    %c0_55 = arith.constant 0 : index
    %c0_56 = arith.constant 0 : index
    %131 = vector.load %arg5[%c0_55, %c0_56] : memref<128x128xbf16, #tpu.memory_space<vmem>>, vector<128x128xbf16>
    %cst_57 = arith.constant dense<0.000000e+00> : vector<16x128xf32>
    %132 = tpu.matmul %130, %131, %cst_57 {dimension_numbers = #tpu.dot_dimension_numbers<[1], [0], [0], [1], [0, 0, 1, 1], [], []>} : vector<16x128xbf16>, vector<128x128xbf16>, vector<16x128xf32> -> vector<16x128xf32>
    %c0_58 = arith.constant 0 : index
    %c0_59 = arith.constant 0 : index
    %133 = vector.load %arg6[%c0_58, %c0_59] : memref<1x128xf32, #tpu.memory_space<vmem>>, vector<1x128xf32>
    %134 = vector.broadcast %133 : vector<1x128xf32> to vector<16x128xf32>
    %135 = arith.addf %132, %134 : vector<16x128xf32>
    %136 = vector.shape_cast %135 : vector<16x128xf32> to vector<2x8x128xf32>
    %137 = arith.truncf %136 : vector<2x8x128xf32> to vector<2x8x128xbf16>
    %138 = vector.shape_cast %121 : vector<256x128xf32> to vector<2x128x128xf32>
    %139 = arith.truncf %138 : vector<2x128x128xf32> to vector<2x128x128xbf16>
    "tpu.trace_start"() <{level = 10 : i32, message = "bmh,bnh->bmn"}> : () -> ()
    %cst_60 = arith.constant dense<0.000000e+00> : vector<2x8x128xf32>
    %140 = tpu.matmul %137, %139, %cst_60 {dimension_numbers = #tpu.dot_dimension_numbers<[2], [2], [1], [1], [0, 0, 0, 1, 1, 1], [0], [0]>} : vector<2x8x128xbf16>, vector<2x128x128xbf16>, vector<2x8x128xf32> -> vector<2x8x128xf32>
    "tpu.trace_stop"() : () -> ()
    %cst_61 = arith.constant 0.0883883461 : f32
    %141 = vector.broadcast %cst_61 : f32 to vector<2x8x128xf32>
    %142 = arith.mulf %140, %141 : vector<2x8x128xf32>
    %c0_62 = arith.constant 0 : index
    %c0_63 = arith.constant 0 : index
    %c0_64 = arith.constant 0 : index
    %143 = vector.load %arg13[%c0_62, %c0_63, %c0_64] : memref<2x8x128xf32, #tpu.memory_space<vmem>>, vector<2x8x128xf32>
    tpu.vector_store %arg13[%c0_62, %c0_63, %c0_64], %142 {strides = array<i32>} : memref<2x8x128xf32, #tpu.memory_space<vmem>>, vector<2x8x128xf32>,
    return
  }
  func.func @transform_0(%arg0: i32) -> (i32, i32, i32) {
    %c0_i32 = arith.constant 0 : i32
    %c0_i32_0 = arith.constant 0 : i32
    %c0_i32_1 = arith.constant 0 : i32
    return %arg0, %c0_i32, %c0_i32_0 : i32, i32, i32
  }
  func.func @transform_1(%arg0: i32) -> (i32, i32, i32) {
    %c0_i32 = arith.constant 0 : i32
    %c0_i32_0 = arith.constant 0 : i32
    %c0_i32_1 = arith.constant 0 : i32
    return %arg0, %c0_i32, %c0_i32_0 : i32, i32, i32
  }
  func.func @transform_2(%arg0: i32) -> (i32, i32) {
    %c0_i32 = arith.constant 0 : i32
    %c0_i32_0 = arith.constant 0 : i32
    %c0_i32_1 = arith.constant 0 : i32
    return %c0_i32, %c0_i32_0 : i32, i32
  }
  func.func @transform_3(%arg0: i32) -> (i32, i32) {
    %c0_i32 = arith.constant 0 : i32
    %c0_i32_0 = arith.constant 0 : i32
    %c0_i32_1 = arith.constant 0 : i32
    return %c0_i32, %c0_i32_0 : i32, i32
  }
  func.func @transform_4(%arg0: i32) -> (i32, i32) {
    %c0_i32 = arith.constant 0 : i32
    %c0_i32_0 = arith.constant 0 : i32
    %c0_i32_1 = arith.constant 0 : i32
    return %c0_i32, %c0_i32_0 : i32, i32
  }
  func.func @transform_5(%arg0: i32) -> (i32, i32) {
    %c0_i32 = arith.constant 0 : i32
    %c0_i32_0 = arith.constant 0 : i32
    %c0_i32_1 = arith.constant 0 : i32
    return %c0_i32, %c0_i32_0 : i32, i32
  }
  func.func @transform_6(%arg0: i32) -> (i32, i32) {
    %c0_i32 = arith.constant 0 : i32
    %c0_i32_0 = arith.constant 0 : i32
    %c0_i32_1 = arith.constant 0 : i32
    return %c0_i32, %c0_i32_0 : i32, i32
  }
  func.func @transform_7(%arg0: i32) -> (i32, i32) {
    %c0_i32 = arith.constant 0 : i32
    %c0_i32_0 = arith.constant 0 : i32
    %c0_i32_1 = arith.constant 0 : i32
    return %c0_i32, %c0_i32_0 : i32, i32
  }
  func.func @transform_8(%arg0: i32) -> (i32, i32) {
    %c0_i32 = arith.constant 0 : i32
    %c0_i32_0 = arith.constant 0 : i32
    %c0_i32_1 = arith.constant 0 : i32
    return %c0_i32, %c0_i32_0 : i32, i32
  }
  func.func @transform_9(%arg0: i32) -> (i32, i32) {
    %c0_i32 = arith.constant 0 : i32
    %c0_i32_0 = arith.constant 0 : i32
    %c0_i32_1 = arith.constant 0 : i32
    return %c0_i32, %c0_i32_0 : i32, i32
  }
  func.func @transform_10(%arg0: i32) -> (i32, i32) {
    %c0_i32 = arith.constant 0 : i32
    %c0_i32_0 = arith.constant 0 : i32
    %c0_i32_1 = arith.constant 0 : i32
    return %c0_i32, %c0_i32_0 : i32, i32
  }
  func.func @transform_11(%arg0: i32) -> (i32, i32) {
    %c0_i32 = arith.constant 0 : i32
    %c0_i32_0 = arith.constant 0 : i32
    %c0_i32_1 = arith.constant 0 : i32
    return %c0_i32, %c0_i32_0 : i32, i32
  }
  func.func @transform_12(%arg0: i32) -> (i32, i32, i32) {
    %c0_i32 = arith.constant 0 : i32
    %c0_i32_0 = arith.constant 0 : i32
    %c0_i32_1 = arith.constant 0 : i32
    return %arg0, %c0_i32, %c0_i32_0 : i32, i32, i32
  }
}

</mosaic_0001>

<llo_original>
// kernel: tpu_custom_call.1
$region0: #{tpu_custom_call.1}
  #allocation0 [shape = 'u32[]', space=smem, size = 0x4, offset = 0x4, fixed_abs, tag = 'smem constant byte address 0x4 - core index']
  #allocation1 [shape = 'u32[72,128]{1,0:T(1,128)}', space=vmem, size = 0x9000, scoped, tag = 'internal scratch']
  %s0 = inlined_call_operand.hbm [shape: f32[4,8,128], index: 0, kind: input, shape index: {}]
  %s1 = inlined_call_operand.hbm [shape: f32[4,128,128], index: 1, kind: input, shape index: {}]
  %s2 = inlined_call_operand.hbm [shape: bf16[128,128], index: 2, kind: input, shape index: {}]
  %s3 = inlined_call_operand.vmem [shape: f32[1,128], index: 3, kind: input, shape index: {}]
  %s4 = inlined_call_operand.hbm [shape: bf16[128,128], index: 4, kind: input, shape index: {}]
  %s5 = inlined_call_operand.vmem [shape: f32[1,128], index: 5, kind: input, shape index: {}]
  %s6 = inlined_call_operand.hbm [shape: bf16[128,128], index: 6, kind: input, shape index: {}]
  %s7 = inlined_call_operand.hbm [shape: bf16[128,128], index: 7, kind: input, shape index: {}]
  %s8 = inlined_call_operand.hbm [shape: bf16[128,128], index: 8, kind: input, shape index: {}]
  %s9 = inlined_call_operand.vmem [shape: f32[1,128], index: 9, kind: input, shape index: {}]
  %s10 = inlined_call_operand.hbm [shape: bf16[128,128], index: 10, kind: input, shape index: {}]
  %s11 = inlined_call_operand.vmem [shape: f32[1,128], index: 11, kind: input, shape index: {}]
  %s12 = inlined_call_operand.hbm [shape: f32[4,8,128], index: 12, kind: output, shape index: {}]
  %s13 = sld [smem:[#allocation0]]
  $region113: #{tpu_custom_call.1} parent=0
    _
  %s15 = ssub.s32 1, %s13
  %s16 = scalar_select 0, %s15, %s13
  $region1: #{tpu_custom_call.1} parent=0
    #allocation2 [shape = 'u8[16384]{0}', space=vmem, size = 0x4000, scoped, tag = 'input window, operand 0']
    #allocation3 [shape = 's32[2]{0}', space=sflag, size = 0x8, scoped, tag = 'scoped memory for tpu_custom_call.1']
    #allocation4 [shape = 's32[2]{0}', space=sflag, size = 0x8, scoped, tag = 'scoped memory for tpu_custom_call.1']
    #allocation5 [shape = 'u8[262144]{0}', space=vmem, size = 0x40000, scoped, tag = 'input window, operand 1']
    #allocation6 [shape = 's32[2]{0}', space=sflag, size = 0x8, scoped, tag = 'scoped memory for tpu_custom_call.1']
    #allocation7 [shape = 'u8[32768]{0}', space=vmem, size = 0x8000, scoped, tag = 'input window, operand 2, single buffered']
    #allocation8 [shape = 'u8[32768]{0}', space=vmem, size = 0x8000, scoped, tag = 'input window, operand 4, single buffered']
    #allocation9 [shape = 's32[1]{0}', space=sflag, size = 0x4, scoped, tag = 'scoped memory for tpu_custom_call.1']
    #allocation10 [shape = 'u8[32768]{0}', space=vmem, size = 0x8000, scoped, tag = 'input window, operand 6, single buffered']
    #allocation11 [shape = 'u8[32768]{0}', space=vmem, size = 0x8000, scoped, tag = 'input window, operand 7, single buffered']
    #allocation12 [shape = 's32[1]{0}', space=sflag, size = 0x4, scoped, tag = 'scoped memory for tpu_custom_call.1']
    #allocation13 [shape = 'u8[32768]{0}', space=vmem, size = 0x8000, scoped, tag = 'input window, operand 8, single buffered']
    #allocation14 [shape = 'u8[32768]{0}', space=vmem, size = 0x8000, scoped, tag = 'input window, operand 10, single buffered']
    #allocation15 [shape = 's32[1]{0}', space=sflag, size = 0x4, scoped, tag = 'scoped memory for tpu_custom_call.1']
    #allocation16 [shape = 'u8[16384]{0}', space=vmem, size = 0x4000, scoped, tag = 'output window, operand 0']
    %17 = vsyncpa [#allocation3], 0
    %s18 = scalar_lea.sflag [#allocation3], 1
    %19 = vsyncpa %s18, 0
    %20 = vsyncpa [#allocation6], 0
    %s21 = scalar_lea.sflag [#allocation6], 1
    %22 = vsyncpa %s21, 0
    %23 = vsyncpa [#allocation9], 0
    %24 = vsyncpa [#allocation12], 0
    %25 = vsyncpa [#allocation15], 0
    %26 = vsyncpa [#allocation4], 0
    %s27 = scalar_lea.sflag [#allocation4], 1
    %28 = vsyncpa %s27, 0
    loop: start=0, step=1, limit=4
    $region2: #{tpu_custom_call.1} parent=1 // loop_pre_header
      _
    $region3: #{tpu_custom_call.1} parent=1 // loop_header
      %s30 = sphi 0, %s34
      %p31 = scmp.ge.s32.totalorder %s30, 4
      %s40 = sphi 0, %s42
      %s43 = sphi 0, %s40
      %s44 = sphi 0, %s43
      %s60 = sphi 0, %s44
      %s66 = sphi 0, %s68
      %s69 = sphi 0, %s66
      %s70 = sphi 0, %s69
      %s86 = sphi 0, %s70
      %s90 = sphi 0, %s90
      %s92 = sphi 0, %s90
      %s93 = sphi 0, %s92
      %s107 = sphi 0, %s93
      %s111 = sphi 0, %s111
      %s113 = sphi 0, %s111
      %s114 = sphi 0, %s113
      %s128 = sphi 0, %s114
      %s132 = sphi 0, %s132
      %s134 = sphi 0, %s132
      %s135 = sphi 0, %s134
      %s149 = sphi 0, %s135
      %s153 = sphi 0, %s153
      %s155 = sphi 0, %s153
      %s156 = sphi 0, %s155
      %s170 = sphi 0, %s156
      %s174 = sphi 0, %s174
      %s176 = sphi 0, %s174
      %s177 = sphi 0, %s176
      %s191 = sphi 0, %s177
      %s195 = sphi 0, %s195
      %s197 = sphi 0, %s195
      %s198 = sphi 0, %s197
      %s212 = sphi 0, %s198
      %s216 = sphi 0, %s216
      %s218 = sphi 0, %s216
      %s219 = sphi 0, %s218
      %s233 = sphi 0, %s219
      %s237 = sphi 0, %s237
      %s239 = sphi 0, %s237
      %s240 = sphi 0, %s239
      %s254 = sphi 0, %s240
      %s258 = sphi 0, %s258
      %s260 = sphi 0, %s258
      %s261 = sphi 0, %s260
      %s275 = sphi 0, %s261
      %s279 = sphi 0, %s279
      %s281 = sphi 0, %s279
      %s282 = sphi 0, %s281
      %s296 = sphi 0, %s282
      %s302 = sphi 0, %s304
      %s305 = sphi 0, %s302
      %s306 = sphi 0, %s305
      %s322 = sphi 0, %s306
    $region4: #{tpu_custom_call.1} parent=1 // loop_header_branch
      %33 = sbr.rel (%p31) target = $region8
    $region5: #{tpu_custom_call.1} parent=1 // loop_body
      %s35 = ssub.s32 %s30, 1
      %s36 = ssub.s32 %s30, 2
      %s37 = sadd.s32 %s30, 1
      %s38 = ssub.s32 %s30, %s37
      %p39 = scmp.eq.s32.totalorder %s38, 0
      %s41 = sadd.s32 %s40, 1
      %s42 = scalar_select %p39, %s40, %s41
      %p45 = pneg %p39
      %p46 = scmp.eq.s32.totalorder %s30, 1
      %p47 = por %p45, %p46
      %p48 = scmp.ne.s32.totalorder %s40, %s43
      %p49 = scmp.eq.s32.totalorder %s30, 0
      %p50 = por %p48, %p49
      %p51 = scmp.ne.s32.totalorder %s40, %s43
      %p52 = scmp.eq.s32.totalorder %s35, 1
      %p53 = por %p51, %p52
      %p54 = scmp.ne.s32.totalorder %s43, %s44
      %p55 = scmp.eq.s32.totalorder %s35, 0
      %p56 = por %p54, %p55
      %p57 = scmp.ne.s32.totalorder %s43, %s44
      %p58 = scmp.eq.s32.totalorder %s36, 1
      %p59 = por %p57, %p58
      %p61 = scmp.ne.s32.totalorder %s44, %s60
      %p62 = scmp.eq.s32.totalorder %s36, 0
      %p63 = por %p61, %p62
      %s64 = ssub.s32 %s30, %s37
      %p65 = scmp.eq.s32.totalorder %s64, 0
      %s67 = sadd.s32 %s66, 1
      %s68 = scalar_select %p65, %s66, %s67
      %p71 = pneg %p65
      %p72 = scmp.eq.s32.totalorder %s30, 1
      %p73 = por %p71, %p72
      %p74 = scmp.ne.s32.totalorder %s66, %s69
      %p75 = scmp.eq.s32.totalorder %s30, 0
      %p76 = por %p74, %p75
      %p77 = scmp.ne.s32.totalorder %s66, %s69
      %p78 = scmp.eq.s32.totalorder %s35, 1
      %p79 = por %p77, %p78
      %p80 = scmp.ne.s32.totalorder %s69, %s70
      %p81 = scmp.eq.s32.totalorder %s35, 0
      %p82 = por %p80, %p81
      %p83 = scmp.ne.s32.totalorder %s69, %s70
      %p84 = scmp.eq.s32.totalorder %s36, 1
      %p85 = por %p83, %p84
      %p87 = scmp.ne.s32.totalorder %s70, %s86
      %p88 = scmp.eq.s32.totalorder %s36, 0
      %p89 = por %p87, %p88
      %s91 = sadd.s32 %s90, 1
      %p94 = scmp.eq.s32.totalorder %s30, 1
      %p95 = scmp.ne.s32.totalorder %s90, %s92
      %p96 = scmp.eq.s32.totalorder %s30, 0
      %p97 = por %p95, %p96
      %p98 = scmp.ne.s32.totalorder %s90, %s92
      %p99 = scmp.eq.s32.totalorder %s35, 1
      %p100 = por %p98, %p99
      %p101 = scmp.ne.s32.totalorder %s92, %s93
      %p102 = scmp.eq.s32.totalorder %s35, 0
      %p103 = por %p101, %p102
      %p104 = scmp.ne.s32.totalorder %s92, %s93
      %p105 = scmp.eq.s32.totalorder %s36, 1
      %p106 = por %p104, %p105
      %p108 = scmp.ne.s32.totalorder %s93, %s107
      %p109 = scmp.eq.s32.totalorder %s36, 0
      %p110 = por %p108, %p109
      %s112 = sadd.s32 %s111, 1
      %p115 = scmp.eq.s32.totalorder %s30, 1
      %p116 = scmp.ne.s32.totalorder %s111, %s113
      %p117 = scmp.eq.s32.totalorder %s30, 0
      %p118 = por %p116, %p117
      %p119 = scmp.ne.s32.totalorder %s111, %s113
      %p120 = scmp.eq.s32.totalorder %s35, 1
      %p121 = por %p119, %p120
      %p122 = scmp.ne.s32.totalorder %s113, %s114
      %p123 = scmp.eq.s32.totalorder %s35, 0
      %p124 = por %p122, %p123
      %p125 = scmp.ne.s32.totalorder %s113, %s114
      %p126 = scmp.eq.s32.totalorder %s36, 1
      %p127 = por %p125, %p126
      %p129 = scmp.ne.s32.totalorder %s114, %s128
      %p130 = scmp.eq.s32.totalorder %s36, 0
      %p131 = por %p129, %p130
      %s133 = sadd.s32 %s132, 1
      %p136 = scmp.eq.s32.totalorder %s30, 1
      %p137 = scmp.ne.s32.totalorder %s132, %s134
      %p138 = scmp.eq.s32.totalorder %s30, 0
      %p139 = por %p137, %p138
      %p140 = scmp.ne.s32.totalorder %s132, %s134
      %p141 = scmp.eq.s32.totalorder %s35, 1
      %p142 = por %p140, %p141
      %p143 = scmp.ne.s32.totalorder %s134, %s135
      %p144 = scmp.eq.s32.totalorder %s35, 0
      %p145 = por %p143, %p144
      %p146 = scmp.ne.s32.totalorder %s134, %s135
      %p147 = scmp.eq.s32.totalorder %s36, 1
      %p148 = por %p146, %p147
      %p150 = scmp.ne.s32.totalorder %s135, %s149
      %p151 = scmp.eq.s32.totalorder %s36, 0
      %p152 = por %p150, %p151
      %s154 = sadd.s32 %s153, 1
      %p157 = scmp.eq.s32.totalorder %s30, 1
      %p158 = scmp.ne.s32.totalorder %s153, %s155
      %p159 = scmp.eq.s32.totalorder %s30, 0
      %p160 = por %p158, %p159
      %p161 = scmp.ne.s32.totalorder %s153, %s155
      %p162 = scmp.eq.s32.totalorder %s35, 1
      %p163 = por %p161, %p162
      %p164 = scmp.ne.s32.totalorder %s155, %s156
      %p165 = scmp.eq.s32.totalorder %s35, 0
      %p166 = por %p164, %p165
      %p167 = scmp.ne.s32.totalorder %s155, %s156
      %p168 = scmp.eq.s32.totalorder %s36, 1
      %p169 = por %p167, %p168
      %p171 = scmp.ne.s32.totalorder %s156, %s170
      %p172 = scmp.eq.s32.totalorder %s36, 0
      %p173 = por %p171, %p172
      %s175 = sadd.s32 %s174, 1
      %p178 = scmp.eq.s32.totalorder %s30, 1
      %p179 = scmp.ne.s32.totalorder %s174, %s176
      %p180 = scmp.eq.s32.totalorder %s30, 0
      %p181 = por %p179, %p180
      %p182 = scmp.ne.s32.totalorder %s174, %s176
      %p183 = scmp.eq.s32.totalorder %s35, 1
      %p184 = por %p182, %p183
      %p185 = scmp.ne.s32.totalorder %s176, %s177
      %p186 = scmp.eq.s32.totalorder %s35, 0
      %p187 = por %p185, %p186
      %p188 = scmp.ne.s32.totalorder %s176, %s177
      %p189 = scmp.eq.s32.totalorder %s36, 1
      %p190 = por %p188, %p189
      %p192 = scmp.ne.s32.totalorder %s177, %s191
      %p193 = scmp.eq.s32.totalorder %s36, 0
      %p194 = por %p192, %p193
      %s196 = sadd.s32 %s195, 1
      %p199 = scmp.eq.s32.totalorder %s30, 1
      %p200 = scmp.ne.s32.totalorder %s195, %s197
      %p201 = scmp.eq.s32.totalorder %s30, 0
      %p202 = por %p200, %p201
      %p203 = scmp.ne.s32.totalorder %s195, %s197
      %p204 = scmp.eq.s32.totalorder %s35, 1
      %p205 = por %p203, %p204
      %p206 = scmp.ne.s32.totalorder %s197, %s198
      %p207 = scmp.eq.s32.totalorder %s35, 0
      %p208 = por %p206, %p207
      %p209 = scmp.ne.s32.totalorder %s197, %s198
      %p210 = scmp.eq.s32.totalorder %s36, 1
      %p211 = por %p209, %p210
      %p213 = scmp.ne.s32.totalorder %s198, %s212
      %p214 = scmp.eq.s32.totalorder %s36, 0
      %p215 = por %p213, %p214
      %s217 = sadd.s32 %s216, 1
      %p220 = scmp.eq.s32.totalorder %s30, 1
      %p221 = scmp.ne.s32.totalorder %s216, %s218
      %p222 = scmp.eq.s32.totalorder %s30, 0
      %p223 = por %p221, %p222
      %p224 = scmp.ne.s32.totalorder %s216, %s218
      %p225 = scmp.eq.s32.totalorder %s35, 1
      %p226 = por %p224, %p225
      %p227 = scmp.ne.s32.totalorder %s218, %s219
      %p228 = scmp.eq.s32.totalorder %s35, 0
      %p229 = por %p227, %p228
      %p230 = scmp.ne.s32.totalorder %s218, %s219
      %p231 = scmp.eq.s32.totalorder %s36, 1
      %p232 = por %p230, %p231
      %p234 = scmp.ne.s32.totalorder %s219, %s233
      %p235 = scmp.eq.s32.totalorder %s36, 0
      %p236 = por %p234, %p235
      %s238 = sadd.s32 %s237, 1
      %p241 = scmp.eq.s32.totalorder %s30, 1
      %p242 = scmp.ne.s32.totalorder %s237, %s239
      %p243 = scmp.eq.s32.totalorder %s30, 0
      %p244 = por %p242, %p243
      %p245 = scmp.ne.s32.totalorder %s237, %s239
      %p246 = scmp.eq.s32.totalorder %s35, 1
      %p247 = por %p245, %p246
      %p248 = scmp.ne.s32.totalorder %s239, %s240
      %p249 = scmp.eq.s32.totalorder %s35, 0
      %p250 = por %p248, %p249
      %p251 = scmp.ne.s32.totalorder %s239, %s240
      %p252 = scmp.eq.s32.totalorder %s36, 1
      %p253 = por %p251, %p252
      %p255 = scmp.ne.s32.totalorder %s240, %s254
      %p256 = scmp.eq.s32.totalorder %s36, 0
      %p257 = por %p255, %p256
      %s259 = sadd.s32 %s258, 1
      %p262 = scmp.eq.s32.totalorder %s30, 1
      %p263 = scmp.ne.s32.totalorder %s258, %s260
      %p264 = scmp.eq.s32.totalorder %s30, 0
      %p265 = por %p263, %p264
      %p266 = scmp.ne.s32.totalorder %s258, %s260
      %p267 = scmp.eq.s32.totalorder %s35, 1
      %p268 = por %p266, %p267
      %p269 = scmp.ne.s32.totalorder %s260, %s261
      %p270 = scmp.eq.s32.totalorder %s35, 0
      %p271 = por %p269, %p270
      %p272 = scmp.ne.s32.totalorder %s260, %s261
      %p273 = scmp.eq.s32.totalorder %s36, 1
      %p274 = por %p272, %p273
      %p276 = scmp.ne.s32.totalorder %s261, %s275
      %p277 = scmp.eq.s32.totalorder %s36, 0
      %p278 = por %p276, %p277
      %s280 = sadd.s32 %s279, 1
      %p283 = scmp.eq.s32.totalorder %s30, 1
      %p284 = scmp.ne.s32.totalorder %s279, %s281
      %p285 = scmp.eq.s32.totalorder %s30, 0
      %p286 = por %p284, %p285
      %p287 = scmp.ne.s32.totalorder %s279, %s281
      %p288 = scmp.eq.s32.totalorder %s35, 1
      %p289 = por %p287, %p288
      %p290 = scmp.ne.s32.totalorder %s281, %s282
      %p291 = scmp.eq.s32.totalorder %s35, 0
      %p292 = por %p290, %p291
      %p293 = scmp.ne.s32.totalorder %s281, %s282
      %p294 = scmp.eq.s32.totalorder %s36, 1
      %p295 = por %p293, %p294
      %p297 = scmp.ne.s32.totalorder %s282, %s296
      %p298 = scmp.eq.s32.totalorder %s36, 0
      %p299 = por %p297, %p298
      %s300 = ssub.s32 %s30, %s37
      %p301 = scmp.eq.s32.totalorder %s300, 0
      %s303 = sadd.s32 %s302, 1
      %s304 = scalar_select %p301, %s302, %s303
      %p307 = pneg %p301
      %p308 = scmp.eq.s32.totalorder %s30, 1
      %p309 = por %p307, %p308
      %p310 = scmp.ne.s32.totalorder %s302, %s305
      %p311 = scmp.eq.s32.totalorder %s30, 0
      %p312 = por %p310, %p311
      %p313 = scmp.ne.s32.totalorder %s302, %s305
      %p314 = scmp.eq.s32.totalorder %s35, 1
      %p315 = por %p313, %p314
      %p316 = scmp.ne.s32.totalorder %s305, %s306
      %p317 = scmp.eq.s32.totalorder %s35, 0
      %p318 = por %p316, %p317
      %p319 = scmp.ne.s32.totalorder %s305, %s306
      %p320 = scmp.eq.s32.totalorder %s36, 1
      %p321 = por %p319, %p320
      %p323 = scmp.ne.s32.totalorder %s306, %s322
      %p324 = scmp.eq.s32.totalorder %s36, 0
      %p325 = por %p323, %p324
      %p326 = scmp.le.s32.totalorder 1, %s30
      %p327 = scmp.lt.s32.totalorder %s30, 3
      %p328 = pnand %p326, %p327
      %p329 = pneg %p328
      // Predicated region
      $region9: #{tpu_custom_call.1} parent=5 // pred_check
        _
      $region10: #{tpu_custom_call.1} parent=5 // pred_check_branch
        %331 = sbr.rel (%p328) target = $region12
      $region11: #{tpu_custom_call.1} parent=5 // pred_region
        %s332 = ssub.s32 %s30, 1
        // Predicated region
        $region13: #{tpu_custom_call.1} parent=11 // pred_check
          %p333 = pneg %p103
        $region14: #{tpu_custom_call.1} parent=11 // pred_check_branch
          %335 = sbr.rel (%p333) target = $region16
        $region15: #{tpu_custom_call.1} parent=11 // pred_region
          %337 = vsyncadd [#allocation6], 0
          %s338 = sshll.u32 %s2, 4
          %s339 = int_to_ptr.hbm [resolvable:$true] %s338
          %s340 = sshll.u32 [#allocation7], 4
          %s341 = int_to_ptr.vmem [resolvable:$true] %s340
          %346 = dma.hbm_to_vmem [thread:$0]  %s339, 1024, %s341, [#allocation6], 64, 64, 4
        $region16: #{tpu_custom_call.1} parent=11 // pred_fallthru
          _
        // Predicated region
        $region17: #{tpu_custom_call.1} parent=11 // pred_check
          %p347 = pneg %p124
        $region18: #{tpu_custom_call.1} parent=11 // pred_check_branch
          %349 = sbr.rel (%p347) target = $region20
        $region19: #{tpu_custom_call.1} parent=11 // pred_region
          _
        $region20: #{tpu_custom_call.1} parent=11 // pred_fallthru
          _
        // Predicated region
        $region21: #{tpu_custom_call.1} parent=11 // pred_check
          %p350 = pneg %p145
        $region22: #{tpu_custom_call.1} parent=11 // pred_check_branch
          %352 = sbr.rel (%p350) target = $region24
        $region23: #{tpu_custom_call.1} parent=11 // pred_region
          %354 = vsyncadd [#allocation9], 0
          %s355 = sshll.u32 %s4, 4
          %s356 = int_to_ptr.hbm [resolvable:$true] %s355
          %s357 = sshll.u32 [#allocation8], 4
          %s358 = int_to_ptr.vmem [resolvable:$true] %s357
          %363 = dma.hbm_to_vmem [thread:$0]  %s356, 1024, %s358, [#allocation9], 64, 64, 4
        $region24: #{tpu_custom_call.1} parent=11 // pred_fallthru
          _
        // Predicated region
        $region25: #{tpu_custom_call.1} parent=11 // pred_check
          %p364 = pneg %p166
        $region26: #{tpu_custom_call.1} parent=11 // pred_check_branch
          %366 = sbr.rel (%p364) target = $region28
        $region27: #{tpu_custom_call.1} parent=11 // pred_region
          _
        $region28: #{tpu_custom_call.1} parent=11 // pred_fallthru
          _
        // Predicated region
        $region29: #{tpu_custom_call.1} parent=11 // pred_check
          %p367 = pneg %p187
        $region30: #{tpu_custom_call.1} parent=11 // pred_check_branch
          %369 = sbr.rel (%p367) target = $region32
        $region31: #{tpu_custom_call.1} parent=11 // pred_region
          %371 = vsyncadd [#allocation9], 0
          %s372 = sshll.u32 %s6, 4
          %s373 = int_to_ptr.hbm [resolvable:$true] %s372
          %s374 = sshll.u32 [#allocation10], 4
          %s375 = int_to_ptr.vmem [resolvable:$true] %s374
          %380 = dma.hbm_to_vmem [thread:$0]  %s373, 1024, %s375, [#allocation9], 64, 64, 4
        $region32: #{tpu_custom_call.1} parent=11 // pred_fallthru
          _
        // Predicated region
        $region33: #{tpu_custom_call.1} parent=11 // pred_check
          %p381 = pneg %p208
        $region34: #{tpu_custom_call.1} parent=11 // pred_check_branch
          %383 = sbr.rel (%p381) target = $region36
        $region35: #{tpu_custom_call.1} parent=11 // pred_region
          %385 = vsyncadd [#allocation12], 0
          %s386 = sshll.u32 %s7, 4
          %s387 = int_to_ptr.hbm [resolvable:$true] %s386
          %s388 = sshll.u32 [#allocation11], 4
          %s389 = int_to_ptr.vmem [resolvable:$true] %s388
          %394 = dma.hbm_to_vmem [thread:$0]  %s387, 1024, %s389, [#allocation12], 64, 64, 4
        $region36: #{tpu_custom_call.1} parent=11 // pred_fallthru
          _
        // Predicated region
        $region37: #{tpu_custom_call.1} parent=11 // pred_check
          %p395 = pneg %p229
        $region38: #{tpu_custom_call.1} parent=11 // pred_check_branch
          %397 = sbr.rel (%p395) target = $region40
        $region39: #{tpu_custom_call.1} parent=11 // pred_region
          %399 = vsyncadd [#allocation12], 0
          %s400 = sshll.u32 %s8, 4
          %s401 = int_to_ptr.hbm [resolvable:$true] %s400
          %s402 = sshll.u32 [#allocation13], 4
          %s403 = int_to_ptr.vmem [resolvable:$true] %s402
          %408 = dma.hbm_to_vmem [thread:$0]  %s401, 1024, %s403, [#allocation12], 64, 64, 4
        $region40: #{tpu_custom_call.1} parent=11 // pred_fallthru
          _
        // Predicated region
        $region41: #{tpu_custom_call.1} parent=11 // pred_check
          %p409 = pneg %p250
        $region42: #{tpu_custom_call.1} parent=11 // pred_check_branch
          %411 = sbr.rel (%p409) target = $region44
        $region43: #{tpu_custom_call.1} parent=11 // pred_region
          _
        $region44: #{tpu_custom_call.1} parent=11 // pred_fallthru
          _
        // Predicated region
        $region45: #{tpu_custom_call.1} parent=11 // pred_check
          %p412 = pneg %p271
        $region46: #{tpu_custom_call.1} parent=11 // pred_check_branch
          %414 = sbr.rel (%p412) target = $region48
        $region47: #{tpu_custom_call.1} parent=11 // pred_region
          %416 = vsyncadd [#allocation15], 0
          %s417 = sshll.u32 %s10, 4
          %s418 = int_to_ptr.hbm [resolvable:$true] %s417
          %s419 = sshll.u32 [#allocation14], 4
          %s420 = int_to_ptr.vmem [resolvable:$true] %s419
          %425 = dma.hbm_to_vmem [thread:$0]  %s418, 1024, %s420, [#allocation15], 64, 64, 4
        $region48: #{tpu_custom_call.1} parent=11 // pred_fallthru
          _
        // Predicated region
        $region49: #{tpu_custom_call.1} parent=11 // pred_check
          %p426 = pneg %p292
        $region50: #{tpu_custom_call.1} parent=11 // pred_check_branch
          %428 = sbr.rel (%p426) target = $region52
        $region51: #{tpu_custom_call.1} parent=11 // pred_region
          _
        $region52: #{tpu_custom_call.1} parent=11 // pred_fallthru
          _
      $region12: #{tpu_custom_call.1} parent=5 // pred_fallthru
        _
      %p429 = scmp.lt.s32.totalorder %s30, 2
      // Predicated region
      $region53: #{tpu_custom_call.1} parent=5 // pred_check
        %p430 = pneg %p429
      $region54: #{tpu_custom_call.1} parent=5 // pred_check_branch
        %432 = sbr.rel (%p430) target = $region56
      $region55: #{tpu_custom_call.1} parent=5 // pred_region
        // Predicated region
        $region57: #{tpu_custom_call.1} parent=55 // pred_check
          %p433 = pneg %p50
        $region58: #{tpu_custom_call.1} parent=55 // pred_check_branch
          %435 = sbr.rel (%p433) target = $region60
        $region59: #{tpu_custom_call.1} parent=55 // pred_region
          %s436 = sand.u32 %s40, 1
          %s437 = scalar_lea.sflag [#allocation3], %s436
          %s438 = sand.u32 %s40, 1
          %s439 = smul.addr %s438, 16
          %s440 = scalar_lea.vmem [#allocation2], %s439
          %s441 = smul.u32 2, %s30
          %443 = vsyncadd %s437, 0
          %s444 = smul.addr %s441, 8
          %s445 = scalar_lea.hbm %s0, %s444
          %s446 = sshll.u32 %s445, 4
          %s447 = int_to_ptr.hbm [resolvable:$true] %s446
          %s448 = sshll.u32 %s440, 4
          %s449 = int_to_ptr.vmem [resolvable:$true] %s448
          %454 = dma.hbm_to_vmem [thread:$0]  %s447, 256, %s449, %s437, 128, 128, 8
        $region60: #{tpu_custom_call.1} parent=55 // pred_fallthru
          _
        // Predicated region
        $region61: #{tpu_custom_call.1} parent=55 // pred_check
          %p455 = pneg %p76
        $region62: #{tpu_custom_call.1} parent=55 // pred_check_branch
          %457 = sbr.rel (%p455) target = $region64
        $region63: #{tpu_custom_call.1} parent=55 // pred_region
          %s458 = sand.u32 %s30, 1
          %s459 = scalar_lea.sflag [#allocation6], %s458
          %s460 = sand.u32 %s66, 1
          %s461 = smul.addr %s460, 256
          %s462 = scalar_lea.vmem [#allocation5], %s461
          %s463 = smul.u32 2, %s30
          %465 = vsyncadd %s459, 0
          %s466 = smul.addr %s463, 16
          %s467 = smul.addr %s466, 8
          %s468 = scalar_lea.hbm %s1, %s467
          %s469 = sshll.u32 %s468, 4
          %s470 = int_to_ptr.hbm [resolvable:$true] %s469
          %s471 = sshll.u32 %s462, 4
          %s472 = int_to_ptr.vmem [resolvable:$true] %s471
          %477 = dma.hbm_to_vmem [thread:$0]  %s470, 4096, %s472, %s459, 128, 128, 8
        $region64: #{tpu_custom_call.1} parent=55 // pred_fallthru
          _
      $region56: #{tpu_custom_call.1} parent=5 // pred_fallthru
        _
      %p478 = scmp.le.s32.totalorder 1, %s30
      %p479 = scmp.lt.s32.totalorder %s30, 3
      %p480 = pnand %p478, %p479
      %p481 = pneg %p480
      // Predicated region
      $region65: #{tpu_custom_call.1} parent=5 // pred_check
        _
      $region66: #{tpu_custom_call.1} parent=5 // pred_check_branch
        %483 = sbr.rel (%p480) target = $region68
      $region67: #{tpu_custom_call.1} parent=5 // pred_region
        %s484 = ssub.s32 %s30, 1
        %s485 = sand.u32 %s43, 1
        %s486 = scalar_lea.sflag [#allocation3], %s485
        %s487 = sand.u32 %s43, 1
        %s488 = smul.addr %s487, 16
        %s489 = scalar_lea.vmem [#allocation2], %s488
        // Predicated region
        $region69: #{tpu_custom_call.1} parent=67 // pred_check
          %p490 = pneg %p56
        $region70: #{tpu_custom_call.1} parent=67 // pred_check_branch
          %492 = sbr.rel (%p490) target = $region72
        $region71: #{tpu_custom_call.1} parent=67 // pred_region
          %494 = dma.done %s486, 256
        $region72: #{tpu_custom_call.1} parent=67 // pred_fallthru
          _
        %s495 = sand.u32 %s35, 1
        %s496 = scalar_lea.sflag [#allocation6], %s495
        %s497 = sand.u32 %s69, 1
        %s498 = smul.addr %s497, 256
        %s499 = scalar_lea.vmem [#allocation5], %s498
        // Predicated region
        $region73: #{tpu_custom_call.1} parent=67 // pred_check
          %p500 = pneg %p82
        $region74: #{tpu_custom_call.1} parent=67 // pred_check_branch
          %502 = sbr.rel (%p500) target = $region76
        $region75: #{tpu_custom_call.1} parent=67 // pred_region
          %504 = dma.done %s496, 4096
        $region76: #{tpu_custom_call.1} parent=67 // pred_fallthru
          _
        // Predicated region
        $region77: #{tpu_custom_call.1} parent=67 // pred_check
          %p505 = pneg %p103
        $region78: #{tpu_custom_call.1} parent=67 // pred_check_branch
          %507 = sbr.rel (%p505) target = $region80
        $region79: #{tpu_custom_call.1} parent=67 // pred_region
          %509 = dma.done [#allocation6], 1024
        $region80: #{tpu_custom_call.1} parent=67 // pred_fallthru
          _
        // Predicated region
        $region81: #{tpu_custom_call.1} parent=67 // pred_check
          %p510 = pneg %p145
        $region82: #{tpu_custom_call.1} parent=67 // pred_check_branch
          %512 = sbr.rel (%p510) target = $region84
        $region83: #{tpu_custom_call.1} parent=67 // pred_region
          %514 = dma.done [#allocation9], 1024
        $region84: #{tpu_custom_call.1} parent=67 // pred_fallthru
          _
        // Predicated region
        $region85: #{tpu_custom_call.1} parent=67 // pred_check
          %p515 = pneg %p187
        $region86: #{tpu_custom_call.1} parent=67 // pred_check_branch
          %517 = sbr.rel (%p515) target = $region88
        $region87: #{tpu_custom_call.1} parent=67 // pred_region
          %519 = dma.done [#allocation9], 1024
        $region88: #{tpu_custom_call.1} parent=67 // pred_fallthru
          _
        // Predicated region
        $region89: #{tpu_custom_call.1} parent=67 // pred_check
          %p520 = pneg %p208
        $region90: #{tpu_custom_call.1} parent=67 // pred_check_branch
          %522 = sbr.rel (%p520) target = $region92
        $region91: #{tpu_custom_call.1} parent=67 // pred_region
          %524 = dma.done [#allocation12], 1024
        $region92: #{tpu_custom_call.1} parent=67 // pred_fallthru
          _
        // Predicated region
        $region93: #{tpu_custom_call.1} parent=67 // pred_check
          %p525 = pneg %p229
        $region94: #{tpu_custom_call.1} parent=67 // pred_check_branch
          %527 = sbr.rel (%p525) target = $region96
        $region95: #{tpu_custom_call.1} parent=67 // pred_region
          %529 = dma.done [#allocation12], 1024
        $region96: #{tpu_custom_call.1} parent=67 // pred_fallthru
          _
        // Predicated region
        $region97: #{tpu_custom_call.1} parent=67 // pred_check
          %p530 = pneg %p271
        $region98: #{tpu_custom_call.1} parent=67 // pred_check_branch
          %532 = sbr.rel (%p530) target = $region100
        $region99: #{tpu_custom_call.1} parent=67 // pred_region
          %534 = dma.done [#allocation15], 1024
        $region100: #{tpu_custom_call.1} parent=67 // pred_fallthru
          _
        %s535 = sand.u32 %s43, 1
        %s536 = scalar_lea.sflag [#allocation3], %s535
        %s537 = sand.u32 %s43, 1
        %s538 = smul.addr %s537, 16
        %s539 = scalar_lea.vmem [#allocation2], %s538
        %p540 = pneg %p56
        %p541 = pneg %p53
        %s542 = sand.u32 %s35, 1
        %s543 = scalar_lea.sflag [#allocation6], %s542
        %s544 = sand.u32 %s69, 1
        %s545 = smul.addr %s544, 256
        %s546 = scalar_lea.vmem [#allocation5], %s545
        %p547 = pneg %p82
        %p548 = pneg %p79
        %p549 = pneg %p103
        %p550 = pneg %p100
        %p551 = pneg %p124
        %p552 = pneg %p121
        %p553 = pneg %p145
        %p554 = pneg %p142
        %p555 = pneg %p166
        %p556 = pneg %p163
        %p557 = pneg %p187
        %p558 = pneg %p184
        %p559 = pneg %p208
        %p560 = pneg %p205
        %p561 = pneg %p229
        %p562 = pneg %p226
        %p563 = pneg %p250
        %p564 = pneg %p247
        %p565 = pneg %p271
        %p566 = pneg %p268
        %p567 = pneg %p292
        %p568 = pneg %p289
        %p569 = pneg %p318
        %p570 = pneg %p315
        %s571 = sand.u32 %s305, 1
        %s572 = scalar_lea.sflag [#allocation4], %s571
        %s573 = sand.u32 %s305, 1
        %s574 = smul.addr %s573, 16
        %s575 = scalar_lea.vmem [#allocation16], %s574
        %s576 = smul.u32 2, %s35
        %s577 = smul.u32 2, %s35
        %s578 = smul.u32 2, %s35
        %v579 = vld [vmem:[%s489] sm:$0xff]
        %v580 = vld [vmem:[%s489 + $0x8] sm:$0xff]
        %v581 = vld [vmem:[%s499] sm:$0xff]
        %v582 = vld [vmem:[%s499 + $0x8] sm:$0xff]
        %v583 = vld [vmem:[%s499 + $0x10] sm:$0xff]
        %v584 = vld [vmem:[%s499 + $0x18] sm:$0xff]
        %v585 = vld [vmem:[%s499 + $0x20] sm:$0xff]
        %v586 = vld [vmem:[%s499 + $0x28] sm:$0xff]
        %v587 = vld [vmem:[%s499 + $0x30] sm:$0xff]
        %v588 = vld [vmem:[%s499 + $0x38] sm:$0xff]
        %v589 = vld [vmem:[%s499 + $0x40] sm:$0xff]
        %v590 = vld [vmem:[%s499 + $0x48] sm:$0xff]
        %v591 = vld [vmem:[%s499 + $0x50] sm:$0xff]
        %v592 = vld [vmem:[%s499 + $0x58] sm:$0xff]
        %v593 = vld [vmem:[%s499 + $0x60] sm:$0xff]
        %v594 = vld [vmem:[%s499 + $0x68] sm:$0xff]
        %v595 = vld [vmem:[%s499 + $0x70] sm:$0xff]
        %v596 = vld [vmem:[%s499 + $0x78] sm:$0xff]
        %v597 = vld [vmem:[%s499 + $0x80] sm:$0xff]
        %v598 = vld [vmem:[%s499 + $0x88] sm:$0xff]
        %v599 = vld [vmem:[%s499 + $0x90] sm:$0xff]
        %v600 = vld [vmem:[%s499 + $0x98] sm:$0xff]
        %v601 = vld [vmem:[%s499 + $0xa0] sm:$0xff]
        %v602 = vld [vmem:[%s499 + $0xa8] sm:$0xff]
        %v603 = vld [vmem:[%s499 + $0xb0] sm:$0xff]
        %v604 = vld [vmem:[%s499 + $0xb8] sm:$0xff]
        %v605 = vld [vmem:[%s499 + $0xc0] sm:$0xff]
        %v606 = vld [vmem:[%s499 + $0xc8] sm:$0xff]
        %v607 = vld [vmem:[%s499 + $0xd0] sm:$0xff]
        %v608 = vld [vmem:[%s499 + $0xd8] sm:$0xff]
        %v609 = vld [vmem:[%s499 + $0xe0] sm:$0xff]
        %v610 = vld [vmem:[%s499 + $0xe8] sm:$0xff]
        %v611 = vld [vmem:[%s499 + $0xf0] sm:$0xff]
        %v612 = vld [vmem:[%s499 + $0xf8] sm:$0xff]
        %v613 = vlaneseq
        %v614 = vshrl.u32 %v613, 7
        %v615 = vadd.s32 %v614, 8
        %v616 = vadd.s32 %v614, 16
        %v617 = vadd.s32 %v614, 24
        %v618 = vadd.s32 %v614, 32
        %v619 = vadd.s32 %v614, 40
        %v620 = vadd.s32 %v614, 48
        %v621 = vadd.s32 %v614, 56
        %v622 = vadd.s32 %v614, 64
        %v623 = vadd.s32 %v614, 72
        %v624 = vadd.s32 %v614, 80
        %v625 = vadd.s32 %v614, 88
        %v626 = vadd.s32 %v614, 96
        %v627 = vadd.s32 %v614, 104
        %v628 = vadd.s32 %v614, 112
        %v629 = vadd.s32 %v614, 120
        %v630 = vrot.slane %v581, 7
        %v631 = vrot.slane %v582, 7
        %v632 = vrot.slane %v583, 7
        %v633 = vrot.slane %v584, 7
        %v634 = vrot.slane %v585, 7
        %v635 = vrot.slane %v586, 7
        %v636 = vrot.slane %v587, 7
        %v637 = vrot.slane %v588, 7
        %v638 = vrot.slane %v589, 7
        %v639 = vrot.slane %v590, 7
        %v640 = vrot.slane %v591, 7
        %v641 = vrot.slane %v592, 7
        %v642 = vrot.slane %v593, 7
        %v643 = vrot.slane %v594, 7
        %v644 = vrot.slane %v595, 7
        %v645 = vrot.slane %v596, 7
        %v646 = vrot.slane %v597, 7
        %v647 = vrot.slane %v598, 7
        %v648 = vrot.slane %v599, 7
        %v649 = vrot.slane %v600, 7
        %v650 = vrot.slane %v601, 7
        %v651 = vrot.slane %v602, 7
        %v652 = vrot.slane %v603, 7
        %v653 = vrot.slane %v604, 7
        %v654 = vrot.slane %v605, 7
        %v655 = vrot.slane %v606, 7
        %v656 = vrot.slane %v607, 7
        %v657 = vrot.slane %v608, 7
        %v658 = vrot.slane %v609, 7
        %v659 = vrot.slane %v610, 7
        %v660 = vrot.slane %v611, 7
        %v661 = vrot.slane %v612, 7
        %vm662 = vcmp.lt.s32.totalorder %v614, 1
        %v663 = vsel %vm662, %v660, %v661
        %v664 = vsel %vm662, %v659, %v660
        %v665 = vsel %vm662, %v658, %v659
        %v666 = vsel %vm662, %v657, %v658
        %v667 = vsel %vm662, %v656, %v657
        %v668 = vsel %vm662, %v655, %v656
        %v669 = vsel %vm662, %v654, %v655
        %v670 = vsel %vm662, %v653, %v654
        %v671 = vsel %vm662, %v652, %v653
        %v672 = vsel %vm662, %v651, %v652
        %v673 = vsel %vm662, %v650, %v651
        %v674 = vsel %vm662, %v649, %v650
        %v675 = vsel %vm662, %v648, %v649
        %v676 = vsel %vm662, %v647, %v648
        %v677 = vsel %vm662, %v646, %v647
        %v678 = vsel %vm662, %v645, %v646
        %v679 = vsel %vm662, %v644, %v645
        %v680 = vsel %vm662, %v643, %v644
        %v681 = vsel %vm662, %v642, %v643
        %v682 = vsel %vm662, %v641, %v642
        %v683 = vsel %vm662, %v640, %v641
        %v684 = vsel %vm662, %v639, %v640
        %v685 = vsel %vm662, %v638, %v639
        %v686 = vsel %vm662, %v637, %v638
        %v687 = vsel %vm662, %v636, %v637
        %v688 = vsel %vm662, %v635, %v636
        %v689 = vsel %vm662, %v634, %v635
        %v690 = vsel %vm662, %v633, %v634
        %v691 = vsel %vm662, %v632, %v633
        %v692 = vsel %vm662, %v631, %v632
        %v693 = vsel %vm662, %v630, %v631
        %v694 = vsel %vm662, %v661, %v630
        %vm695 = vcmp.lt.s32.totalorder %v615, 1
        %vm696 = vcmp.lt.s32.totalorder %v616, 1
        %vm697 = vcmp.lt.s32.totalorder %v617, 1
        %vm698 = vcmp.lt.s32.totalorder %v618, 1
        %vm699 = vcmp.lt.s32.totalorder %v619, 1
        %vm700 = vcmp.lt.s32.totalorder %v620, 1
        %vm701 = vcmp.lt.s32.totalorder %v621, 1
        %vm702 = vcmp.lt.s32.totalorder %v622, 1
        %vm703 = vcmp.lt.s32.totalorder %v623, 1
        %vm704 = vcmp.lt.s32.totalorder %v624, 1
        %vm705 = vcmp.lt.s32.totalorder %v625, 1
        %vm706 = vcmp.lt.s32.totalorder %v626, 1
        %vm707 = vcmp.lt.s32.totalorder %v627, 1
        %vm708 = vcmp.lt.s32.totalorder %v628, 1
        %vm709 = vcmp.lt.s32.totalorder %v629, 1
        %v710 = vsel %vm662, -inf, %v694
        %v711 = vsel %vm695, -inf, %v693
        %v712 = vsel %vm696, -inf, %v692
        %v713 = vsel %vm697, -inf, %v691
        %v714 = vsel %vm698, -inf, %v690
        %v715 = vsel %vm699, -inf, %v689
        %v716 = vsel %vm700, -inf, %v688
        %v717 = vsel %vm701, -inf, %v687
        %v718 = vsel %vm702, -inf, %v686
        %v719 = vsel %vm703, -inf, %v685
        %v720 = vsel %vm704, -inf, %v684
        %v721 = vsel %vm705, -inf, %v683
        %v722 = vsel %vm706, -inf, %v682
        %v723 = vsel %vm707, -inf, %v681
        %v724 = vsel %vm708, -inf, %v680
        %v725 = vsel %vm709, -inf, %v679
        %v726 = vsel %vm662, -inf, %v678
        %v727 = vsel %vm695, -inf, %v677
        %v728 = vsel %vm696, -inf, %v676
        %v729 = vsel %vm697, -inf, %v675
        %v730 = vsel %vm698, -inf, %v674
        %v731 = vsel %vm699, -inf, %v673
        %v732 = vsel %vm700, -inf, %v672
        %v733 = vsel %vm701, -inf, %v671
        %v734 = vsel %vm702, -inf, %v670
        %v735 = vsel %vm703, -inf, %v669
        %v736 = vsel %vm704, -inf, %v668
        %v737 = vsel %vm705, -inf, %v667
        %v738 = vsel %vm706, -inf, %v666
        %v739 = vsel %vm707, -inf, %v665
        %v740 = vsel %vm708, -inf, %v664
        %v741 = vsel %vm709, -inf, %v663
        %v742 = vmax.f32 %v581, %v710
        %v743 = vmax.f32 %v582, %v711
        %v744 = vmax.f32 %v583, %v712
        %v745 = vmax.f32 %v584, %v713
        %v746 = vmax.f32 %v585, %v714
        %v747 = vmax.f32 %v586, %v715
        %v748 = vmax.f32 %v587, %v716
        %v749 = vmax.f32 %v588, %v717
        %v750 = vmax.f32 %v589, %v718
        %v751 = vmax.f32 %v590, %v719
        %v752 = vmax.f32 %v591, %v720
        %v753 = vmax.f32 %v592, %v721
        %v754 = vmax.f32 %v593, %v722
        %v755 = vmax.f32 %v594, %v723
        %v756 = vmax.f32 %v595, %v724
        %v757 = vmax.f32 %v596, %v725
        %v758 = vmax.f32 %v597, %v726
        %v759 = vmax.f32 %v598, %v727
        %v760 = vmax.f32 %v599, %v728
        %v761 = vmax.f32 %v600, %v729
        %v762 = vmax.f32 %v601, %v730
        %v763 = vmax.f32 %v602, %v731
        %v764 = vmax.f32 %v603, %v732
        %v765 = vmax.f32 %v604, %v733
        %v766 = vmax.f32 %v605, %v734
        %v767 = vmax.f32 %v606, %v735
        %v768 = vmax.f32 %v607, %v736
        %v769 = vmax.f32 %v608, %v737
        %v770 = vmax.f32 %v609, %v738
        %v771 = vmax.f32 %v610, %v739
        %v772 = vmax.f32 %v611, %v740
        %v773 = vmax.f32 %v612, %v741
        %v774 = vrot.slane %v581, 1
        %v775 = vrot.slane %v582, 1
        %v776 = vrot.slane %v583, 1
        %v777 = vrot.slane %v584, 1
        %v778 = vrot.slane %v585, 1
        %v779 = vrot.slane %v586, 1
        %v780 = vrot.slane %v587, 1
        %v781 = vrot.slane %v588, 1
        %v782 = vrot.slane %v589, 1
        %v783 = vrot.slane %v590, 1
        %v784 = vrot.slane %v591, 1
        %v785 = vrot.slane %v592, 1
        %v786 = vrot.slane %v593, 1
        %v787 = vrot.slane %v594, 1
        %v788 = vrot.slane %v595, 1
        %v789 = vrot.slane %v596, 1
        %v790 = vrot.slane %v597, 1
        %v791 = vrot.slane %v598, 1
        %v792 = vrot.slane %v599, 1
        %v793 = vrot.slane %v600, 1
        %v794 = vrot.slane %v601, 1
        %v795 = vrot.slane %v602, 1
        %v796 = vrot.slane %v603, 1
        %v797 = vrot.slane %v604, 1
        %v798 = vrot.slane %v605, 1
        %v799 = vrot.slane %v606, 1
        %v800 = vrot.slane %v607, 1
        %v801 = vrot.slane %v608, 1
        %v802 = vrot.slane %v609, 1
        %v803 = vrot.slane %v610, 1
        %v804 = vrot.slane %v611, 1
        %v805 = vrot.slane %v612, 1
        %vm806 = vcmp.lt.s32.totalorder %v614, 7
        %v807 = vsel %vm806, %v804, %v805
        %v808 = vsel %vm806, %v803, %v804
        %v809 = vsel %vm806, %v802, %v803
        %v810 = vsel %vm806, %v801, %v802
        %v811 = vsel %vm806, %v800, %v801
        %v812 = vsel %vm806, %v799, %v800
        %v813 = vsel %vm806, %v798, %v799
        %v814 = vsel %vm806, %v797, %v798
        %v815 = vsel %vm806, %v796, %v797
        %v816 = vsel %vm806, %v795, %v796
        %v817 = vsel %vm806, %v794, %v795
        %v818 = vsel %vm806, %v793, %v794
        %v819 = vsel %vm806, %v792, %v793
        %v820 = vsel %vm806, %v791, %v792
        %v821 = vsel %vm806, %v790, %v791
        %v822 = vsel %vm806, %v789, %v790
        %v823 = vsel %vm806, %v788, %v789
        %v824 = vsel %vm806, %v787, %v788
        %v825 = vsel %vm806, %v786, %v787
        %v826 = vsel %vm806, %v785, %v786
        %v827 = vsel %vm806, %v784, %v785
        %v828 = vsel %vm806, %v783, %v784
        %v829 = vsel %vm806, %v782, %v783
        %v830 = vsel %vm806, %v781, %v782
        %v831 = vsel %vm806, %v780, %v781
        %v832 = vsel %vm806, %v779, %v780
        %v833 = vsel %vm806, %v778, %v779
        %v834 = vsel %vm806, %v777, %v778
        %v835 = vsel %vm806, %v776, %v777
        %v836 = vsel %vm806, %v775, %v776
        %v837 = vsel %vm806, %v774, %v775
        %v838 = vsel %vm806, %v805, %v774
        %vm839 = vcmp.ge.s32.totalorder %v614, 127
        %vm840 = vcmp.ge.s32.totalorder %v615, 127
        %vm841 = vcmp.ge.s32.totalorder %v616, 127
        %vm842 = vcmp.ge.s32.totalorder %v617, 127
        %vm843 = vcmp.ge.s32.totalorder %v618, 127
        %vm844 = vcmp.ge.s32.totalorder %v619, 127
        %vm845 = vcmp.ge.s32.totalorder %v620, 127
        %vm846 = vcmp.ge.s32.totalorder %v621, 127
        %vm847 = vcmp.ge.s32.totalorder %v622, 127
        %vm848 = vcmp.ge.s32.totalorder %v623, 127
        %vm849 = vcmp.ge.s32.totalorder %v624, 127
        %vm850 = vcmp.ge.s32.totalorder %v625, 127
        %vm851 = vcmp.ge.s32.totalorder %v626, 127
        %vm852 = vcmp.ge.s32.totalorder %v627, 127
        %vm853 = vcmp.ge.s32.totalorder %v628, 127
        %vm854 = vcmp.ge.s32.totalorder %v629, 127
        %v855 = vsel %vm839, -inf, %v837
        %v856 = vsel %vm840, -inf, %v836
        %v857 = vsel %vm841, -inf, %v835
        %v858 = vsel %vm842, -inf, %v834
        %v859 = vsel %vm843, -inf, %v833
        %v860 = vsel %vm844, -inf, %v832
        %v861 = vsel %vm845, -inf, %v831
        %v862 = vsel %vm846, -inf, %v830
        %v863 = vsel %vm847, -inf, %v829
        %v864 = vsel %vm848, -inf, %v828
        %v865 = vsel %vm849, -inf, %v827
        %v866 = vsel %vm850, -inf, %v826
        %v867 = vsel %vm851, -inf, %v825
        %v868 = vsel %vm852, -inf, %v824
        %v869 = vsel %vm853, -inf, %v823
        %v870 = vsel %vm854, -inf, %v822
        %v871 = vsel %vm839, -inf, %v821
        %v872 = vsel %vm840, -inf, %v820
        %v873 = vsel %vm841, -inf, %v819
        %v874 = vsel %vm842, -inf, %v818
        %v875 = vsel %vm843, -inf, %v817
        %v876 = vsel %vm844, -inf, %v816
        %v877 = vsel %vm845, -inf, %v815
        %v878 = vsel %vm846, -inf, %v814
        %v879 = vsel %vm847, -inf, %v813
        %v880 = vsel %vm848, -inf, %v812
        %v881 = vsel %vm849, -inf, %v811
        %v882 = vsel %vm850, -inf, %v810
        %v883 = vsel %vm851, -inf, %v809
        %v884 = vsel %vm852, -inf, %v808
        %v885 = vsel %vm853, -inf, %v807
        %v886 = vsel %vm854, -inf, %v838
        %v887 = vmax.f32 %v581, %v855
        %v888 = vmax.f32 %v582, %v856
        %v889 = vmax.f32 %v583, %v857
        %v890 = vmax.f32 %v584, %v858
        %v891 = vmax.f32 %v585, %v859
        %v892 = vmax.f32 %v586, %v860
        %v893 = vmax.f32 %v587, %v861
        %v894 = vmax.f32 %v588, %v862
        %v895 = vmax.f32 %v589, %v863
        %v896 = vmax.f32 %v590, %v864
        %v897 = vmax.f32 %v591, %v865
        %v898 = vmax.f32 %v592, %v866
        %v899 = vmax.f32 %v593, %v867
        %v900 = vmax.f32 %v594, %v868
        %v901 = vmax.f32 %v595, %v869
        %v902 = vmax.f32 %v596, %v870
        %v903 = vmax.f32 %v597, %v871
        %v904 = vmax.f32 %v598, %v872
        %v905 = vmax.f32 %v599, %v873
        %v906 = vmax.f32 %v600, %v874
        %v907 = vmax.f32 %v601, %v875
        %v908 = vmax.f32 %v602, %v876
        %v909 = vmax.f32 %v603, %v877
        %v910 = vmax.f32 %v604, %v878
        %v911 = vmax.f32 %v605, %v879
        %v912 = vmax.f32 %v606, %v880
        %v913 = vmax.f32 %v607, %v881
        %v914 = vmax.f32 %v608, %v882
        %v915 = vmax.f32 %v609, %v883
        %v916 = vmax.f32 %v610, %v884
        %v917 = vmax.f32 %v611, %v885
        %v918 = vmax.f32 %v612, %v886
        %v919 = vrot.slane %v742, 6
        %v920 = vrot.slane %v743, 6
        %v921 = vrot.slane %v744, 6
        %v922 = vrot.slane %v745, 6
        %v923 = vrot.slane %v746, 6
        %v924 = vrot.slane %v747, 6
        %v925 = vrot.slane %v748, 6
        %v926 = vrot.slane %v749, 6
        %v927 = vrot.slane %v750, 6
        %v928 = vrot.slane %v751, 6
        %v929 = vrot.slane %v752, 6
        %v930 = vrot.slane %v753, 6
        %v931 = vrot.slane %v754, 6
        %v932 = vrot.slane %v755, 6
        %v933 = vrot.slane %v756, 6
        %v934 = vrot.slane %v757, 6
        %v935 = vrot.slane %v758, 6
        %v936 = vrot.slane %v759, 6
        %v937 = vrot.slane %v760, 6
        %v938 = vrot.slane %v761, 6
        %v939 = vrot.slane %v762, 6
        %v940 = vrot.slane %v763, 6
        %v941 = vrot.slane %v764, 6
        %v942 = vrot.slane %v765, 6
        %v943 = vrot.slane %v766, 6
        %v944 = vrot.slane %v767, 6
        %v945 = vrot.slane %v768, 6
        %v946 = vrot.slane %v769, 6
        %v947 = vrot.slane %v770, 6
        %v948 = vrot.slane %v771, 6
        %v949 = vrot.slane %v772, 6
        %v950 = vrot.slane %v773, 6
        %vm951 = vcmp.lt.s32.totalorder %v614, 2
        %v952 = vsel %vm951, %v949, %v950
        %v953 = vsel %vm951, %v948, %v949
        %v954 = vsel %vm951, %v947, %v948
        %v955 = vsel %vm951, %v946, %v947
        %v956 = vsel %vm951, %v945, %v946
        %v957 = vsel %vm951, %v944, %v945
        %v958 = vsel %vm951, %v943, %v944
        %v959 = vsel %vm951, %v942, %v943
        %v960 = vsel %vm951, %v941, %v942
        %v961 = vsel %vm951, %v940, %v941
        %v962 = vsel %vm951, %v939, %v940
        %v963 = vsel %vm951, %v938, %v939
        %v964 = vsel %vm951, %v937, %v938
        %v965 = vsel %vm951, %v936, %v937
        %v966 = vsel %vm951, %v935, %v936
        %v967 = vsel %vm951, %v934, %v935
        %v968 = vsel %vm951, %v933, %v934
        %v969 = vsel %vm951, %v932, %v933
        %v970 = vsel %vm951, %v931, %v932
        %v971 = vsel %vm951, %v930, %v931
        %v972 = vsel %vm951, %v929, %v930
        %v973 = vsel %vm951, %v928, %v929
        %v974 = vsel %vm951, %v927, %v928
        %v975 = vsel %vm951, %v926, %v927
        %v976 = vsel %vm951, %v925, %v926
        %v977 = vsel %vm951, %v924, %v925
        %v978 = vsel %vm951, %v923, %v924
        %v979 = vsel %vm951, %v922, %v923
        %v980 = vsel %vm951, %v921, %v922
        %v981 = vsel %vm951, %v920, %v921
        %v982 = vsel %vm951, %v919, %v920
        %v983 = vsel %vm951, %v950, %v919
        %vm984 = vcmp.lt.s32.totalorder %v615, 2
        %vm985 = vcmp.lt.s32.totalorder %v616, 2
        %vm986 = vcmp.lt.s32.totalorder %v617, 2
        %vm987 = vcmp.lt.s32.totalorder %v618, 2
        %vm988 = vcmp.lt.s32.totalorder %v619, 2
        %vm989 = vcmp.lt.s32.totalorder %v620, 2
        %vm990 = vcmp.lt.s32.totalorder %v621, 2
        %vm991 = vcmp.lt.s32.totalorder %v622, 2
        %vm992 = vcmp.lt.s32.totalorder %v623, 2
        %vm993 = vcmp.lt.s32.totalorder %v624, 2
        %vm994 = vcmp.lt.s32.totalorder %v625, 2
        %vm995 = vcmp.lt.s32.totalorder %v626, 2
        %vm996 = vcmp.lt.s32.totalorder %v627, 2
        %vm997 = vcmp.lt.s32.totalorder %v628, 2
        %vm998 = vcmp.lt.s32.totalorder %v629, 2
        %v999 = vsel %vm951, -inf, %v983
        %v1000 = vsel %vm984, -inf, %v982
        %v1001 = vsel %vm985, -inf, %v981
        %v1002 = vsel %vm986, -inf, %v980
        %v1003 = vsel %vm987, -inf, %v979
        %v1004 = vsel %vm988, -inf, %v978
        %v1005 = vsel %vm989, -inf, %v977
        %v1006 = vsel %vm990, -inf, %v976
        %v1007 = vsel %vm991, -inf, %v975
        %v1008 = vsel %vm992, -inf, %v974
        %v1009 = vsel %vm993, -inf, %v973
        %v1010 = vsel %vm994, -inf, %v972
        %v1011 = vsel %vm995, -inf, %v971
        %v1012 = vsel %vm996, -inf, %v970
        %v1013 = vsel %vm997, -inf, %v969
        %v1014 = vsel %vm998, -inf, %v968
        %v1015 = vsel %vm951, -inf, %v967
        %v1016 = vsel %vm984, -inf, %v966
        %v1017 = vsel %vm985, -inf, %v965
        %v1018 = vsel %vm986, -inf, %v964
        %v1019 = vsel %vm987, -inf, %v963
        %v1020 = vsel %vm988, -inf, %v962
        %v1021 = vsel %vm989, -inf, %v961
        %v1022 = vsel %vm990, -inf, %v960
        %v1023 = vsel %vm991, -inf, %v959
        %v1024 = vsel %vm992, -inf, %v958
        %v1025 = vsel %vm993, -inf, %v957
        %v1026 = vsel %vm994, -inf, %v956
        %v1027 = vsel %vm995, -inf, %v955
        %v1028 = vsel %vm996, -inf, %v954
        %v1029 = vsel %vm997, -inf, %v953
        %v1030 = vsel %vm998, -inf, %v952
        %v1031 = vmax.f32 %v742, %v999
        %v1032 = vmax.f32 %v743, %v1000
        %v1033 = vmax.f32 %v744, %v1001
        %v1034 = vmax.f32 %v745, %v1002
        %v1035 = vmax.f32 %v746, %v1003
        %v1036 = vmax.f32 %v747, %v1004
        %v1037 = vmax.f32 %v748, %v1005
        %v1038 = vmax.f32 %v749, %v1006
        %v1039 = vmax.f32 %v750, %v1007
        %v1040 = vmax.f32 %v751, %v1008
        %v1041 = vmax.f32 %v752, %v1009
        %v1042 = vmax.f32 %v753, %v1010
        %v1043 = vmax.f32 %v754, %v1011
        %v1044 = vmax.f32 %v755, %v1012
        %v1045 = vmax.f32 %v756, %v1013
        %v1046 = vmax.f32 %v757, %v1014
        %v1047 = vmax.f32 %v758, %v1015
        %v1048 = vmax.f32 %v759, %v1016
        %v1049 = vmax.f32 %v760, %v1017
        %v1050 = vmax.f32 %v761, %v1018
        %v1051 = vmax.f32 %v762, %v1019
        %v1052 = vmax.f32 %v763, %v1020
        %v1053 = vmax.f32 %v764, %v1021
        %v1054 = vmax.f32 %v765, %v1022
        %v1055 = vmax.f32 %v766, %v1023
        %v1056 = vmax.f32 %v767, %v1024
        %v1057 = vmax.f32 %v768, %v1025
        %v1058 = vmax.f32 %v769, %v1026
        %v1059 = vmax.f32 %v770, %v1027
        %v1060 = vmax.f32 %v771, %v1028
        %v1061 = vmax.f32 %v772, %v1029
        %v1062 = vmax.f32 %v773, %v1030
        %v1063 = vrot.slane %v887, 2
        %v1064 = vrot.slane %v888, 2
        %v1065 = vrot.slane %v889, 2
        %v1066 = vrot.slane %v890, 2
        %v1067 = vrot.slane %v891, 2
        %v1068 = vrot.slane %v892, 2
        %v1069 = vrot.slane %v893, 2
        %v1070 = vrot.slane %v894, 2
        %v1071 = vrot.slane %v895, 2
        %v1072 = vrot.slane %v896, 2
        %v1073 = vrot.slane %v897, 2
        %v1074 = vrot.slane %v898, 2
        %v1075 = vrot.slane %v899, 2
        %v1076 = vrot.slane %v900, 2
        %v1077 = vrot.slane %v901, 2
        %v1078 = vrot.slane %v902, 2
        %v1079 = vrot.slane %v903, 2
        %v1080 = vrot.slane %v904, 2
        %v1081 = vrot.slane %v905, 2
        %v1082 = vrot.slane %v906, 2
        %v1083 = vrot.slane %v907, 2
        %v1084 = vrot.slane %v908, 2
        %v1085 = vrot.slane %v909, 2
        %v1086 = vrot.slane %v910, 2
        %v1087 = vrot.slane %v911, 2
        %v1088 = vrot.slane %v912, 2
        %v1089 = vrot.slane %v913, 2
        %v1090 = vrot.slane %v914, 2
        %v1091 = vrot.slane %v915, 2
        %v1092 = vrot.slane %v916, 2
        %v1093 = vrot.slane %v917, 2
        %v1094 = vrot.slane %v918, 2
        %vm1095 = vcmp.lt.s32.totalorder %v614, 6
        %v1096 = vsel %vm1095, %v1093, %v1094
        %v1097 = vsel %vm1095, %v1092, %v1093
        %v1098 = vsel %vm1095, %v1091, %v1092
        %v1099 = vsel %vm1095, %v1090, %v1091
        %v1100 = vsel %vm1095, %v1089, %v1090
        %v1101 = vsel %vm1095, %v1088, %v1089
        %v1102 = vsel %vm1095, %v1087, %v1088
        %v1103 = vsel %vm1095, %v1086, %v1087
        %v1104 = vsel %vm1095, %v1085, %v1086
        %v1105 = vsel %vm1095, %v1084, %v1085
        %v1106 = vsel %vm1095, %v1083, %v1084
        %v1107 = vsel %vm1095, %v1082, %v1083
        %v1108 = vsel %vm1095, %v1081, %v1082
        %v1109 = vsel %vm1095, %v1080, %v1081
        %v1110 = vsel %vm1095, %v1079, %v1080
        %v1111 = vsel %vm1095, %v1078, %v1079
        %v1112 = vsel %vm1095, %v1077, %v1078
        %v1113 = vsel %vm1095, %v1076, %v1077
        %v1114 = vsel %vm1095, %v1075, %v1076
        %v1115 = vsel %vm1095, %v1074, %v1075
        %v1116 = vsel %vm1095, %v1073, %v1074
        %v1117 = vsel %vm1095, %v1072, %v1073
        %v1118 = vsel %vm1095, %v1071, %v1072
        %v1119 = vsel %vm1095, %v1070, %v1071
        %v1120 = vsel %vm1095, %v1069, %v1070
        %v1121 = vsel %vm1095, %v1068, %v1069
        %v1122 = vsel %vm1095, %v1067, %v1068
        %v1123 = vsel %vm1095, %v1066, %v1067
        %v1124 = vsel %vm1095, %v1065, %v1066
        %v1125 = vsel %vm1095, %v1064, %v1065
        %v1126 = vsel %vm1095, %v1063, %v1064
        %v1127 = vsel %vm1095, %v1094, %v1063
        %vm1128 = vcmp.ge.s32.totalorder %v614, 126
        %vm1129 = vcmp.ge.s32.totalorder %v615, 126
        %vm1130 = vcmp.ge.s32.totalorder %v616, 126
        %vm1131 = vcmp.ge.s32.totalorder %v617, 126
        %vm1132 = vcmp.ge.s32.totalorder %v618, 126
        %vm1133 = vcmp.ge.s32.totalorder %v619, 126
        %vm1134 = vcmp.ge.s32.totalorder %v620, 126
        %vm1135 = vcmp.ge.s32.totalorder %v621, 126
        %vm1136 = vcmp.ge.s32.totalorder %v622, 126
        %vm1137 = vcmp.ge.s32.totalorder %v623, 126
        %vm1138 = vcmp.ge.s32.totalorder %v624, 126
        %vm1139 = vcmp.ge.s32.totalorder %v625, 126
        %vm1140 = vcmp.ge.s32.totalorder %v626, 126
        %vm1141 = vcmp.ge.s32.totalorder %v627, 126
        %vm1142 = vcmp.ge.s32.totalorder %v628, 126
        %vm1143 = vcmp.ge.s32.totalorder %v629, 126
        %v1144 = vsel %vm1128, -inf, %v1126
        %v1145 = vsel %vm1129, -inf, %v1125
        %v1146 = vsel %vm1130, -inf, %v1124
        %v1147 = vsel %vm1131, -inf, %v1123
        %v1148 = vsel %vm1132, -inf, %v1122
        %v1149 = vsel %vm1133, -inf, %v1121
        %v1150 = vsel %vm1134, -inf, %v1120
        %v1151 = vsel %vm1135, -inf, %v1119
        %v1152 = vsel %vm1136, -inf, %v1118
        %v1153 = vsel %vm1137, -inf, %v1117
        %v1154 = vsel %vm1138, -inf, %v1116
        %v1155 = vsel %vm1139, -inf, %v1115
        %v1156 = vsel %vm1140, -inf, %v1114
        %v1157 = vsel %vm1141, -inf, %v1113
        %v1158 = vsel %vm1142, -inf, %v1112
        %v1159 = vsel %vm1143, -inf, %v1111
        %v1160 = vsel %vm1128, -inf, %v1110
        %v1161 = vsel %vm1129, -inf, %v1109
        %v1162 = vsel %vm1130, -inf, %v1108
        %v1163 = vsel %vm1131, -inf, %v1107
        %v1164 = vsel %vm1132, -inf, %v1106
        %v1165 = vsel %vm1133, -inf, %v1105
        %v1166 = vsel %vm1134, -inf, %v1104
        %v1167 = vsel %vm1135, -inf, %v1103
        %v1168 = vsel %vm1136, -inf, %v1102
        %v1169 = vsel %vm1137, -inf, %v1101
        %v1170 = vsel %vm1138, -inf, %v1100
        %v1171 = vsel %vm1139, -inf, %v1099
        %v1172 = vsel %vm1140, -inf, %v1098
        %v1173 = vsel %vm1141, -inf, %v1097
        %v1174 = vsel %vm1142, -inf, %v1096
        %v1175 = vsel %vm1143, -inf, %v1127
        %v1176 = vmax.f32 %v887, %v1144
        %v1177 = vmax.f32 %v888, %v1145
        %v1178 = vmax.f32 %v889, %v1146
        %v1179 = vmax.f32 %v890, %v1147
        %v1180 = vmax.f32 %v891, %v1148
        %v1181 = vmax.f32 %v892, %v1149
        %v1182 = vmax.f32 %v893, %v1150
        %v1183 = vmax.f32 %v894, %v1151
        %v1184 = vmax.f32 %v895, %v1152
        %v1185 = vmax.f32 %v896, %v1153
        %v1186 = vmax.f32 %v897, %v1154
        %v1187 = vmax.f32 %v898, %v1155
        %v1188 = vmax.f32 %v899, %v1156
        %v1189 = vmax.f32 %v900, %v1157
        %v1190 = vmax.f32 %v901, %v1158
        %v1191 = vmax.f32 %v902, %v1159
        %v1192 = vmax.f32 %v903, %v1160
        %v1193 = vmax.f32 %v904, %v1161
        %v1194 = vmax.f32 %v905, %v1162
        %v1195 = vmax.f32 %v906, %v1163
        %v1196 = vmax.f32 %v907, %v1164
        %v1197 = vmax.f32 %v908, %v1165
        %v1198 = vmax.f32 %v909, %v1166
        %v1199 = vmax.f32 %v910, %v1167
        %v1200 = vmax.f32 %v911, %v1168
        %v1201 = vmax.f32 %v912, %v1169
        %v1202 = vmax.f32 %v913, %v1170
        %v1203 = vmax.f32 %v914, %v1171
        %v1204 = vmax.f32 %v915, %v1172
        %v1205 = vmax.f32 %v916, %v1173
        %v1206 = vmax.f32 %v917, %v1174
        %v1207 = vmax.f32 %v918, %v1175
        %v1208 = vrot.slane %v1031, 4
        %v1209 = vrot.slane %v1032, 4
        %v1210 = vrot.slane %v1033, 4
        %v1211 = vrot.slane %v1034, 4
        %v1212 = vrot.slane %v1035, 4
        %v1213 = vrot.slane %v1036, 4
        %v1214 = vrot.slane %v1037, 4
        %v1215 = vrot.slane %v1038, 4
        %v1216 = vrot.slane %v1039, 4
        %v1217 = vrot.slane %v1040, 4
        %v1218 = vrot.slane %v1041, 4
        %v1219 = vrot.slane %v1042, 4
        %v1220 = vrot.slane %v1043, 4
        %v1221 = vrot.slane %v1044, 4
        %v1222 = vrot.slane %v1045, 4
        %v1223 = vrot.slane %v1046, 4
        %v1224 = vrot.slane %v1047, 4
        %v1225 = vrot.slane %v1048, 4
        %v1226 = vrot.slane %v1049, 4
        %v1227 = vrot.slane %v1050, 4
        %v1228 = vrot.slane %v1051, 4
        %v1229 = vrot.slane %v1052, 4
        %v1230 = vrot.slane %v1053, 4
        %v1231 = vrot.slane %v1054, 4
        %v1232 = vrot.slane %v1055, 4
        %v1233 = vrot.slane %v1056, 4
        %v1234 = vrot.slane %v1057, 4
        %v1235 = vrot.slane %v1058, 4
        %v1236 = vrot.slane %v1059, 4
        %v1237 = vrot.slane %v1060, 4
        %v1238 = vrot.slane %v1061, 4
        %v1239 = vrot.slane %v1062, 4
        %vm1240 = vcmp.lt.s32.totalorder %v614, 4
        %v1241 = vsel %vm1240, %v1238, %v1239
        %v1242 = vsel %vm1240, %v1237, %v1238
        %v1243 = vsel %vm1240, %v1236, %v1237
        %v1244 = vsel %vm1240, %v1235, %v1236
        %v1245 = vsel %vm1240, %v1234, %v1235
        %v1246 = vsel %vm1240, %v1233, %v1234
        %v1247 = vsel %vm1240, %v1232, %v1233
        %v1248 = vsel %vm1240, %v1231, %v1232
        %v1249 = vsel %vm1240, %v1230, %v1231
        %v1250 = vsel %vm1240, %v1229, %v1230
        %v1251 = vsel %vm1240, %v1228, %v1229
        %v1252 = vsel %vm1240, %v1227, %v1228
        %v1253 = vsel %vm1240, %v1226, %v1227
        %v1254 = vsel %vm1240, %v1225, %v1226
        %v1255 = vsel %vm1240, %v1224, %v1225
        %v1256 = vsel %vm1240, %v1223, %v1224
        %v1257 = vsel %vm1240, %v1222, %v1223
        %v1258 = vsel %vm1240, %v1221, %v1222
        %v1259 = vsel %vm1240, %v1220, %v1221
        %v1260 = vsel %vm1240, %v1219, %v1220
        %v1261 = vsel %vm1240, %v1218, %v1219
        %v1262 = vsel %vm1240, %v1217, %v1218
        %v1263 = vsel %vm1240, %v1216, %v1217
        %v1264 = vsel %vm1240, %v1215, %v1216
        %v1265 = vsel %vm1240, %v1214, %v1215
        %v1266 = vsel %vm1240, %v1213, %v1214
        %v1267 = vsel %vm1240, %v1212, %v1213
        %v1268 = vsel %vm1240, %v1211, %v1212
        %v1269 = vsel %vm1240, %v1210, %v1211
        %v1270 = vsel %vm1240, %v1209, %v1210
        %v1271 = vsel %vm1240, %v1208, %v1209
        %v1272 = vsel %vm1240, %v1239, %v1208
        %vm1273 = vcmp.lt.s32.totalorder %v615, 4
        %vm1274 = vcmp.lt.s32.totalorder %v616, 4
        %vm1275 = vcmp.lt.s32.totalorder %v617, 4
        %vm1276 = vcmp.lt.s32.totalorder %v618, 4
        %vm1277 = vcmp.lt.s32.totalorder %v619, 4
        %vm1278 = vcmp.lt.s32.totalorder %v620, 4
        %vm1279 = vcmp.lt.s32.totalorder %v621, 4
        %vm1280 = vcmp.lt.s32.totalorder %v622, 4
        %vm1281 = vcmp.lt.s32.totalorder %v623, 4
        %vm1282 = vcmp.lt.s32.totalorder %v624, 4
        %vm1283 = vcmp.lt.s32.totalorder %v625, 4
        %vm1284 = vcmp.lt.s32.totalorder %v626, 4
        %vm1285 = vcmp.lt.s32.totalorder %v627, 4
        %vm1286 = vcmp.lt.s32.totalorder %v628, 4
        %vm1287 = vcmp.lt.s32.totalorder %v629, 4
        %v1288 = vsel %vm1240, -inf, %v1272
        %v1289 = vsel %vm1273, -inf, %v1271
        %v1290 = vsel %vm1274, -inf, %v1270
        %v1291 = vsel %vm1275, -inf, %v1269
        %v1292 = vsel %vm1276, -inf, %v1268
        %v1293 = vsel %vm1277, -inf, %v1267
        %v1294 = vsel %vm1278, -inf, %v1266
        %v1295 = vsel %vm1279, -inf, %v1265
        %v1296 = vsel %vm1280, -inf, %v1264
        %v1297 = vsel %vm1281, -inf, %v1263
        %v1298 = vsel %vm1282, -inf, %v1262
        %v1299 = vsel %vm1283, -inf, %v1261
        %v1300 = vsel %vm1284, -inf, %v1260
        %v1301 = vsel %vm1285, -inf, %v1259
        %v1302 = vsel %vm1286, -inf, %v1258
        %v1303 = vsel %vm1287, -inf, %v1257
        %v1304 = vsel %vm1240, -inf, %v1256
        %v1305 = vsel %vm1273, -inf, %v1255
        %v1306 = vsel %vm1274, -inf, %v1254
        %v1307 = vsel %vm1275, -inf, %v1253
        %v1308 = vsel %vm1276, -inf, %v1252
        %v1309 = vsel %vm1277, -inf, %v1251
        %v1310 = vsel %vm1278, -inf, %v1250
        %v1311 = vsel %vm1279, -inf, %v1249
        %v1312 = vsel %vm1280, -inf, %v1248
        %v1313 = vsel %vm1281, -inf, %v1247
        %v1314 = vsel %vm1282, -inf, %v1246
        %v1315 = vsel %vm1283, -inf, %v1245
        %v1316 = vsel %vm1284, -inf, %v1244
        %v1317 = vsel %vm1285, -inf, %v1243
        %v1318 = vsel %vm1286, -inf, %v1242
        %v1319 = vsel %vm1287, -inf, %v1241
        %v1320 = vmax.f32 %v1031, %v1288
        %v1321 = vmax.f32 %v1032, %v1289
        %v1322 = vmax.f32 %v1033, %v1290
        %v1323 = vmax.f32 %v1034, %v1291
        %v1324 = vmax.f32 %v1035, %v1292
        %v1325 = vmax.f32 %v1036, %v1293
        %v1326 = vmax.f32 %v1037, %v1294
        %v1327 = vmax.f32 %v1038, %v1295
        %v1328 = vmax.f32 %v1039, %v1296
        %v1329 = vmax.f32 %v1040, %v1297
        %v1330 = vmax.f32 %v1041, %v1298
        %v1331 = vmax.f32 %v1042, %v1299
        %v1332 = vmax.f32 %v1043, %v1300
        %v1333 = vmax.f32 %v1044, %v1301
        %v1334 = vmax.f32 %v1045, %v1302
        %v1335 = vmax.f32 %v1046, %v1303
        %v1336 = vmax.f32 %v1047, %v1304
        %v1337 = vmax.f32 %v1048, %v1305
        %v1338 = vmax.f32 %v1049, %v1306
        %v1339 = vmax.f32 %v1050, %v1307
        %v1340 = vmax.f32 %v1051, %v1308
        %v1341 = vmax.f32 %v1052, %v1309
        %v1342 = vmax.f32 %v1053, %v1310
        %v1343 = vmax.f32 %v1054, %v1311
        %v1344 = vmax.f32 %v1055, %v1312
        %v1345 = vmax.f32 %v1056, %v1313
        %v1346 = vmax.f32 %v1057, %v1314
        %v1347 = vmax.f32 %v1058, %v1315
        %v1348 = vmax.f32 %v1059, %v1316
        %v1349 = vmax.f32 %v1060, %v1317
        %v1350 = vmax.f32 %v1061, %v1318
        %v1351 = vmax.f32 %v1062, %v1319
        %v1352 = vrot.slane %v1176, 4
        %v1353 = vrot.slane %v1177, 4
        %v1354 = vrot.slane %v1178, 4
        %v1355 = vrot.slane %v1179, 4
        %v1356 = vrot.slane %v1180, 4
        %v1357 = vrot.slane %v1181, 4
        %v1358 = vrot.slane %v1182, 4
        %v1359 = vrot.slane %v1183, 4
        %v1360 = vrot.slane %v1184, 4
        %v1361 = vrot.slane %v1185, 4
        %v1362 = vrot.slane %v1186, 4
        %v1363 = vrot.slane %v1187, 4
        %v1364 = vrot.slane %v1188, 4
        %v1365 = vrot.slane %v1189, 4
        %v1366 = vrot.slane %v1190, 4
        %v1367 = vrot.slane %v1191, 4
        %v1368 = vrot.slane %v1192, 4
        %v1369 = vrot.slane %v1193, 4
        %v1370 = vrot.slane %v1194, 4
        %v1371 = vrot.slane %v1195, 4
        %v1372 = vrot.slane %v1196, 4
        %v1373 = vrot.slane %v1197, 4
        %v1374 = vrot.slane %v1198, 4
        %v1375 = vrot.slane %v1199, 4
        %v1376 = vrot.slane %v1200, 4
        %v1377 = vrot.slane %v1201, 4
        %v1378 = vrot.slane %v1202, 4
        %v1379 = vrot.slane %v1203, 4
        %v1380 = vrot.slane %v1204, 4
        %v1381 = vrot.slane %v1205, 4
        %v1382 = vrot.slane %v1206, 4
        %v1383 = vrot.slane %v1207, 4
        %v1384 = vsel %vm1240, %v1382, %v1383
        %v1385 = vsel %vm1240, %v1381, %v1382
        %v1386 = vsel %vm1240, %v1380, %v1381
        %v1387 = vsel %vm1240, %v1379, %v1380
        %v1388 = vsel %vm1240, %v1378, %v1379
        %v1389 = vsel %vm1240, %v1377, %v1378
        %v1390 = vsel %vm1240, %v1376, %v1377
        %v1391 = vsel %vm1240, %v1375, %v1376
        %v1392 = vsel %vm1240, %v1374, %v1375
        %v1393 = vsel %vm1240, %v1373, %v1374
        %v1394 = vsel %vm1240, %v1372, %v1373
        %v1395 = vsel %vm1240, %v1371, %v1372
        %v1396 = vsel %vm1240, %v1370, %v1371
        %v1397 = vsel %vm1240, %v1369, %v1370
        %v1398 = vsel %vm1240, %v1368, %v1369
        %v1399 = vsel %vm1240, %v1367, %v1368
        %v1400 = vsel %vm1240, %v1366, %v1367
        %v1401 = vsel %vm1240, %v1365, %v1366
        %v1402 = vsel %vm1240, %v1364, %v1365
        %v1403 = vsel %vm1240, %v1363, %v1364
        %v1404 = vsel %vm1240, %v1362, %v1363
        %v1405 = vsel %vm1240, %v1361, %v1362
        %v1406 = vsel %vm1240, %v1360, %v1361
        %v1407 = vsel %vm1240, %v1359, %v1360
        %v1408 = vsel %vm1240, %v1358, %v1359
        %v1409 = vsel %vm1240, %v1357, %v1358
        %v1410 = vsel %vm1240, %v1356, %v1357
        %v1411 = vsel %vm1240, %v1355, %v1356
        %v1412 = vsel %vm1240, %v1354, %v1355
        %v1413 = vsel %vm1240, %v1353, %v1354
        %v1414 = vsel %vm1240, %v1352, %v1353
        %v1415 = vsel %vm1240, %v1383, %v1352
        %vm1416 = vcmp.ge.s32.totalorder %v614, 124
        %vm1417 = vcmp.ge.s32.totalorder %v615, 124
        %vm1418 = vcmp.ge.s32.totalorder %v616, 124
        %vm1419 = vcmp.ge.s32.totalorder %v617, 124
        %vm1420 = vcmp.ge.s32.totalorder %v618, 124
        %vm1421 = vcmp.ge.s32.totalorder %v619, 124
        %vm1422 = vcmp.ge.s32.totalorder %v620, 124
        %vm1423 = vcmp.ge.s32.totalorder %v621, 124
        %vm1424 = vcmp.ge.s32.totalorder %v622, 124
        %vm1425 = vcmp.ge.s32.totalorder %v623, 124
        %vm1426 = vcmp.ge.s32.totalorder %v624, 124
        %vm1427 = vcmp.ge.s32.totalorder %v625, 124
        %vm1428 = vcmp.ge.s32.totalorder %v626, 124
        %vm1429 = vcmp.ge.s32.totalorder %v627, 124
        %vm1430 = vcmp.ge.s32.totalorder %v628, 124
        %vm1431 = vcmp.ge.s32.totalorder %v629, 124
        %v1432 = vsel %vm1416, -inf, %v1414
        %v1433 = vsel %vm1417, -inf, %v1413
        %v1434 = vsel %vm1418, -inf, %v1412
        %v1435 = vsel %vm1419, -inf, %v1411
        %v1436 = vsel %vm1420, -inf, %v1410
        %v1437 = vsel %vm1421, -inf, %v1409
        %v1438 = vsel %vm1422, -inf, %v1408
        %v1439 = vsel %vm1423, -inf, %v1407
        %v1440 = vsel %vm1424, -inf, %v1406
        %v1441 = vsel %vm1425, -inf, %v1405
        %v1442 = vsel %vm1426, -inf, %v1404
        %v1443 = vsel %vm1427, -inf, %v1403
        %v1444 = vsel %vm1428, -inf, %v1402
        %v1445 = vsel %vm1429, -inf, %v1401
        %v1446 = vsel %vm1430, -inf, %v1400
        %v1447 = vsel %vm1431, -inf, %v1399
        %v1448 = vsel %vm1416, -inf, %v1398
        %v1449 = vsel %vm1417, -inf, %v1397
        %v1450 = vsel %vm1418, -inf, %v1396
        %v1451 = vsel %vm1419, -inf, %v1395
        %v1452 = vsel %vm1420, -inf, %v1394
        %v1453 = vsel %vm1421, -inf, %v1393
        %v1454 = vsel %vm1422, -inf, %v1392
        %v1455 = vsel %vm1423, -inf, %v1391
        %v1456 = vsel %vm1424, -inf, %v1390
        %v1457 = vsel %vm1425, -inf, %v1389
        %v1458 = vsel %vm1426, -inf, %v1388
        %v1459 = vsel %vm1427, -inf, %v1387
        %v1460 = vsel %vm1428, -inf, %v1386
        %v1461 = vsel %vm1429, -inf, %v1385
        %v1462 = vsel %vm1430, -inf, %v1384
        %v1463 = vsel %vm1431, -inf, %v1415
        %v1464 = vmax.f32 %v1176, %v1432
        %v1465 = vmax.f32 %v1177, %v1433
        %v1466 = vmax.f32 %v1178, %v1434
        %v1467 = vmax.f32 %v1179, %v1435
        %v1468 = vmax.f32 %v1180, %v1436
        %v1469 = vmax.f32 %v1181, %v1437
        %v1470 = vmax.f32 %v1182, %v1438
        %v1471 = vmax.f32 %v1183, %v1439
        %v1472 = vmax.f32 %v1184, %v1440
        %v1473 = vmax.f32 %v1185, %v1441
        %v1474 = vmax.f32 %v1186, %v1442
        %v1475 = vmax.f32 %v1187, %v1443
        %v1476 = vmax.f32 %v1188, %v1444
        %v1477 = vmax.f32 %v1189, %v1445
        %v1478 = vmax.f32 %v1190, %v1446
        %v1479 = vmax.f32 %v1191, %v1447
        %v1480 = vmax.f32 %v1192, %v1448
        %v1481 = vmax.f32 %v1193, %v1449
        %v1482 = vmax.f32 %v1194, %v1450
        %v1483 = vmax.f32 %v1195, %v1451
        %v1484 = vmax.f32 %v1196, %v1452
        %v1485 = vmax.f32 %v1197, %v1453
        %v1486 = vmax.f32 %v1198, %v1454
        %v1487 = vmax.f32 %v1199, %v1455
        %v1488 = vmax.f32 %v1200, %v1456
        %v1489 = vmax.f32 %v1201, %v1457
        %v1490 = vmax.f32 %v1202, %v1458
        %v1491 = vmax.f32 %v1203, %v1459
        %v1492 = vmax.f32 %v1204, %v1460
        %v1493 = vmax.f32 %v1205, %v1461
        %v1494 = vmax.f32 %v1206, %v1462
        %v1495 = vmax.f32 %v1207, %v1463
        %vm1496 = vcmp.lt.s32.totalorder %v614, 8
        %vm1497 = vcmp.lt.s32.totalorder %v615, 8
        %vm1498 = vcmp.lt.s32.totalorder %v616, 8
        %vm1499 = vcmp.lt.s32.totalorder %v617, 8
        %vm1500 = vcmp.lt.s32.totalorder %v618, 8
        %vm1501 = vcmp.lt.s32.totalorder %v619, 8
        %vm1502 = vcmp.lt.s32.totalorder %v620, 8
        %vm1503 = vcmp.lt.s32.totalorder %v621, 8
        %vm1504 = vcmp.lt.s32.totalorder %v622, 8
        %vm1505 = vcmp.lt.s32.totalorder %v623, 8
        %vm1506 = vcmp.lt.s32.totalorder %v624, 8
        %vm1507 = vcmp.lt.s32.totalorder %v625, 8
        %vm1508 = vcmp.lt.s32.totalorder %v626, 8
        %vm1509 = vcmp.lt.s32.totalorder %v627, 8
        %vm1510 = vcmp.lt.s32.totalorder %v628, 8
        %vm1511 = vcmp.lt.s32.totalorder %v629, 8
        %v1512 = vsel %vm1496, -inf, %v1351
        %v1513 = vsel %vm1497, -inf, %v1320
        %v1514 = vsel %vm1498, -inf, %v1321
        %v1515 = vsel %vm1499, -inf, %v1322
        %v1516 = vsel %vm1500, -inf, %v1323
        %v1517 = vsel %vm1501, -inf, %v1324
        %v1518 = vsel %vm1502, -inf, %v1325
        %v1519 = vsel %vm1503, -inf, %v1326
        %v1520 = vsel %vm1504, -inf, %v1327
        %v1521 = vsel %vm1505, -inf, %v1328
        %v1522 = vsel %vm1506, -inf, %v1329
        %v1523 = vsel %vm1507, -inf, %v1330
        %v1524 = vsel %vm1508, -inf, %v1331
        %v1525 = vsel %vm1509, -inf, %v1332
        %v1526 = vsel %vm1510, -inf, %v1333
        %v1527 = vsel %vm1511, -inf, %v1334
        %v1528 = vsel %vm1496, -inf, %v1335
        %v1529 = vsel %vm1497, -inf, %v1336
        %v1530 = vsel %vm1498, -inf, %v1337
        %v1531 = vsel %vm1499, -inf, %v1338
        %v1532 = vsel %vm1500, -inf, %v1339
        %v1533 = vsel %vm1501, -inf, %v1340
        %v1534 = vsel %vm1502, -inf, %v1341
        %v1535 = vsel %vm1503, -inf, %v1342
        %v1536 = vsel %vm1504, -inf, %v1343
        %v1537 = vsel %vm1505, -inf, %v1344
        %v1538 = vsel %vm1506, -inf, %v1345
        %v1539 = vsel %vm1507, -inf, %v1346
        %v1540 = vsel %vm1508, -inf, %v1347
        %v1541 = vsel %vm1509, -inf, %v1348
        %v1542 = vsel %vm1510, -inf, %v1349
        %v1543 = vsel %vm1511, -inf, %v1350
        %v1544 = vmax.f32 %v1320, %v1512
        %v1545 = vmax.f32 %v1321, %v1513
        %v1546 = vmax.f32 %v1322, %v1514
        %v1547 = vmax.f32 %v1323, %v1515
        %v1548 = vmax.f32 %v1324, %v1516
        %v1549 = vmax.f32 %v1325, %v1517
        %v1550 = vmax.f32 %v1326, %v1518
        %v1551 = vmax.f32 %v1327, %v1519
        %v1552 = vmax.f32 %v1328, %v1520
        %v1553 = vmax.f32 %v1329, %v1521
        %v1554 = vmax.f32 %v1330, %v1522
        %v1555 = vmax.f32 %v1331, %v1523
        %v1556 = vmax.f32 %v1332, %v1524
        %v1557 = vmax.f32 %v1333, %v1525
        %v1558 = vmax.f32 %v1334, %v1526
        %v1559 = vmax.f32 %v1335, %v1527
        %v1560 = vmax.f32 %v1336, %v1528
        %v1561 = vmax.f32 %v1337, %v1529
        %v1562 = vmax.f32 %v1338, %v1530
        %v1563 = vmax.f32 %v1339, %v1531
        %v1564 = vmax.f32 %v1340, %v1532
        %v1565 = vmax.f32 %v1341, %v1533
        %v1566 = vmax.f32 %v1342, %v1534
        %v1567 = vmax.f32 %v1343, %v1535
        %v1568 = vmax.f32 %v1344, %v1536
        %v1569 = vmax.f32 %v1345, %v1537
        %v1570 = vmax.f32 %v1346, %v1538
        %v1571 = vmax.f32 %v1347, %v1539
        %v1572 = vmax.f32 %v1348, %v1540
        %v1573 = vmax.f32 %v1349, %v1541
        %v1574 = vmax.f32 %v1350, %v1542
        %v1575 = vmax.f32 %v1351, %v1543
        %vm1576 = vcmp.ge.s32.totalorder %v614, 120
        %vm1577 = vcmp.ge.s32.totalorder %v615, 120
        %vm1578 = vcmp.ge.s32.totalorder %v616, 120
        %vm1579 = vcmp.ge.s32.totalorder %v617, 120
        %vm1580 = vcmp.ge.s32.totalorder %v618, 120
        %vm1581 = vcmp.ge.s32.totalorder %v619, 120
        %vm1582 = vcmp.ge.s32.totalorder %v620, 120
        %vm1583 = vcmp.ge.s32.totalorder %v621, 120
        %vm1584 = vcmp.ge.s32.totalorder %v622, 120
        %vm1585 = vcmp.ge.s32.totalorder %v623, 120
        %vm1586 = vcmp.ge.s32.totalorder %v624, 120
        %vm1587 = vcmp.ge.s32.totalorder %v625, 120
        %vm1588 = vcmp.ge.s32.totalorder %v626, 120
        %vm1589 = vcmp.ge.s32.totalorder %v627, 120
        %vm1590 = vcmp.ge.s32.totalorder %v628, 120
        %vm1591 = vcmp.ge.s32.totalorder %v629, 120
        %v1592 = vsel %vm1576, -inf, %v1465
        %v1593 = vsel %vm1577, -inf, %v1466
        %v1594 = vsel %vm1578, -inf, %v1467
        %v1595 = vsel %vm1579, -inf, %v1468
        %v1596 = vsel %vm1580, -inf, %v1469
        %v1597 = vsel %vm1581, -inf, %v1470
        %v1598 = vsel %vm1582, -inf, %v1471
        %v1599 = vsel %vm1583, -inf, %v1472
        %v1600 = vsel %vm1584, -inf, %v1473
        %v1601 = vsel %vm1585, -inf, %v1474
        %v1602 = vsel %vm1586, -inf, %v1475
        %v1603 = vsel %vm1587, -inf, %v1476
        %v1604 = vsel %vm1588, -inf, %v1477
        %v1605 = vsel %vm1589, -inf, %v1478
        %v1606 = vsel %vm1590, -inf, %v1479
        %v1607 = vsel %vm1591, -inf, %v1480
        %v1608 = vsel %vm1576, -inf, %v1481
        %v1609 = vsel %vm1577, -inf, %v1482
        %v1610 = vsel %vm1578, -inf, %v1483
        %v1611 = vsel %vm1579, -inf, %v1484
        %v1612 = vsel %vm1580, -inf, %v1485
        %v1613 = vsel %vm1581, -inf, %v1486
        %v1614 = vsel %vm1582, -inf, %v1487
        %v1615 = vsel %vm1583, -inf, %v1488
        %v1616 = vsel %vm1584, -inf, %v1489
        %v1617 = vsel %vm1585, -inf, %v1490
        %v1618 = vsel %vm1586, -inf, %v1491
        %v1619 = vsel %vm1587, -inf, %v1492
        %v1620 = vsel %vm1588, -inf, %v1493
        %v1621 = vsel %vm1589, -inf, %v1494
        %v1622 = vsel %vm1590, -inf, %v1495
        %v1623 = vsel %vm1591, -inf, %v1464
        %v1624 = vmax.f32 %v1464, %v1592
        %v1625 = vmax.f32 %v1465, %v1593
        %v1626 = vmax.f32 %v1466, %v1594
        %v1627 = vmax.f32 %v1467, %v1595
        %v1628 = vmax.f32 %v1468, %v1596
        %v1629 = vmax.f32 %v1469, %v1597
        %v1630 = vmax.f32 %v1470, %v1598
        %v1631 = vmax.f32 %v1471, %v1599
        %v1632 = vmax.f32 %v1472, %v1600
        %v1633 = vmax.f32 %v1473, %v1601
        %v1634 = vmax.f32 %v1474, %v1602
        %v1635 = vmax.f32 %v1475, %v1603
        %v1636 = vmax.f32 %v1476, %v1604
        %v1637 = vmax.f32 %v1477, %v1605
        %v1638 = vmax.f32 %v1478, %v1606
        %v1639 = vmax.f32 %v1479, %v1607
        %v1640 = vmax.f32 %v1480, %v1608
        %v1641 = vmax.f32 %v1481, %v1609
        %v1642 = vmax.f32 %v1482, %v1610
        %v1643 = vmax.f32 %v1483, %v1611
        %v1644 = vmax.f32 %v1484, %v1612
        %v1645 = vmax.f32 %v1485, %v1613
        %v1646 = vmax.f32 %v1486, %v1614
        %v1647 = vmax.f32 %v1487, %v1615
        %v1648 = vmax.f32 %v1488, %v1616
        %v1649 = vmax.f32 %v1489, %v1617
        %v1650 = vmax.f32 %v1490, %v1618
        %v1651 = vmax.f32 %v1491, %v1619
        %v1652 = vmax.f32 %v1492, %v1620
        %v1653 = vmax.f32 %v1493, %v1621
        %v1654 = vmax.f32 %v1494, %v1622
        %v1655 = vmax.f32 %v1495, %v1623
        %vm1656 = vcmp.lt.s32.totalorder %v614, 16
        %vm1657 = vcmp.lt.s32.totalorder %v615, 16
        %vm1658 = vcmp.lt.s32.totalorder %v616, 16
        %vm1659 = vcmp.lt.s32.totalorder %v617, 16
        %vm1660 = vcmp.lt.s32.totalorder %v618, 16
        %vm1661 = vcmp.lt.s32.totalorder %v619, 16
        %vm1662 = vcmp.lt.s32.totalorder %v620, 16
        %vm1663 = vcmp.lt.s32.totalorder %v621, 16
        %vm1664 = vcmp.lt.s32.totalorder %v622, 16
        %vm1665 = vcmp.lt.s32.totalorder %v623, 16
        %vm1666 = vcmp.lt.s32.totalorder %v624, 16
        %vm1667 = vcmp.lt.s32.totalorder %v625, 16
        %vm1668 = vcmp.lt.s32.totalorder %v626, 16
        %vm1669 = vcmp.lt.s32.totalorder %v627, 16
        %vm1670 = vcmp.lt.s32.totalorder %v628, 16
        %vm1671 = vcmp.lt.s32.totalorder %v629, 16
        %v1672 = vsel %vm1656, -inf, %v1574
        %v1673 = vsel %vm1657, -inf, %v1575
        %v1674 = vsel %vm1658, -inf, %v1544
        %v1675 = vsel %vm1659, -inf, %v1545
        %v1676 = vsel %vm1660, -inf, %v1546
        %v1677 = vsel %vm1661, -inf, %v1547
        %v1678 = vsel %vm1662, -inf, %v1548
        %v1679 = vsel %vm1663, -inf, %v1549
        %v1680 = vsel %vm1664, -inf, %v1550
        %v1681 = vsel %vm1665, -inf, %v1551
        %v1682 = vsel %vm1666, -inf, %v1552
        %v1683 = vsel %vm1667, -inf, %v1553
        %v1684 = vsel %vm1668, -inf, %v1554
        %v1685 = vsel %vm1669, -inf, %v1555
        %v1686 = vsel %vm1670, -inf, %v1556
        %v1687 = vsel %vm1671, -inf, %v1557
        %v1688 = vsel %vm1656, -inf, %v1558
        %v1689 = vsel %vm1657, -inf, %v1559
        %v1690 = vsel %vm1658, -inf, %v1560
        %v1691 = vsel %vm1659, -inf, %v1561
        %v1692 = vsel %vm1660, -inf, %v1562
        %v1693 = vsel %vm1661, -inf, %v1563
        %v1694 = vsel %vm1662, -inf, %v1564
        %v1695 = vsel %vm1663, -inf, %v1565
        %v1696 = vsel %vm1664, -inf, %v1566
        %v1697 = vsel %vm1665, -inf, %v1567
        %v1698 = vsel %vm1666, -inf, %v1568
        %v1699 = vsel %vm1667, -inf, %v1569
        %v1700 = vsel %vm1668, -inf, %v1570
        %v1701 = vsel %vm1669, -inf, %v1571
        %v1702 = vsel %vm1670, -inf, %v1572
        %v1703 = vsel %vm1671, -inf, %v1573
        %v1704 = vmax.f32 %v1544, %v1672
        %v1705 = vmax.f32 %v1545, %v1673
        %v1706 = vmax.f32 %v1546, %v1674
        %v1707 = vmax.f32 %v1547, %v1675
        %v1708 = vmax.f32 %v1548, %v1676
        %v1709 = vmax.f32 %v1549, %v1677
        %v1710 = vmax.f32 %v1550, %v1678
        %v1711 = vmax.f32 %v1551, %v1679
        %v1712 = vmax.f32 %v1552, %v1680
        %v1713 = vmax.f32 %v1553, %v1681
        %v1714 = vmax.f32 %v1554, %v1682
        %v1715 = vmax.f32 %v1555, %v1683
        %v1716 = vmax.f32 %v1556, %v1684
        %v1717 = vmax.f32 %v1557, %v1685
        %v1718 = vmax.f32 %v1558, %v1686
        %v1719 = vmax.f32 %v1559, %v1687
        %v1720 = vmax.f32 %v1560, %v1688
        %v1721 = vmax.f32 %v1561, %v1689
        %v1722 = vmax.f32 %v1562, %v1690
        %v1723 = vmax.f32 %v1563, %v1691
        %v1724 = vmax.f32 %v1564, %v1692
        %v1725 = vmax.f32 %v1565, %v1693
        %v1726 = vmax.f32 %v1566, %v1694
        %v1727 = vmax.f32 %v1567, %v1695
        %v1728 = vmax.f32 %v1568, %v1696
        %v1729 = vmax.f32 %v1569, %v1697
        %v1730 = vmax.f32 %v1570, %v1698
        %v1731 = vmax.f32 %v1571, %v1699
        %v1732 = vmax.f32 %v1572, %v1700
        %v1733 = vmax.f32 %v1573, %v1701
        %v1734 = vmax.f32 %v1574, %v1702
        %v1735 = vmax.f32 %v1575, %v1703
        %vm1736 = vcmp.ge.s32.totalorder %v614, 112
        %vm1737 = vcmp.ge.s32.totalorder %v615, 112
        %vm1738 = vcmp.ge.s32.totalorder %v616, 112
        %vm1739 = vcmp.ge.s32.totalorder %v617, 112
        %vm1740 = vcmp.ge.s32.totalorder %v618, 112
        %vm1741 = vcmp.ge.s32.totalorder %v619, 112
        %vm1742 = vcmp.ge.s32.totalorder %v620, 112
        %vm1743 = vcmp.ge.s32.totalorder %v621, 112
        %vm1744 = vcmp.ge.s32.totalorder %v622, 112
        %vm1745 = vcmp.ge.s32.totalorder %v623, 112
        %vm1746 = vcmp.ge.s32.totalorder %v624, 112
        %vm1747 = vcmp.ge.s32.totalorder %v625, 112
        %vm1748 = vcmp.ge.s32.totalorder %v626, 112
        %vm1749 = vcmp.ge.s32.totalorder %v627, 112
        %vm1750 = vcmp.ge.s32.totalorder %v628, 112
        %vm1751 = vcmp.ge.s32.totalorder %v629, 112
        %v1752 = vsel %vm1736, -inf, %v1626
        %v1753 = vsel %vm1737, -inf, %v1627
        %v1754 = vsel %vm1738, -inf, %v1628
        %v1755 = vsel %vm1739, -inf, %v1629
        %v1756 = vsel %vm1740, -inf, %v1630
        %v1757 = vsel %vm1741, -inf, %v1631
        %v1758 = vsel %vm1742, -inf, %v1632
        %v1759 = vsel %vm1743, -inf, %v1633
        %v1760 = vsel %vm1744, -inf, %v1634
        %v1761 = vsel %vm1745, -inf, %v1635
        %v1762 = vsel %vm1746, -inf, %v1636
        %v1763 = vsel %vm1747, -inf, %v1637
        %v1764 = vsel %vm1748, -inf, %v1638
        %v1765 = vsel %vm1749, -inf, %v1639
        %v1766 = vsel %vm1750, -inf, %v1640
        %v1767 = vsel %vm1751, -inf, %v1641
        %v1768 = vsel %vm1736, -inf, %v1642
        %v1769 = vsel %vm1737, -inf, %v1643
        %v1770 = vsel %vm1738, -inf, %v1644
        %v1771 = vsel %vm1739, -inf, %v1645
        %v1772 = vsel %vm1740, -inf, %v1646
        %v1773 = vsel %vm1741, -inf, %v1647
        %v1774 = vsel %vm1742, -inf, %v1648
        %v1775 = vsel %vm1743, -inf, %v1649
        %v1776 = vsel %vm1744, -inf, %v1650
        %v1777 = vsel %vm1745, -inf, %v1651
        %v1778 = vsel %vm1746, -inf, %v1652
        %v1779 = vsel %vm1747, -inf, %v1653
        %v1780 = vsel %vm1748, -inf, %v1654
        %v1781 = vsel %vm1749, -inf, %v1655
        %v1782 = vsel %vm1750, -inf, %v1624
        %v1783 = vsel %vm1751, -inf, %v1625
        %v1784 = vmax.f32 %v1624, %v1752
        %v1785 = vmax.f32 %v1625, %v1753
        %v1786 = vmax.f32 %v1626, %v1754
        %v1787 = vmax.f32 %v1627, %v1755
        %v1788 = vmax.f32 %v1628, %v1756
        %v1789 = vmax.f32 %v1629, %v1757
        %v1790 = vmax.f32 %v1630, %v1758
        %v1791 = vmax.f32 %v1631, %v1759
        %v1792 = vmax.f32 %v1632, %v1760
        %v1793 = vmax.f32 %v1633, %v1761
        %v1794 = vmax.f32 %v1634, %v1762
        %v1795 = vmax.f32 %v1635, %v1763
        %v1796 = vmax.f32 %v1636, %v1764
        %v1797 = vmax.f32 %v1637, %v1765
        %v1798 = vmax.f32 %v1638, %v1766
        %v1799 = vmax.f32 %v1639, %v1767
        %v1800 = vmax.f32 %v1640, %v1768
        %v1801 = vmax.f32 %v1641, %v1769
        %v1802 = vmax.f32 %v1642, %v1770
        %v1803 = vmax.f32 %v1643, %v1771
        %v1804 = vmax.f32 %v1644, %v1772
        %v1805 = vmax.f32 %v1645, %v1773
        %v1806 = vmax.f32 %v1646, %v1774
        %v1807 = vmax.f32 %v1647, %v1775
        %v1808 = vmax.f32 %v1648, %v1776
        %v1809 = vmax.f32 %v1649, %v1777
        %v1810 = vmax.f32 %v1650, %v1778
        %v1811 = vmax.f32 %v1651, %v1779
        %v1812 = vmax.f32 %v1652, %v1780
        %v1813 = vmax.f32 %v1653, %v1781
        %v1814 = vmax.f32 %v1654, %v1782
        %v1815 = vmax.f32 %v1655, %v1783
        %vm1816 = vcmp.lt.s32.totalorder %v614, 32
        %vm1817 = vcmp.lt.s32.totalorder %v615, 32
        %vm1818 = vcmp.lt.s32.totalorder %v616, 32
        %vm1819 = vcmp.lt.s32.totalorder %v617, 32
        %vm1820 = vcmp.lt.s32.totalorder %v618, 32
        %vm1821 = vcmp.lt.s32.totalorder %v619, 32
        %vm1822 = vcmp.lt.s32.totalorder %v620, 32
        %vm1823 = vcmp.lt.s32.totalorder %v621, 32
        %vm1824 = vcmp.lt.s32.totalorder %v622, 32
        %vm1825 = vcmp.lt.s32.totalorder %v623, 32
        %vm1826 = vcmp.lt.s32.totalorder %v624, 32
        %vm1827 = vcmp.lt.s32.totalorder %v625, 32
        %vm1828 = vcmp.lt.s32.totalorder %v626, 32
        %vm1829 = vcmp.lt.s32.totalorder %v627, 32
        %vm1830 = vcmp.lt.s32.totalorder %v628, 32
        %vm1831 = vcmp.lt.s32.totalorder %v629, 32
        %v1832 = vsel %vm1816, -inf, %v1732
        %v1833 = vsel %vm1817, -inf, %v1733
        %v1834 = vsel %vm1818, -inf, %v1734
        %v1835 = vsel %vm1819, -inf, %v1735
        %v1836 = vsel %vm1820, -inf, %v1704
        %v1837 = vsel %vm1821, -inf, %v1705
        %v1838 = vsel %vm1822, -inf, %v1706
        %v1839 = vsel %vm1823, -inf, %v1707
        %v1840 = vsel %vm1824, -inf, %v1708
        %v1841 = vsel %vm1825, -inf, %v1709
        %v1842 = vsel %vm1826, -inf, %v1710
        %v1843 = vsel %vm1827, -inf, %v1711
        %v1844 = vsel %vm1828, -inf, %v1712
        %v1845 = vsel %vm1829, -inf, %v1713
        %v1846 = vsel %vm1830, -inf, %v1714
        %v1847 = vsel %vm1831, -inf, %v1715
        %v1848 = vsel %vm1816, -inf, %v1716
        %v1849 = vsel %vm1817, -inf, %v1717
        %v1850 = vsel %vm1818, -inf, %v1718
        %v1851 = vsel %vm1819, -inf, %v1719
        %v1852 = vsel %vm1820, -inf, %v1720
        %v1853 = vsel %vm1821, -inf, %v1721
        %v1854 = vsel %vm1822, -inf, %v1722
        %v1855 = vsel %vm1823, -inf, %v1723
        %v1856 = vsel %vm1824, -inf, %v1724
        %v1857 = vsel %vm1825, -inf, %v1725
        %v1858 = vsel %vm1826, -inf, %v1726
        %v1859 = vsel %vm1827, -inf, %v1727
        %v1860 = vsel %vm1828, -inf, %v1728
        %v1861 = vsel %vm1829, -inf, %v1729
        %v1862 = vsel %vm1830, -inf, %v1730
        %v1863 = vsel %vm1831, -inf, %v1731
        %v1864 = vmax.f32 %v1704, %v1832
        %v1865 = vmax.f32 %v1705, %v1833
        %v1866 = vmax.f32 %v1706, %v1834
        %v1867 = vmax.f32 %v1707, %v1835
        %v1868 = vmax.f32 %v1708, %v1836
        %v1869 = vmax.f32 %v1709, %v1837
        %v1870 = vmax.f32 %v1710, %v1838
        %v1871 = vmax.f32 %v1711, %v1839
        %v1872 = vmax.f32 %v1712, %v1840
        %v1873 = vmax.f32 %v1713, %v1841
        %v1874 = vmax.f32 %v1714, %v1842
        %v1875 = vmax.f32 %v1715, %v1843
        %v1876 = vmax.f32 %v1716, %v1844
        %v1877 = vmax.f32 %v1717, %v1845
        %v1878 = vmax.f32 %v1718, %v1846
        %v1879 = vmax.f32 %v1719, %v1847
        %v1880 = vmax.f32 %v1720, %v1848
        %v1881 = vmax.f32 %v1721, %v1849
        %v1882 = vmax.f32 %v1722, %v1850
        %v1883 = vmax.f32 %v1723, %v1851
        %v1884 = vmax.f32 %v1724, %v1852
        %v1885 = vmax.f32 %v1725, %v1853
        %v1886 = vmax.f32 %v1726, %v1854
        %v1887 = vmax.f32 %v1727, %v1855
        %v1888 = vmax.f32 %v1728, %v1856
        %v1889 = vmax.f32 %v1729, %v1857
        %v1890 = vmax.f32 %v1730, %v1858
        %v1891 = vmax.f32 %v1731, %v1859
        %v1892 = vmax.f32 %v1732, %v1860
        %v1893 = vmax.f32 %v1733, %v1861
        %v1894 = vmax.f32 %v1734, %v1862
        %v1895 = vmax.f32 %v1735, %v1863
        %vm1896 = vcmp.ge.s32.totalorder %v614, 96
        %vm1897 = vcmp.ge.s32.totalorder %v615, 96
        %vm1898 = vcmp.ge.s32.totalorder %v616, 96
        %vm1899 = vcmp.ge.s32.totalorder %v617, 96
        %vm1900 = vcmp.ge.s32.totalorder %v618, 96
        %vm1901 = vcmp.ge.s32.totalorder %v619, 96
        %vm1902 = vcmp.ge.s32.totalorder %v620, 96
        %vm1903 = vcmp.ge.s32.totalorder %v621, 96
        %vm1904 = vcmp.ge.s32.totalorder %v622, 96
        %vm1905 = vcmp.ge.s32.totalorder %v623, 96
        %vm1906 = vcmp.ge.s32.totalorder %v624, 96
        %vm1907 = vcmp.ge.s32.totalorder %v625, 96
        %vm1908 = vcmp.ge.s32.totalorder %v626, 96
        %vm1909 = vcmp.ge.s32.totalorder %v627, 96
        %vm1910 = vcmp.ge.s32.totalorder %v628, 96
        %vm1911 = vcmp.ge.s32.totalorder %v629, 96
        %v1912 = vsel %vm1896, -inf, %v1788
        %v1913 = vsel %vm1897, -inf, %v1789
        %v1914 = vsel %vm1898, -inf, %v1790
        %v1915 = vsel %vm1899, -inf, %v1791
        %v1916 = vsel %vm1900, -inf, %v1792
        %v1917 = vsel %vm1901, -inf, %v1793
        %v1918 = vsel %vm1902, -inf, %v1794
        %v1919 = vsel %vm1903, -inf, %v1795
        %v1920 = vsel %vm1904, -inf, %v1796
        %v1921 = vsel %vm1905, -inf, %v1797
        %v1922 = vsel %vm1906, -inf, %v1798
        %v1923 = vsel %vm1907, -inf, %v1799
        %v1924 = vsel %vm1908, -inf, %v1800
        %v1925 = vsel %vm1909, -inf, %v1801
        %v1926 = vsel %vm1910, -inf, %v1802
        %v1927 = vsel %vm1911, -inf, %v1803
        %v1928 = vsel %vm1896, -inf, %v1804
        %v1929 = vsel %vm1897, -inf, %v1805
        %v1930 = vsel %vm1898, -inf, %v1806
        %v1931 = vsel %vm1899, -inf, %v1807
        %v1932 = vsel %vm1900, -inf, %v1808
        %v1933 = vsel %vm1901, -inf, %v1809
        %v1934 = vsel %vm1902, -inf, %v1810
        %v1935 = vsel %vm1903, -inf, %v1811
        %v1936 = vsel %vm1904, -inf, %v1812
        %v1937 = vsel %vm1905, -inf, %v1813
        %v1938 = vsel %vm1906, -inf, %v1814
        %v1939 = vsel %vm1907, -inf, %v1815
        %v1940 = vsel %vm1908, -inf, %v1784
        %v1941 = vsel %vm1909, -inf, %v1785
        %v1942 = vsel %vm1910, -inf, %v1786
        %v1943 = vsel %vm1911, -inf, %v1787
        %v1944 = vmax.f32 %v1784, %v1912
        %v1945 = vmax.f32 %v1785, %v1913
        %v1946 = vmax.f32 %v1786, %v1914
        %v1947 = vmax.f32 %v1787, %v1915
        %v1948 = vmax.f32 %v1788, %v1916
        %v1949 = vmax.f32 %v1789, %v1917
        %v1950 = vmax.f32 %v1790, %v1918
        %v1951 = vmax.f32 %v1791, %v1919
        %v1952 = vmax.f32 %v1792, %v1920
        %v1953 = vmax.f32 %v1793, %v1921
        %v1954 = vmax.f32 %v1794, %v1922
        %v1955 = vmax.f32 %v1795, %v1923
        %v1956 = vmax.f32 %v1796, %v1924
        %v1957 = vmax.f32 %v1797, %v1925
        %v1958 = vmax.f32 %v1798, %v1926
        %v1959 = vmax.f32 %v1799, %v1927
        %v1960 = vmax.f32 %v1800, %v1928
        %v1961 = vmax.f32 %v1801, %v1929
        %v1962 = vmax.f32 %v1802, %v1930
        %v1963 = vmax.f32 %v1803, %v1931
        %v1964 = vmax.f32 %v1804, %v1932
        %v1965 = vmax.f32 %v1805, %v1933
        %v1966 = vmax.f32 %v1806, %v1934
        %v1967 = vmax.f32 %v1807, %v1935
        %v1968 = vmax.f32 %v1808, %v1936
        %v1969 = vmax.f32 %v1809, %v1937
        %v1970 = vmax.f32 %v1810, %v1938
        %v1971 = vmax.f32 %v1811, %v1939
        %v1972 = vmax.f32 %v1812, %v1940
        %v1973 = vmax.f32 %v1813, %v1941
        %v1974 = vmax.f32 %v1814, %v1942
        %v1975 = vmax.f32 %v1815, %v1943
        %vm1976 = vcmp.lt.s32.totalorder %v614, 64
        %vm1977 = vcmp.lt.s32.totalorder %v615, 64
        %vm1978 = vcmp.lt.s32.totalorder %v616, 64
        %vm1979 = vcmp.lt.s32.totalorder %v617, 64
        %vm1980 = vcmp.lt.s32.totalorder %v618, 64
        %vm1981 = vcmp.lt.s32.totalorder %v619, 64
        %vm1982 = vcmp.lt.s32.totalorder %v620, 64
        %vm1983 = vcmp.lt.s32.totalorder %v621, 64
        %vm1984 = vcmp.lt.s32.totalorder %v622, 64
        %vm1985 = vcmp.lt.s32.totalorder %v623, 64
        %vm1986 = vcmp.lt.s32.totalorder %v624, 64
        %vm1987 = vcmp.lt.s32.totalorder %v625, 64
        %vm1988 = vcmp.lt.s32.totalorder %v626, 64
        %vm1989 = vcmp.lt.s32.totalorder %v627, 64
        %vm1990 = vcmp.lt.s32.totalorder %v628, 64
        %vm1991 = vcmp.lt.s32.totalorder %v629, 64
        %v1992 = vsel %vm1976, -inf, %v1888
        %v1993 = vsel %vm1977, -inf, %v1889
        %v1994 = vsel %vm1978, -inf, %v1890
        %v1995 = vsel %vm1979, -inf, %v1891
        %v1996 = vsel %vm1980, -inf, %v1892
        %v1997 = vsel %vm1981, -inf, %v1893
        %v1998 = vsel %vm1982, -inf, %v1894
        %v1999 = vsel %vm1983, -inf, %v1895
        %v2000 = vsel %vm1984, -inf, %v1864
        %v2001 = vsel %vm1985, -inf, %v1865
        %v2002 = vsel %vm1986, -inf, %v1866
        %v2003 = vsel %vm1987, -inf, %v1867
        %v2004 = vsel %vm1988, -inf, %v1868
        %v2005 = vsel %vm1989, -inf, %v1869
        %v2006 = vsel %vm1990, -inf, %v1870
        %v2007 = vsel %vm1991, -inf, %v1871
        %v2008 = vsel %vm1976, -inf, %v1872
        %v2009 = vsel %vm1977, -inf, %v1873
        %v2010 = vsel %vm1978, -inf, %v1874
        %v2011 = vsel %vm1979, -inf, %v1875
        %v2012 = vsel %vm1980, -inf, %v1876
        %v2013 = vsel %vm1981, -inf, %v1877
        %v2014 = vsel %vm1982, -inf, %v1878
        %v2015 = vsel %vm1983, -inf, %v1879
        %v2016 = vsel %vm1984, -inf, %v1880
        %v2017 = vsel %vm1985, -inf, %v1881
        %v2018 = vsel %vm1986, -inf, %v1882
        %v2019 = vsel %vm1987, -inf, %v1883
        %v2020 = vsel %vm1988, -inf, %v1884
        %v2021 = vsel %vm1989, -inf, %v1885
        %v2022 = vsel %vm1990, -inf, %v1886
        %v2023 = vsel %vm1991, -inf, %v1887
        %v2024 = vmax.f32 %v1864, %v1992
        %v2025 = vmax.f32 %v1865, %v1993
        %v2026 = vmax.f32 %v1866, %v1994
        %v2027 = vmax.f32 %v1867, %v1995
        %v2028 = vmax.f32 %v1868, %v1996
        %v2029 = vmax.f32 %v1869, %v1997
        %v2030 = vmax.f32 %v1870, %v1998
        %v2031 = vmax.f32 %v1871, %v1999
        %v2032 = vmax.f32 %v1872, %v2000
        %v2033 = vmax.f32 %v1873, %v2001
        %v2034 = vmax.f32 %v1874, %v2002
        %v2035 = vmax.f32 %v1875, %v2003
        %v2036 = vmax.f32 %v1876, %v2004
        %v2037 = vmax.f32 %v1877, %v2005
        %v2038 = vmax.f32 %v1878, %v2006
        %v2039 = vmax.f32 %v1879, %v2007
        %v2040 = vmax.f32 %v1880, %v2008
        %v2041 = vmax.f32 %v1881, %v2009
        %v2042 = vmax.f32 %v1882, %v2010
        %v2043 = vmax.f32 %v1883, %v2011
        %v2044 = vmax.f32 %v1884, %v2012
        %v2045 = vmax.f32 %v1885, %v2013
        %v2046 = vmax.f32 %v1886, %v2014
        %v2047 = vmax.f32 %v1887, %v2015
        %v2048 = vmax.f32 %v1888, %v2016
        %v2049 = vmax.f32 %v1889, %v2017
        %v2050 = vmax.f32 %v1890, %v2018
        %v2051 = vmax.f32 %v1891, %v2019
        %v2052 = vmax.f32 %v1892, %v2020
        %v2053 = vmax.f32 %v1893, %v2021
        %v2054 = vmax.f32 %v1894, %v2022
        %v2055 = vmax.f32 %v1895, %v2023
        %vm2056 = vcmp.ge.s32.totalorder %v614, 64
        %vm2057 = vcmp.ge.s32.totalorder %v615, 64
        %vm2058 = vcmp.ge.s32.totalorder %v616, 64
        %vm2059 = vcmp.ge.s32.totalorder %v617, 64
        %vm2060 = vcmp.ge.s32.totalorder %v618, 64
        %vm2061 = vcmp.ge.s32.totalorder %v619, 64
        %vm2062 = vcmp.ge.s32.totalorder %v620, 64
        %vm2063 = vcmp.ge.s32.totalorder %v621, 64
        %vm2064 = vcmp.ge.s32.totalorder %v622, 64
        %vm2065 = vcmp.ge.s32.totalorder %v623, 64
        %vm2066 = vcmp.ge.s32.totalorder %v624, 64
        %vm2067 = vcmp.ge.s32.totalorder %v625, 64
        %vm2068 = vcmp.ge.s32.totalorder %v626, 64
        %vm2069 = vcmp.ge.s32.totalorder %v627, 64
        %vm2070 = vcmp.ge.s32.totalorder %v628, 64
        %vm2071 = vcmp.ge.s32.totalorder %v629, 64
        %v2072 = vsel %vm2056, -inf, %v1952
        %v2073 = vsel %vm2057, -inf, %v1953
        %v2074 = vsel %vm2058, -inf, %v1954
        %v2075 = vsel %vm2059, -inf, %v1955
        %v2076 = vsel %vm2060, -inf, %v1956
        %v2077 = vsel %vm2061, -inf, %v1957
        %v2078 = vsel %vm2062, -inf, %v1958
        %v2079 = vsel %vm2063, -inf, %v1959
        %v2080 = vsel %vm2064, -inf, %v1960
        %v2081 = vsel %vm2065, -inf, %v1961
        %v2082 = vsel %vm2066, -inf, %v1962
        %v2083 = vsel %vm2067, -inf, %v1963
        %v2084 = vsel %vm2068, -inf, %v1964
        %v2085 = vsel %vm2069, -inf, %v1965
        %v2086 = vsel %vm2070, -inf, %v1966
        %v2087 = vsel %vm2071, -inf, %v1967
        %v2088 = vsel %vm2056, -inf, %v1968
        %v2089 = vsel %vm2057, -inf, %v1969
        %v2090 = vsel %vm2058, -inf, %v1970
        %v2091 = vsel %vm2059, -inf, %v1971
        %v2092 = vsel %vm2060, -inf, %v1972
        %v2093 = vsel %vm2061, -inf, %v1973
        %v2094 = vsel %vm2062, -inf, %v1974
        %v2095 = vsel %vm2063, -inf, %v1975
        %v2096 = vsel %vm2064, -inf, %v1944
        %v2097 = vsel %vm2065, -inf, %v1945
        %v2098 = vsel %vm2066, -inf, %v1946
        %v2099 = vsel %vm2067, -inf, %v1947
        %v2100 = vsel %vm2068, -inf, %v1948
        %v2101 = vsel %vm2069, -inf, %v1949
        %v2102 = vsel %vm2070, -inf, %v1950
        %v2103 = vsel %vm2071, -inf, %v1951
        %v2104 = vmax.f32 %v1944, %v2072
        %v2105 = vmax.f32 %v1945, %v2073
        %v2106 = vmax.f32 %v1946, %v2074
        %v2107 = vmax.f32 %v1947, %v2075
        %v2108 = vmax.f32 %v1948, %v2076
        %v2109 = vmax.f32 %v1949, %v2077
        %v2110 = vmax.f32 %v1950, %v2078
        %v2111 = vmax.f32 %v1951, %v2079
        %v2112 = vmax.f32 %v1952, %v2080
        %v2113 = vmax.f32 %v1953, %v2081
        %v2114 = vmax.f32 %v1954, %v2082
        %v2115 = vmax.f32 %v1955, %v2083
        %v2116 = vmax.f32 %v1956, %v2084
        %v2117 = vmax.f32 %v1957, %v2085
        %v2118 = vmax.f32 %v1958, %v2086
        %v2119 = vmax.f32 %v1959, %v2087
        %v2120 = vmax.f32 %v1960, %v2088
        %v2121 = vmax.f32 %v1961, %v2089
        %v2122 = vmax.f32 %v1962, %v2090
        %v2123 = vmax.f32 %v1963, %v2091
        %v2124 = vmax.f32 %v1964, %v2092
        %v2125 = vmax.f32 %v1965, %v2093
        %v2126 = vmax.f32 %v1966, %v2094
        %v2127 = vmax.f32 %v1967, %v2095
        %v2128 = vmax.f32 %v1968, %v2096
        %v2129 = vmax.f32 %v1969, %v2097
        %v2130 = vmax.f32 %v1970, %v2098
        %v2131 = vmax.f32 %v1971, %v2099
        %v2132 = vmax.f32 %v1972, %v2100
        %v2133 = vmax.f32 %v1973, %v2101
        %v2134 = vmax.f32 %v1974, %v2102
        %v2135 = vmax.f32 %v1975, %v2103
        %v2136 = vrot.slane %v2024, 7
        %v2137 = vrot.slane %v2025, 7
        %v2138 = vrot.slane %v2026, 7
        %v2139 = vrot.slane %v2027, 7
        %v2140 = vrot.slane %v2028, 7
        %v2141 = vrot.slane %v2029, 7
        %v2142 = vrot.slane %v2030, 7
        %v2143 = vrot.slane %v2031, 7
        %v2144 = vrot.slane %v2032, 7
        %v2145 = vrot.slane %v2033, 7
        %v2146 = vrot.slane %v2034, 7
        %v2147 = vrot.slane %v2035, 7
        %v2148 = vrot.slane %v2036, 7
        %v2149 = vrot.slane %v2037, 7
        %v2150 = vrot.slane %v2038, 7
        %v2151 = vrot.slane %v2039, 7
        %v2152 = vrot.slane %v2040, 7
        %v2153 = vrot.slane %v2041, 7
        %v2154 = vrot.slane %v2042, 7
        %v2155 = vrot.slane %v2043, 7
        %v2156 = vrot.slane %v2044, 7
        %v2157 = vrot.slane %v2045, 7
        %v2158 = vrot.slane %v2046, 7
        %v2159 = vrot.slane %v2047, 7
        %v2160 = vrot.slane %v2048, 7
        %v2161 = vrot.slane %v2049, 7
        %v2162 = vrot.slane %v2050, 7
        %v2163 = vrot.slane %v2051, 7
        %v2164 = vrot.slane %v2052, 7
        %v2165 = vrot.slane %v2053, 7
        %v2166 = vrot.slane %v2054, 7
        %v2167 = vrot.slane %v2055, 7
        %v2168 = vsel %vm662, %v2166, %v2167
        %v2169 = vsel %vm662, %v2165, %v2166
        %v2170 = vsel %vm662, %v2164, %v2165
        %v2171 = vsel %vm662, %v2163, %v2164
        %v2172 = vsel %vm662, %v2162, %v2163
        %v2173 = vsel %vm662, %v2161, %v2162
        %v2174 = vsel %vm662, %v2160, %v2161
        %v2175 = vsel %vm662, %v2159, %v2160
        %v2176 = vsel %vm662, %v2158, %v2159
        %v2177 = vsel %vm662, %v2157, %v2158
        %v2178 = vsel %vm662, %v2156, %v2157
        %v2179 = vsel %vm662, %v2155, %v2156
        %v2180 = vsel %vm662, %v2154, %v2155
        %v2181 = vsel %vm662, %v2153, %v2154
        %v2182 = vsel %vm662, %v2152, %v2153
        %v2183 = vsel %vm662, %v2151, %v2152
        %v2184 = vsel %vm662, %v2150, %v2151
        %v2185 = vsel %vm662, %v2149, %v2150
        %v2186 = vsel %vm662, %v2148, %v2149
        %v2187 = vsel %vm662, %v2147, %v2148
        %v2188 = vsel %vm662, %v2146, %v2147
        %v2189 = vsel %vm662, %v2145, %v2146
        %v2190 = vsel %vm662, %v2144, %v2145
        %v2191 = vsel %vm662, %v2143, %v2144
        %v2192 = vsel %vm662, %v2142, %v2143
        %v2193 = vsel %vm662, %v2141, %v2142
        %v2194 = vsel %vm662, %v2140, %v2141
        %v2195 = vsel %vm662, %v2139, %v2140
        %v2196 = vsel %vm662, %v2138, %v2139
        %v2197 = vsel %vm662, %v2137, %v2138
        %v2198 = vsel %vm662, %v2136, %v2137
        %v2199 = vsel %vm662, %v2167, %v2136
        %v2200 = vsel %vm662, 0.0, %v2199
        %v2201 = vsel %vm695, 0.0, %v2198
        %v2202 = vsel %vm696, 0.0, %v2197
        %v2203 = vsel %vm697, 0.0, %v2196
        %v2204 = vsel %vm698, 0.0, %v2195
        %v2205 = vsel %vm699, 0.0, %v2194
        %v2206 = vsel %vm700, 0.0, %v2193
        %v2207 = vsel %vm701, 0.0, %v2192
        %v2208 = vsel %vm702, 0.0, %v2191
        %v2209 = vsel %vm703, 0.0, %v2190
        %v2210 = vsel %vm704, 0.0, %v2189
        %v2211 = vsel %vm705, 0.0, %v2188
        %v2212 = vsel %vm706, 0.0, %v2187
        %v2213 = vsel %vm707, 0.0, %v2186
        %v2214 = vsel %vm708, 0.0, %v2185
        %v2215 = vsel %vm709, 0.0, %v2184
        %v2216 = vsel %vm662, 0.0, %v2183
        %v2217 = vsel %vm695, 0.0, %v2182
        %v2218 = vsel %vm696, 0.0, %v2181
        %v2219 = vsel %vm697, 0.0, %v2180
        %v2220 = vsel %vm698, 0.0, %v2179
        %v2221 = vsel %vm699, 0.0, %v2178
        %v2222 = vsel %vm700, 0.0, %v2177
        %v2223 = vsel %vm701, 0.0, %v2176
        %v2224 = vsel %vm702, 0.0, %v2175
        %v2225 = vsel %vm703, 0.0, %v2174
        %v2226 = vsel %vm704, 0.0, %v2173
        %v2227 = vsel %vm705, 0.0, %v2172
        %v2228 = vsel %vm706, 0.0, %v2171
        %v2229 = vsel %vm707, 0.0, %v2170
        %v2230 = vsel %vm708, 0.0, %v2169
        %v2231 = vsel %vm709, 0.0, %v2168
        %v2232 = vrot.slane %v2104, 1
        %v2233 = vrot.slane %v2105, 1
        %v2234 = vrot.slane %v2106, 1
        %v2235 = vrot.slane %v2107, 1
        %v2236 = vrot.slane %v2108, 1
        %v2237 = vrot.slane %v2109, 1
        %v2238 = vrot.slane %v2110, 1
        %v2239 = vrot.slane %v2111, 1
        %v2240 = vrot.slane %v2112, 1
        %v2241 = vrot.slane %v2113, 1
        %v2242 = vrot.slane %v2114, 1
        %v2243 = vrot.slane %v2115, 1
        %v2244 = vrot.slane %v2116, 1
        %v2245 = vrot.slane %v2117, 1
        %v2246 = vrot.slane %v2118, 1
        %v2247 = vrot.slane %v2119, 1
        %v2248 = vrot.slane %v2120, 1
        %v2249 = vrot.slane %v2121, 1
        %v2250 = vrot.slane %v2122, 1
        %v2251 = vrot.slane %v2123, 1
        %v2252 = vrot.slane %v2124, 1
        %v2253 = vrot.slane %v2125, 1
        %v2254 = vrot.slane %v2126, 1
        %v2255 = vrot.slane %v2127, 1
        %v2256 = vrot.slane %v2128, 1
        %v2257 = vrot.slane %v2129, 1
        %v2258 = vrot.slane %v2130, 1
        %v2259 = vrot.slane %v2131, 1
        %v2260 = vrot.slane %v2132, 1
        %v2261 = vrot.slane %v2133, 1
        %v2262 = vrot.slane %v2134, 1
        %v2263 = vrot.slane %v2135, 1
        %v2264 = vsel %vm806, %v2262, %v2263
        %v2265 = vsel %vm806, %v2261, %v2262
        %v2266 = vsel %vm806, %v2260, %v2261
        %v2267 = vsel %vm806, %v2259, %v2260
        %v2268 = vsel %vm806, %v2258, %v2259
        %v2269 = vsel %vm806, %v2257, %v2258
        %v2270 = vsel %vm806, %v2256, %v2257
        %v2271 = vsel %vm806, %v2255, %v2256
        %v2272 = vsel %vm806, %v2254, %v2255
        %v2273 = vsel %vm806, %v2253, %v2254
        %v2274 = vsel %vm806, %v2252, %v2253
        %v2275 = vsel %vm806, %v2251, %v2252
        %v2276 = vsel %vm806, %v2250, %v2251
        %v2277 = vsel %vm806, %v2249, %v2250
        %v2278 = vsel %vm806, %v2248, %v2249
        %v2279 = vsel %vm806, %v2247, %v2248
        %v2280 = vsel %vm806, %v2246, %v2247
        %v2281 = vsel %vm806, %v2245, %v2246
        %v2282 = vsel %vm806, %v2244, %v2245
        %v2283 = vsel %vm806, %v2243, %v2244
        %v2284 = vsel %vm806, %v2242, %v2243
        %v2285 = vsel %vm806, %v2241, %v2242
        %v2286 = vsel %vm806, %v2240, %v2241
        %v2287 = vsel %vm806, %v2239, %v2240
        %v2288 = vsel %vm806, %v2238, %v2239
        %v2289 = vsel %vm806, %v2237, %v2238
        %v2290 = vsel %vm806, %v2236, %v2237
        %v2291 = vsel %vm806, %v2235, %v2236
        %v2292 = vsel %vm806, %v2234, %v2235
        %v2293 = vsel %vm806, %v2233, %v2234
        %v2294 = vsel %vm806, %v2232, %v2233
        %v2295 = vsel %vm806, %v2263, %v2232
        %v2296 = vsel %vm839, 0.0, %v2294
        %v2297 = vsel %vm840, 0.0, %v2293
        %v2298 = vsel %vm841, 0.0, %v2292
        %v2299 = vsel %vm842, 0.0, %v2291
        %v2300 = vsel %vm843, 0.0, %v2290
        %v2301 = vsel %vm844, 0.0, %v2289
        %v2302 = vsel %vm845, 0.0, %v2288
        %v2303 = vsel %vm846, 0.0, %v2287
        %v2304 = vsel %vm847, 0.0, %v2286
        %v2305 = vsel %vm848, 0.0, %v2285
        %v2306 = vsel %vm849, 0.0, %v2284
        %v2307 = vsel %vm850, 0.0, %v2283
        %v2308 = vsel %vm851, 0.0, %v2282
        %v2309 = vsel %vm852, 0.0, %v2281
        %v2310 = vsel %vm853, 0.0, %v2280
        %v2311 = vsel %vm854, 0.0, %v2279
        %v2312 = vsel %vm839, 0.0, %v2278
        %v2313 = vsel %vm840, 0.0, %v2277
        %v2314 = vsel %vm841, 0.0, %v2276
        %v2315 = vsel %vm842, 0.0, %v2275
        %v2316 = vsel %vm843, 0.0, %v2274
        %v2317 = vsel %vm844, 0.0, %v2273
        %v2318 = vsel %vm845, 0.0, %v2272
        %v2319 = vsel %vm846, 0.0, %v2271
        %v2320 = vsel %vm847, 0.0, %v2270
        %v2321 = vsel %vm848, 0.0, %v2269
        %v2322 = vsel %vm849, 0.0, %v2268
        %v2323 = vsel %vm850, 0.0, %v2267
        %v2324 = vsel %vm851, 0.0, %v2266
        %v2325 = vsel %vm852, 0.0, %v2265
        %v2326 = vsel %vm853, 0.0, %v2264
        %v2327 = vsel %vm854, 0.0, %v2295
        %v2328 = vpack.c.bf16 %v582, %v581
        %v2329 = vpack.c.bf16 %v584, %v583
        %v2330 = vpack.c.bf16 %v586, %v585
        %v2331 = vpack.c.bf16 %v588, %v587
        %v2332 = vpack.c.bf16 %v590, %v589
        %v2333 = vpack.c.bf16 %v592, %v591
        %v2334 = vpack.c.bf16 %v594, %v593
        %v2335 = vpack.c.bf16 %v596, %v595
        %v2336 = vpack.c.bf16 %v598, %v597
        %v2337 = vpack.c.bf16 %v600, %v599
        %v2338 = vpack.c.bf16 %v602, %v601
        %v2339 = vpack.c.bf16 %v604, %v603
        %v2340 = vpack.c.bf16 %v606, %v605
        %v2341 = vpack.c.bf16 %v608, %v607
        %v2342 = vpack.c.bf16 %v610, %v609
        %v2343 = vpack.c.bf16 %v612, %v611
        %v2344 = vld [vmem:[#allocation10] sm:$0xf]
        %v2345 = vld [vmem:[#allocation10 + $0x4] sm:$0xf]
        %v2346 = vld [vmem:[#allocation10 + $0x8] sm:$0xf]
        %v2347 = vld [vmem:[#allocation10 + $0xc] sm:$0xf]
        %v2348 = vld [vmem:[#allocation10 + $0x10] sm:$0xf]
        %v2349 = vld [vmem:[#allocation10 + $0x14] sm:$0xf]
        %v2350 = vld [vmem:[#allocation10 + $0x18] sm:$0xf]
        %v2351 = vld [vmem:[#allocation10 + $0x1c] sm:$0xf]
        %v2352 = vld [vmem:[#allocation10 + $0x20] sm:$0xf]
        %v2353 = vld [vmem:[#allocation10 + $0x24] sm:$0xf]
        %v2354 = vld [vmem:[#allocation10 + $0x28] sm:$0xf]
        %v2355 = vld [vmem:[#allocation10 + $0x2c] sm:$0xf]
        %v2356 = vld [vmem:[#allocation10 + $0x30] sm:$0xf]
        %v2357 = vld [vmem:[#allocation10 + $0x34] sm:$0xf]
        %v2358 = vld [vmem:[#allocation10 + $0x38] sm:$0xf]
        %v2359 = vld [vmem:[#allocation10 + $0x3c] sm:$0xf]
        %v2360 = vpack.c.bf16 %v2201, %v2200
        %v2361 = vpack.c.bf16 %v2203, %v2202
        %v2362 = vpack.c.bf16 %v2205, %v2204
        %v2363 = vpack.c.bf16 %v2207, %v2206
        %v2364 = vpack.c.bf16 %v2209, %v2208
        %v2365 = vpack.c.bf16 %v2211, %v2210
        %v2366 = vpack.c.bf16 %v2213, %v2212
        %v2367 = vpack.c.bf16 %v2215, %v2214
        %v2368 = vpack.c.bf16 %v2217, %v2216
        %v2369 = vpack.c.bf16 %v2219, %v2218
        %v2370 = vpack.c.bf16 %v2221, %v2220
        %v2371 = vpack.c.bf16 %v2223, %v2222
        %v2372 = vpack.c.bf16 %v2225, %v2224
        %v2373 = vpack.c.bf16 %v2227, %v2226
        %v2374 = vpack.c.bf16 %v2229, %v2228
        %v2375 = vpack.c.bf16 %v2231, %v2230
        %v2376 = vld [vmem:[#allocation11] sm:$0xf]
        %v2377 = vld [vmem:[#allocation11 + $0x4] sm:$0xf]
        %v2378 = vld [vmem:[#allocation11 + $0x8] sm:$0xf]
        %v2379 = vld [vmem:[#allocation11 + $0xc] sm:$0xf]
        %v2380 = vld [vmem:[#allocation11 + $0x10] sm:$0xf]
        %v2381 = vld [vmem:[#allocation11 + $0x14] sm:$0xf]
        %v2382 = vld [vmem:[#allocation11 + $0x18] sm:$0xf]
        %v2383 = vld [vmem:[#allocation11 + $0x1c] sm:$0xf]
        %v2384 = vld [vmem:[#allocation11 + $0x20] sm:$0xf]
        %v2385 = vld [vmem:[#allocation11 + $0x24] sm:$0xf]
        %v2386 = vld [vmem:[#allocation11 + $0x28] sm:$0xf]
        %v2387 = vld [vmem:[#allocation11 + $0x2c] sm:$0xf]
        %v2388 = vld [vmem:[#allocation11 + $0x30] sm:$0xf]
        %v2389 = vld [vmem:[#allocation11 + $0x34] sm:$0xf]
        %v2390 = vld [vmem:[#allocation11 + $0x38] sm:$0xf]
        %v2391 = vld [vmem:[#allocation11 + $0x3c] sm:$0xf]
        %v2408 = vunpack.c.l.b16 %v2376
        %v2409 = vunpack.c.l.b16 %v2377
        %v2410 = vunpack.c.l.b16 %v2378
        %v2411 = vunpack.c.l.b16 %v2379
        %v2412 = vunpack.c.l.b16 %v2380
        %v2413 = vunpack.c.l.b16 %v2381
        %v2414 = vunpack.c.l.b16 %v2382
        %v2415 = vunpack.c.l.b16 %v2383
        %v2416 = vunpack.c.l.b16 %v2384
        %v2417 = vunpack.c.l.b16 %v2385
        %v2418 = vunpack.c.l.b16 %v2386
        %v2419 = vunpack.c.l.b16 %v2387
        %v2420 = vunpack.c.l.b16 %v2388
        %v2421 = vunpack.c.l.b16 %v2389
        %v2422 = vunpack.c.l.b16 %v2390
        %v2423 = vunpack.c.l.b16 %v2391
        %v2424 = vpack.c.b16 %v2409, %v2408
        %v2425 = vpack.c.b16 %v2411, %v2410
        %v2426 = vpack.c.b16 %v2413, %v2412
        %v2427 = vpack.c.b16 %v2415, %v2414
        %v2428 = vpack.c.b16 %v2417, %v2416
        %v2429 = vpack.c.b16 %v2419, %v2418
        %v2430 = vpack.c.b16 %v2421, %v2420
        %v2431 = vpack.c.b16 %v2423, %v2422
        %2440 = vmatpush.bf16.msra.mxu0 %v2431
        %2441 = vmatpush.bf16.msra.mxu0 %v2430
        %2442 = vmatpush.bf16.msra.mxu0 %v2429
        %2443 = vmatpush.bf16.msra.mxu0 %v2428
        %2444 = vmatpush.bf16.msra.mxu0 %v2427
        %2445 = vmatpush.bf16.msra.mxu0 %v2426
        %2446 = vmatpush.bf16.msra.mxu0 %v2425
        %2447 = vmatpush.bf16.msra.mxu0 %v2424
        %2448 = vmatmul.bf16.gmra.mxu0 %v2360
        %v2449 = vpop.f32.mrf.mxu0
        %v2450 = vadd.f32 0.0, %v2449
        %v2451 = vpop.f32.mrf.mxu0
        %v2452 = vadd.f32 0.0, %v2451
        %2453 = vmatmul.bf16.gmra.mxu0 %v2361
        %v2454 = vpop.f32.mrf.mxu0
        %v2455 = vadd.f32 0.0, %v2454
        %v2456 = vpop.f32.mrf.mxu0
        %v2457 = vadd.f32 0.0, %v2456
        %2458 = vmatmul.bf16.gmra.mxu0 %v2362
        %v2459 = vpop.f32.mrf.mxu0
        %v2460 = vadd.f32 0.0, %v2459
        %v2461 = vpop.f32.mrf.mxu0
        %v2462 = vadd.f32 0.0, %v2461
        %2463 = vmatmul.bf16.gmra.mxu0 %v2363
        %v2464 = vpop.f32.mrf.mxu0
        %v2465 = vadd.f32 0.0, %v2464
        %v2466 = vpop.f32.mrf.mxu0
        %v2467 = vadd.f32 0.0, %v2466
        %2468 = vmatmul.bf16.gmra.mxu0 %v2364
        %v2469 = vpop.f32.mrf.mxu0
        %v2470 = vadd.f32 0.0, %v2469
        %v2471 = vpop.f32.mrf.mxu0
        %v2472 = vadd.f32 0.0, %v2471
        %2473 = vmatmul.bf16.gmra.mxu0 %v2365
        %v2474 = vpop.f32.mrf.mxu0
        %v2475 = vadd.f32 0.0, %v2474
        %v2476 = vpop.f32.mrf.mxu0
        %v2477 = vadd.f32 0.0, %v2476
        %2478 = vmatmul.bf16.gmra.mxu0 %v2366
        %v2479 = vpop.f32.mrf.mxu0
        %v2480 = vadd.f32 0.0, %v2479
        %v2481 = vpop.f32.mrf.mxu0
        %v2482 = vadd.f32 0.0, %v2481
        %2483 = vmatmul.bf16.gmra.mxu0 %v2367
        %v2484 = vpop.f32.mrf.mxu0
        %v2485 = vadd.f32 0.0, %v2484
        %v2486 = vpop.f32.mrf.mxu0
        %v2487 = vadd.f32 0.0, %v2486
        %2488 = vmatmul.bf16.gmra.mxu0 %v2368
        %v2489 = vpop.f32.mrf.mxu0
        %v2490 = vadd.f32 0.0, %v2489
        %v2491 = vpop.f32.mrf.mxu0
        %v2492 = vadd.f32 0.0, %v2491
        %2493 = vmatmul.bf16.gmra.mxu0 %v2369
        %v2494 = vpop.f32.mrf.mxu0
        %v2495 = vadd.f32 0.0, %v2494
        %v2496 = vpop.f32.mrf.mxu0
        %v2497 = vadd.f32 0.0, %v2496
        %2498 = vmatmul.bf16.gmra.mxu0 %v2370
        %v2499 = vpop.f32.mrf.mxu0
        %v2500 = vadd.f32 0.0, %v2499
        %v2501 = vpop.f32.mrf.mxu0
        %v2502 = vadd.f32 0.0, %v2501
        %2503 = vmatmul.bf16.gmra.mxu0 %v2371
        %v2504 = vpop.f32.mrf.mxu0
        %v2505 = vadd.f32 0.0, %v2504
        %v2506 = vpop.f32.mrf.mxu0
        %v2507 = vadd.f32 0.0, %v2506
        %2508 = vmatmul.bf16.gmra.mxu0 %v2372
        %v2509 = vpop.f32.mrf.mxu0
        %v2510 = vadd.f32 0.0, %v2509
        %v2511 = vpop.f32.mrf.mxu0
        %v2512 = vadd.f32 0.0, %v2511
        %2513 = vmatmul.bf16.gmra.mxu0 %v2373
        %v2514 = vpop.f32.mrf.mxu0
        %v2515 = vadd.f32 0.0, %v2514
        %v2516 = vpop.f32.mrf.mxu0
        %v2517 = vadd.f32 0.0, %v2516
        %2518 = vmatmul.bf16.gmra.mxu0 %v2374
        %v2519 = vpop.f32.mrf.mxu0
        %v2520 = vadd.f32 0.0, %v2519
        %v2521 = vpop.f32.mrf.mxu0
        %v2522 = vadd.f32 0.0, %v2521
        %2523 = vmatmul.bf16.gmra.mxu0 %v2375
        %v2524 = vpop.f32.mrf.mxu0
        %v2525 = vadd.f32 0.0, %v2524
        %v2526 = vpop.f32.mrf.mxu0
        %v2527 = vadd.f32 0.0, %v2526
        %2528 = vdwg.mxu0
        %v2545 = vunpack.c.l.b16 %v2344
        %v2546 = vunpack.c.l.b16 %v2345
        %v2547 = vunpack.c.l.b16 %v2346
        %v2548 = vunpack.c.l.b16 %v2347
        %v2549 = vunpack.c.l.b16 %v2348
        %v2550 = vunpack.c.l.b16 %v2349
        %v2551 = vunpack.c.l.b16 %v2350
        %v2552 = vunpack.c.l.b16 %v2351
        %v2553 = vunpack.c.l.b16 %v2352
        %v2554 = vunpack.c.l.b16 %v2353
        %v2555 = vunpack.c.l.b16 %v2354
        %v2556 = vunpack.c.l.b16 %v2355
        %v2557 = vunpack.c.l.b16 %v2356
        %v2558 = vunpack.c.l.b16 %v2357
        %v2559 = vunpack.c.l.b16 %v2358
        %v2560 = vunpack.c.l.b16 %v2359
        %v2561 = vpack.c.b16 %v2546, %v2545
        %v2562 = vpack.c.b16 %v2548, %v2547
        %v2563 = vpack.c.b16 %v2550, %v2549
        %v2564 = vpack.c.b16 %v2552, %v2551
        %v2565 = vpack.c.b16 %v2554, %v2553
        %v2566 = vpack.c.b16 %v2556, %v2555
        %v2567 = vpack.c.b16 %v2558, %v2557
        %v2568 = vpack.c.b16 %v2560, %v2559
        %2577 = vmatpush.bf16.msra.mxu0 %v2568
        %2578 = vmatpush.bf16.msra.mxu0 %v2567
        %2579 = vmatpush.bf16.msra.mxu0 %v2566
        %2580 = vmatpush.bf16.msra.mxu0 %v2565
        %2581 = vmatpush.bf16.msra.mxu0 %v2564
        %2582 = vmatpush.bf16.msra.mxu0 %v2563
        %2583 = vmatpush.bf16.msra.mxu0 %v2562
        %2584 = vmatpush.bf16.msra.mxu0 %v2561
        %2585 = vmatmul.bf16.gmra.mxu0 %v2328
        %v2586 = vpop.f32.mrf.mxu0
        %v2587 = vadd.f32 %v2450, %v2586
        %v2588 = vpop.f32.mrf.mxu0
        %v2589 = vadd.f32 %v2452, %v2588
        %2590 = vmatmul.bf16.gmra.mxu0 %v2329
        %v2591 = vpop.f32.mrf.mxu0
        %v2592 = vadd.f32 %v2455, %v2591
        %v2593 = vpop.f32.mrf.mxu0
        %v2594 = vadd.f32 %v2457, %v2593
        %2595 = vmatmul.bf16.gmra.mxu0 %v2330
        %v2596 = vpop.f32.mrf.mxu0
        %v2597 = vadd.f32 %v2460, %v2596
        %v2598 = vpop.f32.mrf.mxu0
        %v2599 = vadd.f32 %v2462, %v2598
        %2600 = vmatmul.bf16.gmra.mxu0 %v2331
        %v2601 = vpop.f32.mrf.mxu0
        %v2602 = vadd.f32 %v2465, %v2601
        %v2603 = vpop.f32.mrf.mxu0
        %v2604 = vadd.f32 %v2467, %v2603
        %2605 = vmatmul.bf16.gmra.mxu0 %v2332
        %v2606 = vpop.f32.mrf.mxu0
        %v2607 = vadd.f32 %v2470, %v2606
        %v2608 = vpop.f32.mrf.mxu0
        %v2609 = vadd.f32 %v2472, %v2608
        %2610 = vmatmul.bf16.gmra.mxu0 %v2333
        %v2611 = vpop.f32.mrf.mxu0
        %v2612 = vadd.f32 %v2475, %v2611
        %v2613 = vpop.f32.mrf.mxu0
        %v2614 = vadd.f32 %v2477, %v2613
        %2615 = vmatmul.bf16.gmra.mxu0 %v2334
        %v2616 = vpop.f32.mrf.mxu0
        %v2617 = vadd.f32 %v2480, %v2616
        %v2618 = vpop.f32.mrf.mxu0
        %v2619 = vadd.f32 %v2482, %v2618
        %2620 = vmatmul.bf16.gmra.mxu0 %v2335
        %v2621 = vpop.f32.mrf.mxu0
        %v2622 = vadd.f32 %v2485, %v2621
        %v2623 = vpop.f32.mrf.mxu0
        %v2624 = vadd.f32 %v2487, %v2623
        %2625 = vmatmul.bf16.gmra.mxu0 %v2336
        %v2626 = vpop.f32.mrf.mxu0
        %v2627 = vadd.f32 %v2490, %v2626
        %v2628 = vpop.f32.mrf.mxu0
        %v2629 = vadd.f32 %v2492, %v2628
        %2630 = vmatmul.bf16.gmra.mxu0 %v2337
        %v2631 = vpop.f32.mrf.mxu0
        %v2632 = vadd.f32 %v2495, %v2631
        %v2633 = vpop.f32.mrf.mxu0
        %v2634 = vadd.f32 %v2497, %v2633
        %2635 = vmatmul.bf16.gmra.mxu0 %v2338
        %v2636 = vpop.f32.mrf.mxu0
        %v2637 = vadd.f32 %v2500, %v2636
        %v2638 = vpop.f32.mrf.mxu0
        %v2639 = vadd.f32 %v2502, %v2638
        %2640 = vmatmul.bf16.gmra.mxu0 %v2339
        %v2641 = vpop.f32.mrf.mxu0
        %v2642 = vadd.f32 %v2505, %v2641
        %v2643 = vpop.f32.mrf.mxu0
        %v2644 = vadd.f32 %v2507, %v2643
        %2645 = vmatmul.bf16.gmra.mxu0 %v2340
        %v2646 = vpop.f32.mrf.mxu0
        %v2647 = vadd.f32 %v2510, %v2646
        %v2648 = vpop.f32.mrf.mxu0
        %v2649 = vadd.f32 %v2512, %v2648
        %2650 = vmatmul.bf16.gmra.mxu0 %v2341
        %v2651 = vpop.f32.mrf.mxu0
        %v2652 = vadd.f32 %v2515, %v2651
        %v2653 = vpop.f32.mrf.mxu0
        %v2654 = vadd.f32 %v2517, %v2653
        %2655 = vmatmul.bf16.gmra.mxu0 %v2342
        %v2656 = vpop.f32.mrf.mxu0
        %v2657 = vadd.f32 %v2520, %v2656
        %v2658 = vpop.f32.mrf.mxu0
        %v2659 = vadd.f32 %v2522, %v2658
        %2660 = vmatmul.bf16.gmra.mxu0 %v2343
        %v2661 = vpop.f32.mrf.mxu0
        %v2662 = vadd.f32 %v2525, %v2661
        %v2663 = vpop.f32.mrf.mxu0
        %v2664 = vadd.f32 %v2527, %v2663
        %2665 = vdwg.mxu0
        %v2666 = vpack.c.bf16 %v2297, %v2296
        %v2667 = vpack.c.bf16 %v2299, %v2298
        %v2668 = vpack.c.bf16 %v2301, %v2300
        %v2669 = vpack.c.bf16 %v2303, %v2302
        %v2670 = vpack.c.bf16 %v2305, %v2304
        %v2671 = vpack.c.bf16 %v2307, %v2306
        %v2672 = vpack.c.bf16 %v2309, %v2308
        %v2673 = vpack.c.bf16 %v2311, %v2310
        %v2674 = vpack.c.bf16 %v2313, %v2312
        %v2675 = vpack.c.bf16 %v2315, %v2314
        %v2676 = vpack.c.bf16 %v2317, %v2316
        %v2677 = vpack.c.bf16 %v2319, %v2318
        %v2678 = vpack.c.bf16 %v2321, %v2320
        %v2679 = vpack.c.bf16 %v2323, %v2322
        %v2680 = vpack.c.bf16 %v2325, %v2324
        %v2681 = vpack.c.bf16 %v2327, %v2326
        %v2682 = vld [vmem:[#allocation13] sm:$0xf]
        %v2683 = vld [vmem:[#allocation13 + $0x4] sm:$0xf]
        %v2684 = vld [vmem:[#allocation13 + $0x8] sm:$0xf]
        %v2685 = vld [vmem:[#allocation13 + $0xc] sm:$0xf]
        %v2686 = vld [vmem:[#allocation13 + $0x10] sm:$0xf]
        %v2687 = vld [vmem:[#allocation13 + $0x14] sm:$0xf]
        %v2688 = vld [vmem:[#allocation13 + $0x18] sm:$0xf]
        %v2689 = vld [vmem:[#allocation13 + $0x1c] sm:$0xf]
        %v2690 = vld [vmem:[#allocation13 + $0x20] sm:$0xf]
        %v2691 = vld [vmem:[#allocation13 + $0x24] sm:$0xf]
        %v2692 = vld [vmem:[#allocation13 + $0x28] sm:$0xf]
        %v2693 = vld [vmem:[#allocation13 + $0x2c] sm:$0xf]
        %v2694 = vld [vmem:[#allocation13 + $0x30] sm:$0xf]
        %v2695 = vld [vmem:[#allocation13 + $0x34] sm:$0xf]
        %v2696 = vld [vmem:[#allocation13 + $0x38] sm:$0xf]
        %v2697 = vld [vmem:[#allocation13 + $0x3c] sm:$0xf]
        %v2714 = vunpack.c.l.b16 %v2682
        %v2715 = vunpack.c.l.b16 %v2683
        %v2716 = vunpack.c.l.b16 %v2684
        %v2717 = vunpack.c.l.b16 %v2685
        %v2718 = vunpack.c.l.b16 %v2686
        %v2719 = vunpack.c.l.b16 %v2687
        %v2720 = vunpack.c.l.b16 %v2688
        %v2721 = vunpack.c.l.b16 %v2689
        %v2722 = vunpack.c.l.b16 %v2690
        %v2723 = vunpack.c.l.b16 %v2691
        %v2724 = vunpack.c.l.b16 %v2692
        %v2725 = vunpack.c.l.b16 %v2693
        %v2726 = vunpack.c.l.b16 %v2694
        %v2727 = vunpack.c.l.b16 %v2695
        %v2728 = vunpack.c.l.b16 %v2696
        %v2729 = vunpack.c.l.b16 %v2697
        %v2730 = vpack.c.b16 %v2715, %v2714
        %v2731 = vpack.c.b16 %v2717, %v2716
        %v2732 = vpack.c.b16 %v2719, %v2718
        %v2733 = vpack.c.b16 %v2721, %v2720
        %v2734 = vpack.c.b16 %v2723, %v2722
        %v2735 = vpack.c.b16 %v2725, %v2724
        %v2736 = vpack.c.b16 %v2727, %v2726
        %v2737 = vpack.c.b16 %v2729, %v2728
        %2746 = vmatpush.bf16.msra.mxu0 %v2737
        %2747 = vmatpush.bf16.msra.mxu0 %v2736
        %2748 = vmatpush.bf16.msra.mxu0 %v2735
        %2749 = vmatpush.bf16.msra.mxu0 %v2734
        %2750 = vmatpush.bf16.msra.mxu0 %v2733
        %2751 = vmatpush.bf16.msra.mxu0 %v2732
        %2752 = vmatpush.bf16.msra.mxu0 %v2731
        %2753 = vmatpush.bf16.msra.mxu0 %v2730
        %2754 = vmatmul.bf16.gmra.mxu0 %v2666
        %v2755 = vpop.f32.mrf.mxu0
        %v2756 = vadd.f32 0.0, %v2755
        %v2757 = vpop.f32.mrf.mxu0
        %v2758 = vadd.f32 0.0, %v2757
        %2759 = vmatmul.bf16.gmra.mxu0 %v2667
        %v2760 = vpop.f32.mrf.mxu0
        %v2761 = vadd.f32 0.0, %v2760
        %v2762 = vpop.f32.mrf.mxu0
        %v2763 = vadd.f32 0.0, %v2762
        %2764 = vmatmul.bf16.gmra.mxu0 %v2668
        %v2765 = vpop.f32.mrf.mxu0
        %v2766 = vadd.f32 0.0, %v2765
        %v2767 = vpop.f32.mrf.mxu0
        %v2768 = vadd.f32 0.0, %v2767
        %2769 = vmatmul.bf16.gmra.mxu0 %v2669
        %v2770 = vpop.f32.mrf.mxu0
        %v2771 = vadd.f32 0.0, %v2770
        %v2772 = vpop.f32.mrf.mxu0
        %v2773 = vadd.f32 0.0, %v2772
        %2774 = vmatmul.bf16.gmra.mxu0 %v2670
        %v2775 = vpop.f32.mrf.mxu0
        %v2776 = vadd.f32 0.0, %v2775
        %v2777 = vpop.f32.mrf.mxu0
        %v2778 = vadd.f32 0.0, %v2777
        %2779 = vmatmul.bf16.gmra.mxu0 %v2671
        %v2780 = vpop.f32.mrf.mxu0
        %v2781 = vadd.f32 0.0, %v2780
        %v2782 = vpop.f32.mrf.mxu0
        %v2783 = vadd.f32 0.0, %v2782
        %2784 = vmatmul.bf16.gmra.mxu0 %v2672
        %v2785 = vpop.f32.mrf.mxu0
        %v2786 = vadd.f32 0.0, %v2785
        %v2787 = vpop.f32.mrf.mxu0
        %v2788 = vadd.f32 0.0, %v2787
        %2789 = vmatmul.bf16.gmra.mxu0 %v2673
        %v2790 = vpop.f32.mrf.mxu0
        %v2791 = vadd.f32 0.0, %v2790
        %v2792 = vpop.f32.mrf.mxu0
        %v2793 = vadd.f32 0.0, %v2792
        %2794 = vmatmul.bf16.gmra.mxu0 %v2674
        %v2795 = vpop.f32.mrf.mxu0
        %v2796 = vadd.f32 0.0, %v2795
        %v2797 = vpop.f32.mrf.mxu0
        %v2798 = vadd.f32 0.0, %v2797
        %2799 = vmatmul.bf16.gmra.mxu0 %v2675
        %v2800 = vpop.f32.mrf.mxu0
        %v2801 = vadd.f32 0.0, %v2800
        %v2802 = vpop.f32.mrf.mxu0
        %v2803 = vadd.f32 0.0, %v2802
        %2804 = vmatmul.bf16.gmra.mxu0 %v2676
        %v2805 = vpop.f32.mrf.mxu0
        %v2806 = vadd.f32 0.0, %v2805
        %v2807 = vpop.f32.mrf.mxu0
        %v2808 = vadd.f32 0.0, %v2807
        %2809 = vmatmul.bf16.gmra.mxu0 %v2677
        %v2810 = vpop.f32.mrf.mxu0
        %v2811 = vadd.f32 0.0, %v2810
        %v2812 = vpop.f32.mrf.mxu0
        %v2813 = vadd.f32 0.0, %v2812
        %2814 = vmatmul.bf16.gmra.mxu0 %v2678
        %v2815 = vpop.f32.mrf.mxu0
        %v2816 = vadd.f32 0.0, %v2815
        %v2817 = vpop.f32.mrf.mxu0
        %v2818 = vadd.f32 0.0, %v2817
        %2819 = vmatmul.bf16.gmra.mxu0 %v2679
        %v2820 = vpop.f32.mrf.mxu0
        %v2821 = vadd.f32 0.0, %v2820
        %v2822 = vpop.f32.mrf.mxu0
        %v2823 = vadd.f32 0.0, %v2822
        %2824 = vmatmul.bf16.gmra.mxu0 %v2680
        %v2825 = vpop.f32.mrf.mxu0
        %v2826 = vadd.f32 0.0, %v2825
        %v2827 = vpop.f32.mrf.mxu0
        %v2828 = vadd.f32 0.0, %v2827
        %2829 = vmatmul.bf16.gmra.mxu0 %v2681
        %v2830 = vpop.f32.mrf.mxu0
        %v2831 = vadd.f32 0.0, %v2830
        %v2832 = vpop.f32.mrf.mxu0
        %v2833 = vadd.f32 0.0, %v2832
        %2834 = vdwg.mxu0
        %v2835 = vadd.f32 %v2587, %v2756
        %v2836 = vadd.f32 %v2589, %v2758
        %v2837 = vadd.f32 %v2592, %v2761
        %v2838 = vadd.f32 %v2594, %v2763
        %v2839 = vadd.f32 %v2597, %v2766
        %v2840 = vadd.f32 %v2599, %v2768
        %v2841 = vadd.f32 %v2602, %v2771
        %v2842 = vadd.f32 %v2604, %v2773
        %v2843 = vadd.f32 %v2607, %v2776
        %v2844 = vadd.f32 %v2609, %v2778
        %v2845 = vadd.f32 %v2612, %v2781
        %v2846 = vadd.f32 %v2614, %v2783
        %v2847 = vadd.f32 %v2617, %v2786
        %v2848 = vadd.f32 %v2619, %v2788
        %v2849 = vadd.f32 %v2622, %v2791
        %v2850 = vadd.f32 %v2624, %v2793
        %v2851 = vadd.f32 %v2627, %v2796
        %v2852 = vadd.f32 %v2629, %v2798
        %v2853 = vadd.f32 %v2632, %v2801
        %v2854 = vadd.f32 %v2634, %v2803
        %v2855 = vadd.f32 %v2637, %v2806
        %v2856 = vadd.f32 %v2639, %v2808
        %v2857 = vadd.f32 %v2642, %v2811
        %v2858 = vadd.f32 %v2644, %v2813
        %v2859 = vadd.f32 %v2647, %v2816
        %v2860 = vadd.f32 %v2649, %v2818
        %v2861 = vadd.f32 %v2652, %v2821
        %v2862 = vadd.f32 %v2654, %v2823
        %v2863 = vadd.f32 %v2657, %v2826
        %v2864 = vadd.f32 %v2659, %v2828
        %v2865 = vadd.f32 %v2662, %v2831
        %v2866 = vadd.f32 %v2664, %v2833
        %v2867 = vld [vmem:[%s9] sm:$0x1]
        %v2869 = vperm.slane %v2867, 0
        %v2871 = vadd.f32 %v2835, %v2869
        %v2872 = vadd.f32 %v2836, %v2869
        %v2873 = vadd.f32 %v2837, %v2869
        %v2874 = vadd.f32 %v2838, %v2869
        %v2875 = vadd.f32 %v2839, %v2869
        %v2876 = vadd.f32 %v2840, %v2869
        %v2877 = vadd.f32 %v2841, %v2869
        %v2878 = vadd.f32 %v2842, %v2869
        %v2879 = vadd.f32 %v2843, %v2869
        %v2880 = vadd.f32 %v2844, %v2869
        %v2881 = vadd.f32 %v2845, %v2869
        %v2882 = vadd.f32 %v2846, %v2869
        %v2883 = vadd.f32 %v2847, %v2869
        %v2884 = vadd.f32 %v2848, %v2869
        %v2885 = vadd.f32 %v2849, %v2869
        %v2886 = vadd.f32 %v2850, %v2869
        %v2887 = vadd.f32 %v2851, %v2869
        %v2888 = vadd.f32 %v2852, %v2869
        %v2889 = vadd.f32 %v2853, %v2869
        %v2890 = vadd.f32 %v2854, %v2869
        %v2891 = vadd.f32 %v2855, %v2869
        %v2892 = vadd.f32 %v2856, %v2869
        %v2893 = vadd.f32 %v2857, %v2869
        %v2894 = vadd.f32 %v2858, %v2869
        %v2895 = vadd.f32 %v2859, %v2869
        %v2896 = vadd.f32 %v2860, %v2869
        %v2897 = vadd.f32 %v2861, %v2869
        %v2898 = vadd.f32 %v2862, %v2869
        %v2899 = vadd.f32 %v2863, %v2869
        %v2900 = vadd.f32 %v2864, %v2869
        %v2901 = vadd.f32 %v2865, %v2869
        %v2902 = vadd.f32 %v2866, %v2869
        %v2903 = vmax.f32 %v2871, 0.0
        %v2904 = vmax.f32 %v2872, 0.0
        %v2905 = vmax.f32 %v2873, 0.0
        %v2906 = vmax.f32 %v2874, 0.0
        %v2907 = vmax.f32 %v2875, 0.0
        %v2908 = vmax.f32 %v2876, 0.0
        %v2909 = vmax.f32 %v2877, 0.0
        %v2910 = vmax.f32 %v2878, 0.0
        %v2911 = vmax.f32 %v2879, 0.0
        %v2912 = vmax.f32 %v2880, 0.0
        %v2913 = vmax.f32 %v2881, 0.0
        %v2914 = vmax.f32 %v2882, 0.0
        %v2915 = vmax.f32 %v2883, 0.0
        %v2916 = vmax.f32 %v2884, 0.0
        %v2917 = vmax.f32 %v2885, 0.0
        %v2918 = vmax.f32 %v2886, 0.0
        %v2919 = vmax.f32 %v2887, 0.0
        %v2920 = vmax.f32 %v2888, 0.0
        %v2921 = vmax.f32 %v2889, 0.0
        %v2922 = vmax.f32 %v2890, 0.0
        %v2923 = vmax.f32 %v2891, 0.0
        %v2924 = vmax.f32 %v2892, 0.0
        %v2925 = vmax.f32 %v2893, 0.0
        %v2926 = vmax.f32 %v2894, 0.0
        %v2927 = vmax.f32 %v2895, 0.0
        %v2928 = vmax.f32 %v2896, 0.0
        %v2929 = vmax.f32 %v2897, 0.0
        %v2930 = vmax.f32 %v2898, 0.0
        %v2931 = vmax.f32 %v2899, 0.0
        %v2932 = vmax.f32 %v2900, 0.0
        %v2933 = vmax.f32 %v2901, 0.0
        %v2934 = vmax.f32 %v2902, 0.0
        %v2935 = vpack.c.bf16 %v2904, %v2903
        %v2936 = vpack.c.bf16 %v2906, %v2905
        %v2937 = vpack.c.bf16 %v2908, %v2907
        %v2938 = vpack.c.bf16 %v2910, %v2909
        %v2939 = vpack.c.bf16 %v2912, %v2911
        %v2940 = vpack.c.bf16 %v2914, %v2913
        %v2941 = vpack.c.bf16 %v2916, %v2915
        %v2942 = vpack.c.bf16 %v2918, %v2917
        %v2943 = vpack.c.bf16 %v2920, %v2919
        %v2944 = vpack.c.bf16 %v2922, %v2921
        %v2945 = vpack.c.bf16 %v2924, %v2923
        %v2946 = vpack.c.bf16 %v2926, %v2925
        %v2947 = vpack.c.bf16 %v2928, %v2927
        %v2948 = vpack.c.bf16 %v2930, %v2929
        %v2949 = vpack.c.bf16 %v2932, %v2931
        %v2950 = vpack.c.bf16 %v2934, %v2933
        %v2951 = vld [vmem:[#allocation14] sm:$0xf]
        %v2952 = vld [vmem:[#allocation14 + $0x4] sm:$0xf]
        %v2953 = vld [vmem:[#allocation14 + $0x8] sm:$0xf]
        %v2954 = vld [vmem:[#allocation14 + $0xc] sm:$0xf]
        %v2955 = vld [vmem:[#allocation14 + $0x10] sm:$0xf]
        %v2956 = vld [vmem:[#allocation14 + $0x14] sm:$0xf]
        %v2957 = vld [vmem:[#allocation14 + $0x18] sm:$0xf]
        %v2958 = vld [vmem:[#allocation14 + $0x1c] sm:$0xf]
        %v2959 = vld [vmem:[#allocation14 + $0x20] sm:$0xf]
        %v2960 = vld [vmem:[#allocation14 + $0x24] sm:$0xf]
        %v2961 = vld [vmem:[#allocation14 + $0x28] sm:$0xf]
        %v2962 = vld [vmem:[#allocation14 + $0x2c] sm:$0xf]
        %v2963 = vld [vmem:[#allocation14 + $0x30] sm:$0xf]
        %v2964 = vld [vmem:[#allocation14 + $0x34] sm:$0xf]
        %v2965 = vld [vmem:[#allocation14 + $0x38] sm:$0xf]
        %v2966 = vld [vmem:[#allocation14 + $0x3c] sm:$0xf]
        %v2967 = vld [vmem:[%s11] sm:$0x1]
        %v2969 = vperm.slane %v2967, 0
        %v2987 = vunpack.c.l.b16 %v2951
        %v2988 = vunpack.c.l.b16 %v2952
        %v2989 = vunpack.c.l.b16 %v2953
        %v2990 = vunpack.c.l.b16 %v2954
        %v2991 = vunpack.c.l.b16 %v2955
        %v2992 = vunpack.c.l.b16 %v2956
        %v2993 = vunpack.c.l.b16 %v2957
        %v2994 = vunpack.c.l.b16 %v2958
        %v2995 = vunpack.c.l.b16 %v2959
        %v2996 = vunpack.c.l.b16 %v2960
        %v2997 = vunpack.c.l.b16 %v2961
        %v2998 = vunpack.c.l.b16 %v2962
        %v2999 = vunpack.c.l.b16 %v2963
        %v3000 = vunpack.c.l.b16 %v2964
        %v3001 = vunpack.c.l.b16 %v2965
        %v3002 = vunpack.c.l.b16 %v2966
        %v3003 = vpack.c.b16 %v2988, %v2987
        %v3004 = vpack.c.b16 %v2990, %v2989
        %v3005 = vpack.c.b16 %v2992, %v2991
        %v3006 = vpack.c.b16 %v2994, %v2993
        %v3007 = vpack.c.b16 %v2996, %v2995
        %v3008 = vpack.c.b16 %v2998, %v2997
        %v3009 = vpack.c.b16 %v3000, %v2999
        %v3010 = vpack.c.b16 %v3002, %v3001
        %3019 = vmatpush.bf16.msra.mxu0 %v3010
        %3020 = vmatpush.bf16.msra.mxu0 %v3009
        %3021 = vmatpush.bf16.msra.mxu0 %v3008
        %3022 = vmatpush.bf16.msra.mxu0 %v3007
        %3023 = vmatpush.bf16.msra.mxu0 %v3006
        %3024 = vmatpush.bf16.msra.mxu0 %v3005
        %3025 = vmatpush.bf16.msra.mxu0 %v3004
        %3026 = vmatpush.bf16.msra.mxu0 %v3003
        %3027 = vmatmul.bf16.gmra.mxu0 %v2935
        %v3028 = vpop.f32.mrf.mxu0
        %v3029 = vadd.f32 %v2969, %v3028
        %v3030 = vpop.f32.mrf.mxu0
        %v3031 = vadd.f32 %v2969, %v3030
        %3032 = vmatmul.bf16.gmra.mxu0 %v2936
        %v3033 = vpop.f32.mrf.mxu0
        %v3034 = vadd.f32 %v2969, %v3033
        %v3035 = vpop.f32.mrf.mxu0
        %v3036 = vadd.f32 %v2969, %v3035
        %3037 = vmatmul.bf16.gmra.mxu0 %v2937
        %v3038 = vpop.f32.mrf.mxu0
        %v3039 = vadd.f32 %v2969, %v3038
        %v3040 = vpop.f32.mrf.mxu0
        %v3041 = vadd.f32 %v2969, %v3040
        %3042 = vmatmul.bf16.gmra.mxu0 %v2938
        %v3043 = vpop.f32.mrf.mxu0
        %v3044 = vadd.f32 %v2969, %v3043
        %v3045 = vpop.f32.mrf.mxu0
        %v3046 = vadd.f32 %v2969, %v3045
        %3047 = vmatmul.bf16.gmra.mxu0 %v2939
        %v3048 = vpop.f32.mrf.mxu0
        %v3049 = vadd.f32 %v2969, %v3048
        %v3050 = vpop.f32.mrf.mxu0
        %v3051 = vadd.f32 %v2969, %v3050
        %3052 = vmatmul.bf16.gmra.mxu0 %v2940
        %v3053 = vpop.f32.mrf.mxu0
        %v3054 = vadd.f32 %v2969, %v3053
        %v3055 = vpop.f32.mrf.mxu0
        %v3056 = vadd.f32 %v2969, %v3055
        %3057 = vmatmul.bf16.gmra.mxu0 %v2941
        %v3058 = vpop.f32.mrf.mxu0
        %v3059 = vadd.f32 %v2969, %v3058
        %v3060 = vpop.f32.mrf.mxu0
        %v3061 = vadd.f32 %v2969, %v3060
        %3062 = vmatmul.bf16.gmra.mxu0 %v2942
        %v3063 = vpop.f32.mrf.mxu0
        %v3064 = vadd.f32 %v2969, %v3063
        %v3065 = vpop.f32.mrf.mxu0
        %v3066 = vadd.f32 %v2969, %v3065
        %3067 = vmatmul.bf16.gmra.mxu0 %v2943
        %v3068 = vpop.f32.mrf.mxu0
        %v3069 = vadd.f32 %v2969, %v3068
        %v3070 = vpop.f32.mrf.mxu0
        %v3071 = vadd.f32 %v2969, %v3070
        %3072 = vmatmul.bf16.gmra.mxu0 %v2944
        %v3073 = vpop.f32.mrf.mxu0
        %v3074 = vadd.f32 %v2969, %v3073
        %v3075 = vpop.f32.mrf.mxu0
        %v3076 = vadd.f32 %v2969, %v3075
        %3077 = vmatmul.bf16.gmra.mxu0 %v2945
        %v3078 = vpop.f32.mrf.mxu0
        %v3079 = vadd.f32 %v2969, %v3078
        %v3080 = vpop.f32.mrf.mxu0
        %v3081 = vadd.f32 %v2969, %v3080
        %3082 = vmatmul.bf16.gmra.mxu0 %v2946
        %v3083 = vpop.f32.mrf.mxu0
        %v3084 = vadd.f32 %v2969, %v3083
        %v3085 = vpop.f32.mrf.mxu0
        %v3086 = vadd.f32 %v2969, %v3085
        %3087 = vmatmul.bf16.gmra.mxu0 %v2947
        %v3088 = vpop.f32.mrf.mxu0
        %v3089 = vadd.f32 %v2969, %v3088
        %v3090 = vpop.f32.mrf.mxu0
        %v3091 = vadd.f32 %v2969, %v3090
        %3092 = vmatmul.bf16.gmra.mxu0 %v2948
        %v3093 = vpop.f32.mrf.mxu0
        %v3094 = vadd.f32 %v2969, %v3093
        %v3095 = vpop.f32.mrf.mxu0
        %v3096 = vadd.f32 %v2969, %v3095
        %3097 = vmatmul.bf16.gmra.mxu0 %v2949
        %v3098 = vpop.f32.mrf.mxu0
        %v3099 = vadd.f32 %v2969, %v3098
        %v3100 = vpop.f32.mrf.mxu0
        %v3101 = vadd.f32 %v2969, %v3100
        %3102 = vmatmul.bf16.gmra.mxu0 %v2950
        %v3103 = vpop.f32.mrf.mxu0
        %v3104 = vadd.f32 %v2969, %v3103
        %v3105 = vpop.f32.mrf.mxu0
        %v3106 = vadd.f32 %v2969, %v3105
        %3107 = vdwg.mxu0
        %v3108 = vpack.c.bf16 %v580, %v579
        %v3109 = vld [vmem:[#allocation7] sm:$0xf]
        %v3110 = vld [vmem:[#allocation7 + $0x4] sm:$0xf]
        %v3111 = vld [vmem:[#allocation7 + $0x8] sm:$0xf]
        %v3112 = vld [vmem:[#allocation7 + $0xc] sm:$0xf]
        %v3113 = vld [vmem:[#allocation7 + $0x10] sm:$0xf]
        %v3114 = vld [vmem:[#allocation7 + $0x14] sm:$0xf]
        %v3115 = vld [vmem:[#allocation7 + $0x18] sm:$0xf]
        %v3116 = vld [vmem:[#allocation7 + $0x1c] sm:$0xf]
        %v3117 = vld [vmem:[#allocation7 + $0x20] sm:$0xf]
        %v3118 = vld [vmem:[#allocation7 + $0x24] sm:$0xf]
        %v3119 = vld [vmem:[#allocation7 + $0x28] sm:$0xf]
        %v3120 = vld [vmem:[#allocation7 + $0x2c] sm:$0xf]
        %v3121 = vld [vmem:[#allocation7 + $0x30] sm:$0xf]
        %v3122 = vld [vmem:[#allocation7 + $0x34] sm:$0xf]
        %v3123 = vld [vmem:[#allocation7 + $0x38] sm:$0xf]
        %v3124 = vld [vmem:[#allocation7 + $0x3c] sm:$0xf]
        %v3125 = vld [vmem:[%s3] sm:$0x1]
        %v3127 = vperm.slane %v3125, 0
        %v3145 = vunpack.c.l.b16 %v3109
        %v3146 = vunpack.c.l.b16 %v3110
        %v3147 = vunpack.c.l.b16 %v3111
        %v3148 = vunpack.c.l.b16 %v3112
        %v3149 = vunpack.c.l.b16 %v3113
        %v3150 = vunpack.c.l.b16 %v3114
        %v3151 = vunpack.c.l.b16 %v3115
        %v3152 = vunpack.c.l.b16 %v3116
        %v3153 = vunpack.c.l.b16 %v3117
        %v3154 = vunpack.c.l.b16 %v3118
        %v3155 = vunpack.c.l.b16 %v3119
        %v3156 = vunpack.c.l.b16 %v3120
        %v3157 = vunpack.c.l.b16 %v3121
        %v3158 = vunpack.c.l.b16 %v3122
        %v3159 = vunpack.c.l.b16 %v3123
        %v3160 = vunpack.c.l.b16 %v3124
        %v3161 = vpack.c.b16 %v3146, %v3145
        %v3162 = vpack.c.b16 %v3148, %v3147
        %v3163 = vpack.c.b16 %v3150, %v3149
        %v3164 = vpack.c.b16 %v3152, %v3151
        %v3165 = vpack.c.b16 %v3154, %v3153
        %v3166 = vpack.c.b16 %v3156, %v3155
        %v3167 = vpack.c.b16 %v3158, %v3157
        %v3168 = vpack.c.b16 %v3160, %v3159
        %3177 = vmatpush.bf16.msra.mxu0 %v3168
        %3178 = vmatpush.bf16.msra.mxu0 %v3167
        %3179 = vmatpush.bf16.msra.mxu0 %v3166
        %3180 = vmatpush.bf16.msra.mxu0 %v3165
        %3181 = vmatpush.bf16.msra.mxu0 %v3164
        %3182 = vmatpush.bf16.msra.mxu0 %v3163
        %3183 = vmatpush.bf16.msra.mxu0 %v3162
        %3184 = vmatpush.bf16.msra.mxu0 %v3161
        %3185 = vmatmul.bf16.gmra.mxu0 %v3108
        %v3186 = vpop.f32.mrf.mxu0
        %v3187 = vadd.f32 %v3127, %v3186
        %v3188 = vpop.f32.mrf.mxu0
        %v3189 = vadd.f32 %v3127, %v3188
        %3190 = vdwg.mxu0
        %v3191 = vmax.f32 %v3187, 0.0
        %v3192 = vmax.f32 %v3189, 0.0
        %v3193 = vpack.c.bf16 %v3192, %v3191
        %v3194 = vld [vmem:[#allocation8] sm:$0xf]
        %v3195 = vld [vmem:[#allocation8 + $0x4] sm:$0xf]
        %v3196 = vld [vmem:[#allocation8 + $0x8] sm:$0xf]
        %v3197 = vld [vmem:[#allocation8 + $0xc] sm:$0xf]
        %v3198 = vld [vmem:[#allocation8 + $0x10] sm:$0xf]
        %v3199 = vld [vmem:[#allocation8 + $0x14] sm:$0xf]
        %v3200 = vld [vmem:[#allocation8 + $0x18] sm:$0xf]
        %v3201 = vld [vmem:[#allocation8 + $0x1c] sm:$0xf]
        %v3202 = vld [vmem:[#allocation8 + $0x20] sm:$0xf]
        %v3203 = vld [vmem:[#allocation8 + $0x24] sm:$0xf]
        %v3204 = vld [vmem:[#allocation8 + $0x28] sm:$0xf]
        %v3205 = vld [vmem:[#allocation8 + $0x2c] sm:$0xf]
        %v3206 = vld [vmem:[#allocation8 + $0x30] sm:$0xf]
        %v3207 = vld [vmem:[#allocation8 + $0x34] sm:$0xf]
        %v3208 = vld [vmem:[#allocation8 + $0x38] sm:$0xf]
        %v3209 = vld [vmem:[#allocation8 + $0x3c] sm:$0xf]
        %v3210 = vld [vmem:[%s5] sm:$0x1]
        %v3212 = vperm.slane %v3210, 0
        %v3230 = vunpack.c.l.b16 %v3194
        %v3231 = vunpack.c.l.b16 %v3195
        %v3232 = vunpack.c.l.b16 %v3196
        %v3233 = vunpack.c.l.b16 %v3197
        %v3234 = vunpack.c.l.b16 %v3198
        %v3235 = vunpack.c.l.b16 %v3199
        %v3236 = vunpack.c.l.b16 %v3200
        %v3237 = vunpack.c.l.b16 %v3201
        %v3238 = vunpack.c.l.b16 %v3202
        %v3239 = vunpack.c.l.b16 %v3203
        %v3240 = vunpack.c.l.b16 %v3204
        %v3241 = vunpack.c.l.b16 %v3205
        %v3242 = vunpack.c.l.b16 %v3206
        %v3243 = vunpack.c.l.b16 %v3207
        %v3244 = vunpack.c.l.b16 %v3208
        %v3245 = vunpack.c.l.b16 %v3209
        %v3246 = vpack.c.b16 %v3231, %v3230
        %v3247 = vpack.c.b16 %v3233, %v3232
        %v3248 = vpack.c.b16 %v3235, %v3234
        %v3249 = vpack.c.b16 %v3237, %v3236
        %v3250 = vpack.c.b16 %v3239, %v3238
        %v3251 = vpack.c.b16 %v3241, %v3240
        %v3252 = vpack.c.b16 %v3243, %v3242
        %v3253 = vpack.c.b16 %v3245, %v3244
        %3262 = vmatpush.bf16.msra.mxu0 %v3253
        %3263 = vmatpush.bf16.msra.mxu0 %v3252
        %3264 = vmatpush.bf16.msra.mxu0 %v3251
        %3265 = vmatpush.bf16.msra.mxu0 %v3250
        %3266 = vmatpush.bf16.msra.mxu0 %v3249
        %3267 = vmatpush.bf16.msra.mxu0 %v3248
        %3268 = vmatpush.bf16.msra.mxu0 %v3247
        %3269 = vmatpush.bf16.msra.mxu0 %v3246
        %3270 = vmatmul.bf16.gmra.mxu0 %v3193
        %v3271 = vpop.f32.mrf.mxu0
        %v3272 = vadd.f32 %v3212, %v3271
        %v3273 = vpop.f32.mrf.mxu0
        %v3274 = vadd.f32 %v3212, %v3273
        %3275 = vdwg.mxu0
        %v3276 = vpack.c.bf16 %v3272, %v3272
        %v3277 = vpack.c.bf16 %v3274, %v3274
        %v3278 = vpack.c.bf16 %v3029, %v3029
        %v3279 = vpack.c.bf16 %v3031, %v3031
        %v3280 = vpack.c.bf16 %v3034, %v3034
        %v3281 = vpack.c.bf16 %v3036, %v3036
        %v3282 = vpack.c.bf16 %v3039, %v3039
        %v3283 = vpack.c.bf16 %v3041, %v3041
        %v3284 = vpack.c.bf16 %v3044, %v3044
        %v3285 = vpack.c.bf16 %v3046, %v3046
        %v3286 = vpack.c.bf16 %v3049, %v3049
        %v3287 = vpack.c.bf16 %v3051, %v3051
        %v3288 = vpack.c.bf16 %v3054, %v3054
        %v3289 = vpack.c.bf16 %v3056, %v3056
        %v3290 = vpack.c.bf16 %v3059, %v3059
        %v3291 = vpack.c.bf16 %v3061, %v3061
        %v3292 = vpack.c.bf16 %v3064, %v3064
        %v3293 = vpack.c.bf16 %v3066, %v3066
        %v3294 = vpack.c.bf16 %v3069, %v3069
        %v3295 = vpack.c.bf16 %v3071, %v3071
        %v3296 = vpack.c.bf16 %v3074, %v3074
        %v3297 = vpack.c.bf16 %v3076, %v3076
        %v3298 = vpack.c.bf16 %v3079, %v3079
        %v3299 = vpack.c.bf16 %v3081, %v3081
        %v3300 = vpack.c.bf16 %v3084, %v3084
        %v3301 = vpack.c.bf16 %v3086, %v3086
        %v3302 = vpack.c.bf16 %v3089, %v3089
        %v3303 = vpack.c.bf16 %v3091, %v3091
        %v3304 = vpack.c.bf16 %v3094, %v3094
        %v3305 = vpack.c.bf16 %v3096, %v3096
        %v3306 = vpack.c.bf16 %v3099, %v3099
        %v3307 = vpack.c.bf16 %v3101, %v3101
        %v3308 = vpack.c.bf16 %v3104, %v3104
        %v3309 = vpack.c.bf16 %v3106, %v3106
        %v3326 = vunpack.c.l.b16 %v3278
        %v3327 = vunpack.c.l.b16 %v3279
        %v3328 = vunpack.c.l.b16 %v3280
        %v3329 = vunpack.c.l.b16 %v3281
        %v3330 = vunpack.c.l.b16 %v3282
        %v3331 = vunpack.c.l.b16 %v3283
        %v3332 = vunpack.c.l.b16 %v3284
        %v3333 = vunpack.c.l.b16 %v3285
        %v3334 = vunpack.c.l.b16 %v3286
        %v3335 = vunpack.c.l.b16 %v3287
        %v3336 = vunpack.c.l.b16 %v3288
        %v3337 = vunpack.c.l.b16 %v3289
        %v3338 = vunpack.c.l.b16 %v3290
        %v3339 = vunpack.c.l.b16 %v3291
        %v3340 = vunpack.c.l.b16 %v3292
        %v3341 = vunpack.c.l.b16 %v3293
        %v3342 = vpack.c.b16 %v3327, %v3326
        %v3343 = vpack.c.b16 %v3329, %v3328
        %v3344 = vpack.c.b16 %v3331, %v3330
        %v3345 = vpack.c.b16 %v3333, %v3332
        %v3346 = vpack.c.b16 %v3335, %v3334
        %v3347 = vpack.c.b16 %v3337, %v3336
        %v3348 = vpack.c.b16 %v3339, %v3338
        %v3349 = vpack.c.b16 %v3341, %v3340
        %3358 = vmatpush.bf16.xpose.msra.mxu0 %v3349
        %3359 = vmatpush.bf16.xpose.msra.mxu0 %v3348
        %3360 = vmatpush.bf16.xpose.msra.mxu0 %v3347
        %3361 = vmatpush.bf16.xpose.msra.mxu0 %v3346
        %3362 = vmatpush.bf16.xpose.msra.mxu0 %v3345
        %3363 = vmatpush.bf16.xpose.msra.mxu0 %v3344
        %3364 = vmatpush.bf16.xpose.msra.mxu0 %v3343
        %3365 = vmatpush.bf16.xpose.msra.mxu0 %v3342
        %3366 = vmatmul.bf16.gmra.mxu0 %v3276
        %v3367 = vpop.f32.mrf.mxu0
        %v3368 = vadd.f32 0.0, %v3367
        %v3369 = vpop.f32.mrf.mxu0
        %3370 = vdwg.mxu0
        %v3387 = vunpack.c.l.b16 %v3294
        %v3388 = vunpack.c.l.b16 %v3295
        %v3389 = vunpack.c.l.b16 %v3296
        %v3390 = vunpack.c.l.b16 %v3297
        %v3391 = vunpack.c.l.b16 %v3298
        %v3392 = vunpack.c.l.b16 %v3299
        %v3393 = vunpack.c.l.b16 %v3300
        %v3394 = vunpack.c.l.b16 %v3301
        %v3395 = vunpack.c.l.b16 %v3302
        %v3396 = vunpack.c.l.b16 %v3303
        %v3397 = vunpack.c.l.b16 %v3304
        %v3398 = vunpack.c.l.b16 %v3305
        %v3399 = vunpack.c.l.b16 %v3306
        %v3400 = vunpack.c.l.b16 %v3307
        %v3401 = vunpack.c.l.b16 %v3308
        %v3402 = vunpack.c.l.b16 %v3309
        %v3403 = vpack.c.b16 %v3388, %v3387
        %v3404 = vpack.c.b16 %v3390, %v3389
        %v3405 = vpack.c.b16 %v3392, %v3391
        %v3406 = vpack.c.b16 %v3394, %v3393
        %v3407 = vpack.c.b16 %v3396, %v3395
        %v3408 = vpack.c.b16 %v3398, %v3397
        %v3409 = vpack.c.b16 %v3400, %v3399
        %v3410 = vpack.c.b16 %v3402, %v3401
        %3419 = vmatpush.bf16.xpose.msra.mxu0 %v3410
        %3420 = vmatpush.bf16.xpose.msra.mxu0 %v3409
        %3421 = vmatpush.bf16.xpose.msra.mxu0 %v3408
        %3422 = vmatpush.bf16.xpose.msra.mxu0 %v3407
        %3423 = vmatpush.bf16.xpose.msra.mxu0 %v3406
        %3424 = vmatpush.bf16.xpose.msra.mxu0 %v3405
        %3425 = vmatpush.bf16.xpose.msra.mxu0 %v3404
        %3426 = vmatpush.bf16.xpose.msra.mxu0 %v3403
        %3427 = vmatmul.bf16.gmra.mxu0 %v3277
        %v3428 = vpop.f32.mrf.mxu0
        %v3429 = vadd.f32 0.0, %v3428
        %v3430 = vpop.f32.mrf.mxu0
        %3431 = vdwg.mxu0
        %v3432 = vmul.f32 %v3368, 0.088388346
        %v3433 = vmul.f32 %v3429, 0.088388346
        %3434 = vst [vmem:[%s575] sm:$0xff] %v3432
        %3435 = vst [vmem:[%s575 + $0x8] sm:$0xff] %v3433
        %s3436 = sand.u32 %s305, 1
        %s3437 = scalar_lea.sflag [#allocation4], %s3436
        %s3438 = sand.u32 %s305, 1
        %s3439 = smul.addr %s3438, 16
        %s3440 = scalar_lea.vmem [#allocation16], %s3439
        // Predicated region
        $region101: #{tpu_custom_call.1} parent=67 // pred_check
          %p3441 = pneg %p315
        $region102: #{tpu_custom_call.1} parent=67 // pred_check_branch
          %3443 = sbr.rel (%p3441) target = $region104
        $region103: #{tpu_custom_call.1} parent=67 // pred_region
          %s3444 = smul.u32 2, %s35
          %3446 = vsyncadd %s3437, 0
          %s3447 = smul.addr %s3444, 8
          %s3448 = scalar_lea.hbm %s12, %s3447
          %s3449 = sshll.u32 %s3440, 4
          %s3450 = int_to_ptr.vmem [resolvable:$true] %s3449
          %s3451 = sshll.u32 %s3448, 4
          %s3452 = int_to_ptr.hbm [resolvable:$true] %s3451
          %3457 = dma.vmem_to_hbm [thread:$0]  %s3450, 256, %s3452, %s3437, 128, 128, 8
        $region104: #{tpu_custom_call.1} parent=67 // pred_fallthru
          _
      $region68: #{tpu_custom_call.1} parent=5 // pred_fallthru
        _
      %p3458 = scmp.le.s32.totalorder 2, %s30
      // Predicated region
      $region105: #{tpu_custom_call.1} parent=5 // pred_check
        %p3459 = pneg %p3458
      $region106: #{tpu_custom_call.1} parent=5 // pred_check_branch
        %3461 = sbr.rel (%p3459) target = $region108
      $region107: #{tpu_custom_call.1} parent=5 // pred_region
        %s3462 = ssub.s32 %s30, 2
        // Predicated region
        $region109: #{tpu_custom_call.1} parent=107 // pred_check
          %p3463 = pneg %p321
        $region110: #{tpu_custom_call.1} parent=107 // pred_check_branch
          %3465 = sbr.rel (%p3463) target = $region112
        $region111: #{tpu_custom_call.1} parent=107 // pred_region
          %s3466 = sand.u32 %s306, 1
          %s3467 = scalar_lea.sflag [#allocation4], %s3466
          %s3468 = sand.u32 %s306, 1
          %s3469 = smul.addr %s3468, 16
          %s3470 = scalar_lea.vmem [#allocation16], %s3469
          %3472 = dma.done %s3467, 256
        $region112: #{tpu_custom_call.1} parent=107 // pred_fallthru
          _
      $region108: #{tpu_custom_call.1} parent=5 // pred_fallthru
        _
    $region6: #{tpu_custom_call.1} parent=1 // loop_footer
      %s34 = sadd.s32 1, %s30
    $region7: #{tpu_custom_call.1} parent=1 // loop_footer_branch
      %29 = sbr.rel target = $region3
    $region8: #{tpu_custom_call.1} parent=1 // loop_exit
      _
    %3473 = vsyncpa [#allocation3], 1
    %s3474 = scalar_lea.sflag [#allocation3], 1
    %3475 = vsyncpa %s3474, 1
    %3476 = vsyncpa [#allocation6], 1
    %s3477 = scalar_lea.sflag [#allocation6], 1
    %3478 = vsyncpa %s3477, 1
    %3479 = vsyncpa [#allocation9], 1
    %3480 = vsyncpa [#allocation12], 1
    %3481 = vsyncpa [#allocation15], 1
    %3482 = vsyncpa [#allocation4], 1
    %s3483 = scalar_lea.sflag [#allocation4], 1
    %3484 = vsyncpa %s3483, 1

</llo_original>
